<compile_context>
chip_gen: v5e
topology: v5e:2x2
jax: 0.10.0
libtpu: 0.0.40
codegen_flags: <defaults>
</compile_context>

<pallas_src>
import functools

import jax
import jax.numpy as jnp
from jax.experimental import pallas as pl
from jax.experimental.pallas import tpu as pltpu


# ----------------------------------------------------------------------------
# Fused kernel: conv1 -> bn1 -> relu -> conv2 -> bn2 -> +residual -> relu
# One grid step == `Bt` images.  Activations live as a single (M, W*C) slab.
# ----------------------------------------------------------------------------
def trans_block_kernel(x_ref, w1_ref, w2_ref, s1_ref, b1_ref, s2_ref, b2_ref,
                       out_ref, xpad_ref, *, Bt, H, P, GAP):
    # x_ref   : (Bt, H, W*Cin)  f32   lane-dense input block (also the residual)
    # w*_ref  : (3, W*Cin, W*C) bf16  banded-GEMM weight slabs (one per filter row)
    # s*/b*   : (1, W*C)        f32   folded-BN scale / bias, tiled over W
    # out_ref : (Bt, H, W*Cout)
    # xpad_ref: (Bt*P + GAP, W*Cin) f32 scratch.  Image b occupies rows
    #           [b*P+GAP, b*P+GAP+H); rows [k*P, k*P+GAP) for k = 0..Bt stay
    #           zero and provide the top/bottom conv halos.  All offsets are
    #           multiples of 8, so every scratch access is sublane-aligned.
    K = xpad_ref.shape[1]

    # Zero only the halo/gap rows each step (interior rows are overwritten).
    zero_gap = jnp.zeros((GAP, K), xpad_ref.dtype)
    for k in range(Bt + 1):
        xpad_ref[k * P:k * P + GAP, :] = zero_gap

    def load_images(src):
        for b in range(Bt):
            base = b * P + GAP
            xpad_ref[base:base + H, :] = src(b)

    def conv_bn(w_ref, s_ref, b_ref):
        # Three aligned full-slab MXU contractions (bf16 operands, f32 acc).
        # The 3x3 row offsets are applied to the *results*, per image.
        xp = xpad_ref[...].astype(jnp.bfloat16)                 # (M, K)
        y0 = jnp.dot(xp, w_ref[0], preferred_element_type=jnp.float32)
        y1 = jnp.dot(xp, w_ref[1], preferred_element_type=jnp.float32)
        y2 = jnp.dot(xp, w_ref[2], preferred_element_type=jnp.float32)
        outs = []
        for b in range(Bt):
            base = b * P + GAP
            conv = (y0[base - 1:base - 1 + H]
                    + y1[base:base + H]
                    + y2[base + 1:base + 1 + H])                # (H, N) f32
            outs.append(conv * s_ref[...] + b_ref[...])
        return outs

    # ---- stage 1: out = relu(bn1(conv1(x))) ----
    load_images(lambda b: x_ref[b])
    a1 = [jnp.maximum(o, 0.0) for o in conv_bn(w1_ref, s1_ref, b1_ref)]

    # ---- stage 2: out = relu(bn2(conv2(out)) + x) ----
    load_images(lambda b: a1[b])
    o2 = conv_bn(w2_ref, s2_ref, b2_ref)
    for b in range(Bt):
        res = x_ref[b].astype(jnp.float32)
        out_ref[b] = jnp.maximum(o2[b] + res, 0.0).astype(out_ref.dtype)


# ----------------------------------------------------------------------------
# Wrapper-side parameter plumbing (layout only, no compute hoisting).
# ----------------------------------------------------------------------------
def fold_bn(gamma, beta, running_mean, running_var, eps=1e-5):
    scale = gamma / jnp.sqrt(running_var + eps)
    bias = beta - running_mean * scale
    return scale, bias


def expand_conv3x3_weight(w_hwio, W):
    """(3,3,Cin,Cout) -> (3, W*Cin, W*Cout) banded-GEMM slabs (one per kh), bf16.

    slab[kh][c*Cin+ci, j*Cout+co] = w[kh, c-j+1, ci, co] for |c-j| <= 1, else 0.
    Width zero-padding is implicit: out-of-range taps are simply absent (their
    activation would be zero anyway), so no pad rows are carried in K."""
    _, _, Cin, Cout = w_hwio.shape
    cols = jnp.arange(W)
    slabs = []
    for kh in range(3):
        m = jnp.zeros((W * Cin, W * Cout), jnp.float32)
        for kw in range(3):
            c = cols + (kw - 1)                              # input col for output col j
            valid = ((c >= 0) & (c < W)).astype(jnp.float32)
            sel = jax.nn.one_hot(jnp.clip(c, 0, W - 1), W, dtype=jnp.float32)
            sel = (sel * valid[:, None]).T                   # (W_in, W_out)
            m = m + jnp.kron(sel, w_hwio[kh, kw].astype(jnp.float32))
        slabs.append(m)
    return jnp.stack(slabs).astype(jnp.bfloat16)             # (3, W*Cin, W*Cout)


def tile_channels(v, W):
    """Per-channel vector (C,) -> lane-dense (1, W*C) matching the (., W*C) slabs."""
    return jnp.tile(v.astype(jnp.float32), W).reshape(1, -1)


# ----------------------------------------------------------------------------
# Module forward (NCHW in / NCHW out, like the PyTorch module).
# ----------------------------------------------------------------------------
def trans_basic_block_forward(x_nchw, params, images_per_step=None):
    B, Cin, H, W = x_nchw.shape
    Cout = params["w2"].shape[-1]
    # stride=1 / upsample=None branch: residual add requires planes == inplanes.
    assert Cin == Cout, "stride!=1 / upsample branch not implemented"
    assert H % 8 == 0, "this kernel assumes H is a multiple of 8"

    if images_per_step is None:
        # Batch the matmul M-dim while keeping >= 2 grid steps (v7x megacore).
        images_per_step = B // 2 if (B % 2 == 0 and B >= 4) else 1
    Bt = images_per_step
    assert B % Bt == 0

    GAP = 8                      # zero halo rows between images (keeps 8-row alignment)
    P = H + GAP
    M = Bt * P + GAP
    K = W * Cin
    N1, N2 = W * Cin, W * Cout

    # NCHW -> NHWC -> lane-dense (B, H, W*C) slab (pure layout plumbing).
    x2d = jnp.transpose(x_nchw, (0, 2, 3, 1)).reshape(B, H, K)

    s1, b1 = fold_bn(params["g1"], params["b1"], params["m1"], params["v1"])
    s2, b2 = fold_bn(params["g2"], params["b2"], params["m2"], params["v2"])
    w1b = expand_conv3x3_weight(params["w1"], W)              # (3, K, N1) bf16
    w2b = expand_conv3x3_weight(params["w2"], W)              # (3, K, N2) bf16
    s1t, b1t = tile_channels(s1, W), tile_channels(b1, W)
    s2t, b2t = tile_channels(s2, W), tile_channels(b2, W)

    kernel = functools.partial(trans_block_kernel, Bt=Bt, H=H, P=P, GAP=GAP)

    def call(single_buffer_consts):
        const_kw = {"pipeline_mode": pl.Buffered(1)} if single_buffer_consts else {}

        def const_spec(shape):
            zeros = (0,) * len(shape)
            return pl.BlockSpec(shape, lambda i: zeros, **const_kw)

        return pl.pallas_call(
            kernel,
            out_shape=jax.ShapeDtypeStruct((B, H, N2), x_nchw.dtype),
            grid=(B // Bt,),
            in_specs=[
                pl.BlockSpec((Bt, H, K), lambda i: (i, 0, 0)),
                const_spec((3, K, N1)),
                const_spec((3, K, N2)),
                const_spec((1, N1)),
                const_spec((1, N1)),
                const_spec((1, N2)),
                const_spec((1, N2)),
            ],
            out_specs=pl.BlockSpec((Bt, H, N2), lambda i: (i, 0, 0)),
            scratch_shapes=[pltpu.VMEM((M, K), jnp.float32)],
            compiler_params=pltpu.CompilerParams(
                dimension_semantics=("parallel",)),   # v7x: shard steps over 2 TCs
        )(x2d, w1b, w2b, s1t, b1t, s2t, b2t)

    try:
        out2d = call(True)
    except Exception:
        # Fallback for JAX versions without Buffered(1) support on pallas_call:
        # identical kernel, default (double) buffering of the constant operands.
        out2d = call(False)

    out = out2d.reshape(B, H, W, Cout)
    return jnp.transpose(out, (0, 3, 1, 2))                   # -> NCHW


# ----------------------------------------------------------------------------
# Parameter construction (deterministic, synthetic).
# ----------------------------------------------------------------------------
def make_params(key, inplanes, planes):
    ks = jax.random.split(key, 10)
    p = {}
    p["w1"] = 0.1 * jax.random.normal(ks[0], (3, 3, inplanes, inplanes), jnp.float32)
    p["w2"] = 0.1 * jax.random.normal(ks[1], (3, 3, inplanes, planes), jnp.float32)
    p["g1"] = 1.0 + 0.1 * jax.random.normal(ks[2], (inplanes,), jnp.float32)
    p["b1"] = 0.1 * jax.random.normal(ks[3], (inplanes,), jnp.float32)
    p["m1"] = 0.05 * jax.random.normal(ks[4], (inplanes,), jnp.float32)
    p["v1"] = 1.0 + 0.1 * jax.random.uniform(ks[5], (inplanes,), jnp.float32)
    p["g2"] = 1.0 + 0.1 * jax.random.normal(ks[6], (planes,), jnp.float32)
    p["b2"] = 0.1 * jax.random.normal(ks[7], (planes,), jnp.float32)
    p["m2"] = 0.05 * jax.random.normal(ks[8], (planes,), jnp.float32)
    p["v2"] = 1.0 + 0.1 * jax.random.uniform(ks[9], (planes,), jnp.float32)
    return p


# ----------------------------------------------------------------------------
# Pure-JAX (f32) reference for correctness checking.
# ----------------------------------------------------------------------------
def reference_forward(x_nchw, params):
    x = jnp.transpose(x_nchw, (0, 2, 3, 1))

    def conv(x_nhwc, w):
        return jax.lax.conv_general_dilated(
            x_nhwc, w, window_strides=(1, 1), padding="SAME",
            dimension_numbers=("NHWC", "HWIO", "NHWC"))

    s1, b1 = fold_bn(params["g1"], params["b1"], params["m1"], params["v1"])
    s2, b2 = fold_bn(params["g2"], params["b2"], params["m2"], params["v2"])

    out = jnp.maximum(conv(x, params["w1"]) * s1 + b1, 0.0)
    out = jnp.maximum(conv(out, params["w2"]) * s2 + b2 + x, 0.0)
    return jnp.transpose(out, (0, 3, 1, 2))


if __name__ == "__main__":
    B, C, H, W = 4, 16, 16, 16          # inplanes == planes == 16, stride=1
    key = jax.random.PRNGKey(0)
    kx, kp = jax.random.split(key)

    x = jax.random.normal(kx, (B, C, H, W), jnp.float32)
    params = make_params(kp, inplanes=C, planes=C)

    out = jax.block_until_ready(trans_basic_block_forward(x, params))
    ref = jax.block_until_ready(reference_forward(x, params))

    assert out.shape == (B, C, H, W)
    max_err = float(jnp.max(jnp.abs(out - ref)))
    # bf16 MXU operands with f32 accumulation: tolerance relaxed vs. pure f32.
    assert jnp.allclose(out, ref, rtol=5e-2, atol=1e-1), max_err
    print("KERNEL_OK")
</pallas_src>

<mosaic_0001>
module attributes {stable_mosaic.version = 11 : i64} {
  func.func @trans_block_kernel(%arg0: i32, %arg1: memref<2x16x256xf32, #tpu.memory_space<vmem>>, %arg2: memref<3x256x256xbf16, #tpu.memory_space<vmem>>, %arg3: memref<3x256x256xbf16, #tpu.memory_space<vmem>>, %arg4: memref<1x256xf32, #tpu.memory_space<vmem>>, %arg5: memref<1x256xf32, #tpu.memory_space<vmem>>, %arg6: memref<1x256xf32, #tpu.memory_space<vmem>>, %arg7: memref<1x256xf32, #tpu.memory_space<vmem>>, %arg8: memref<2x16x256xf32, #tpu.memory_space<vmem>>, %arg9: memref<56x256xf32, #tpu.memory_space<vmem>>) attributes {dimension_semantics = [#tpu.dimension_semantics<parallel>], iteration_bounds = array<i64: 2>, scalar_prefetch = 0 : i64, scratch_operands = 1 : i64, tpu.core_type = #tpu.core_type<tc>, window_params = [{transform_indices = @transform_0, window_bounds = array<i64: 2, 16, 256>}, {pipeline_mode = #tpu.pipeline_mode<synchronous>, transform_indices = @transform_1, window_bounds = array<i64: 3, 256, 256>}, {pipeline_mode = #tpu.pipeline_mode<synchronous>, transform_indices = @transform_2, window_bounds = array<i64: 3, 256, 256>}, {pipeline_mode = #tpu.pipeline_mode<synchronous>, transform_indices = @transform_3, window_bounds = array<i64: 1, 256>}, {pipeline_mode = #tpu.pipeline_mode<synchronous>, transform_indices = @transform_4, window_bounds = array<i64: 1, 256>}, {pipeline_mode = #tpu.pipeline_mode<synchronous>, transform_indices = @transform_5, window_bounds = array<i64: 1, 256>}, {pipeline_mode = #tpu.pipeline_mode<synchronous>, transform_indices = @transform_6, window_bounds = array<i64: 1, 256>}, {transform_indices = @transform_7, window_bounds = array<i64: 2, 16, 256>}]} {
    %cst = arith.constant 0.000000e+00 : f32
    %0 = vector.broadcast %cst : f32 to vector<8x256xf32>
    %c0 = arith.constant 0 : index
    %c0_0 = arith.constant 0 : index
    %1 = vector.load %arg9[%c0, %c0_0] : memref<56x256xf32, #tpu.memory_space<vmem>>, vector<8x256xf32>
    tpu.vector_store %arg9[%c0, %c0_0], %0 {strides = array<i32>} : memref<56x256xf32, #tpu.memory_space<vmem>>, vector<8x256xf32>,
    %c24 = arith.constant 24 : index
    %c0_1 = arith.constant 0 : index
    %2 = vector.load %arg9[%c24, %c0_1] : memref<56x256xf32, #tpu.memory_space<vmem>>, vector<8x256xf32>
    tpu.vector_store %arg9[%c24, %c0_1], %0 {strides = array<i32>} : memref<56x256xf32, #tpu.memory_space<vmem>>, vector<8x256xf32>,
    %c48 = arith.constant 48 : index
    %c0_2 = arith.constant 0 : index
    %3 = vector.load %arg9[%c48, %c0_2] : memref<56x256xf32, #tpu.memory_space<vmem>>, vector<8x256xf32>
    tpu.vector_store %arg9[%c48, %c0_2], %0 {strides = array<i32>} : memref<56x256xf32, #tpu.memory_space<vmem>>, vector<8x256xf32>,
    %c0_3 = arith.constant 0 : index
    %c0_4 = arith.constant 0 : index
    %c0_5 = arith.constant 0 : index
    %4 = vector.load %arg1[%c0_3, %c0_4, %c0_5] : memref<2x16x256xf32, #tpu.memory_space<vmem>>, vector<1x16x256xf32>
    %5 = vector.shape_cast %4 : vector<1x16x256xf32> to vector<16x256xf32>
    %c8 = arith.constant 8 : index
    %c0_6 = arith.constant 0 : index
    %6 = vector.load %arg9[%c8, %c0_6] : memref<56x256xf32, #tpu.memory_space<vmem>>, vector<16x256xf32>
    tpu.vector_store %arg9[%c8, %c0_6], %5 {strides = array<i32>} : memref<56x256xf32, #tpu.memory_space<vmem>>, vector<16x256xf32>,
    %c1 = arith.constant 1 : index
    %c0_7 = arith.constant 0 : index
    %c0_8 = arith.constant 0 : index
    %7 = vector.load %arg1[%c1, %c0_7, %c0_8] : memref<2x16x256xf32, #tpu.memory_space<vmem>>, vector<1x16x256xf32>
    %8 = vector.shape_cast %7 : vector<1x16x256xf32> to vector<16x256xf32>
    %c32 = arith.constant 32 : index
    %c0_9 = arith.constant 0 : index
    %9 = vector.load %arg9[%c32, %c0_9] : memref<56x256xf32, #tpu.memory_space<vmem>>, vector<16x256xf32>
    tpu.vector_store %arg9[%c32, %c0_9], %8 {strides = array<i32>} : memref<56x256xf32, #tpu.memory_space<vmem>>, vector<16x256xf32>,
    %c0_10 = arith.constant 0 : index
    %c0_11 = arith.constant 0 : index
    %10 = vector.load %arg9[%c0_10, %c0_11] : memref<56x256xf32, #tpu.memory_space<vmem>>, vector<56x256xf32>
    %11 = arith.truncf %10 : vector<56x256xf32> to vector<56x256xbf16>
    %c0_12 = arith.constant 0 : index
    %c0_13 = arith.constant 0 : index
    %c0_14 = arith.constant 0 : index
    %12 = vector.load %arg2[%c0_12, %c0_13, %c0_14] : memref<3x256x256xbf16, #tpu.memory_space<vmem>>, vector<1x256x256xbf16>
    %13 = vector.shape_cast %12 : vector<1x256x256xbf16> to vector<256x256xbf16>
    %cst_15 = arith.constant dense<0.000000e+00> : vector<56x256xf32>
    %14 = tpu.matmul %11, %13, %cst_15 {dimension_numbers = #tpu.dot_dimension_numbers<[1], [0], [0], [1], [0, 0, 1, 1], [], []>} : vector<56x256xbf16>, vector<256x256xbf16>, vector<56x256xf32> -> vector<56x256xf32>
    %c1_16 = arith.constant 1 : index
    %c0_17 = arith.constant 0 : index
    %c0_18 = arith.constant 0 : index
    %15 = vector.load %arg2[%c1_16, %c0_17, %c0_18] : memref<3x256x256xbf16, #tpu.memory_space<vmem>>, vector<1x256x256xbf16>
    %16 = vector.shape_cast %15 : vector<1x256x256xbf16> to vector<256x256xbf16>
    %cst_19 = arith.constant dense<0.000000e+00> : vector<56x256xf32>
    %17 = tpu.matmul %11, %16, %cst_19 {dimension_numbers = #tpu.dot_dimension_numbers<[1], [0], [0], [1], [0, 0, 1, 1], [], []>} : vector<56x256xbf16>, vector<256x256xbf16>, vector<56x256xf32> -> vector<56x256xf32>
    %c2 = arith.constant 2 : index
    %c0_20 = arith.constant 0 : index
    %c0_21 = arith.constant 0 : index
    %18 = vector.load %arg2[%c2, %c0_20, %c0_21] : memref<3x256x256xbf16, #tpu.memory_space<vmem>>, vector<1x256x256xbf16>
    %19 = vector.shape_cast %18 : vector<1x256x256xbf16> to vector<256x256xbf16>
    %cst_22 = arith.constant dense<0.000000e+00> : vector<56x256xf32>
    %20 = tpu.matmul %11, %19, %cst_22 {dimension_numbers = #tpu.dot_dimension_numbers<[1], [0], [0], [1], [0, 0, 1, 1], [], []>} : vector<56x256xbf16>, vector<256x256xbf16>, vector<56x256xf32> -> vector<56x256xf32>
    %21 = vector.extract_strided_slice %14 {offsets = [7, 0], sizes = [16, 256], strides = [1, 1]} : vector<56x256xf32> to vector<16x256xf32>
    %22 = vector.extract_strided_slice %17 {offsets = [8, 0], sizes = [16, 256], strides = [1, 1]} : vector<56x256xf32> to vector<16x256xf32>
    %23 = arith.addf %21, %22 : vector<16x256xf32>
    %24 = vector.extract_strided_slice %20 {offsets = [9, 0], sizes = [16, 256], strides = [1, 1]} : vector<56x256xf32> to vector<16x256xf32>
    %25 = arith.addf %23, %24 : vector<16x256xf32>
    %c0_23 = arith.constant 0 : index
    %c0_24 = arith.constant 0 : index
    %26 = vector.load %arg4[%c0_23, %c0_24] : memref<1x256xf32, #tpu.memory_space<vmem>>, vector<1x256xf32>
    %27 = vector.broadcast %26 : vector<1x256xf32> to vector<16x256xf32>
    %28 = arith.mulf %25, %27 : vector<16x256xf32>
    %c0_25 = arith.constant 0 : index
    %c0_26 = arith.constant 0 : index
    %29 = vector.load %arg5[%c0_25, %c0_26] : memref<1x256xf32, #tpu.memory_space<vmem>>, vector<1x256xf32>
    %30 = vector.broadcast %29 : vector<1x256xf32> to vector<16x256xf32>
    %31 = arith.addf %28, %30 : vector<16x256xf32>
    %32 = vector.extract_strided_slice %14 {offsets = [31, 0], sizes = [16, 256], strides = [1, 1]} : vector<56x256xf32> to vector<16x256xf32>
    %33 = vector.extract_strided_slice %17 {offsets = [32, 0], sizes = [16, 256], strides = [1, 1]} : vector<56x256xf32> to vector<16x256xf32>
    %34 = arith.addf %32, %33 : vector<16x256xf32>
    %35 = vector.extract_strided_slice %20 {offsets = [33, 0], sizes = [16, 256], strides = [1, 1]} : vector<56x256xf32> to vector<16x256xf32>
    %36 = arith.addf %34, %35 : vector<16x256xf32>
    %c0_27 = arith.constant 0 : index
    %c0_28 = arith.constant 0 : index
    %37 = vector.load %arg4[%c0_27, %c0_28] : memref<1x256xf32, #tpu.memory_space<vmem>>, vector<1x256xf32>
    %38 = vector.broadcast %37 : vector<1x256xf32> to vector<16x256xf32>
    %39 = arith.mulf %36, %38 : vector<16x256xf32>
    %c0_29 = arith.constant 0 : index
    %c0_30 = arith.constant 0 : index
    %40 = vector.load %arg5[%c0_29, %c0_30] : memref<1x256xf32, #tpu.memory_space<vmem>>, vector<1x256xf32>
    %41 = vector.broadcast %40 : vector<1x256xf32> to vector<16x256xf32>
    %42 = arith.addf %39, %41 : vector<16x256xf32>
    %cst_31 = arith.constant 0.000000e+00 : f32
    %43 = vector.broadcast %cst_31 : f32 to vector<16x256xf32>
    %44 = arith.maximumf %31, %43 : vector<16x256xf32>
    %cst_32 = arith.constant 0.000000e+00 : f32
    %45 = vector.broadcast %cst_32 : f32 to vector<16x256xf32>
    %46 = arith.maximumf %42, %45 : vector<16x256xf32>
    %c8_33 = arith.constant 8 : index
    %c0_34 = arith.constant 0 : index
    %47 = vector.load %arg9[%c8_33, %c0_34] : memref<56x256xf32, #tpu.memory_space<vmem>>, vector<16x256xf32>
    tpu.vector_store %arg9[%c8_33, %c0_34], %44 {strides = array<i32>} : memref<56x256xf32, #tpu.memory_space<vmem>>, vector<16x256xf32>,
    %c32_35 = arith.constant 32 : index
    %c0_36 = arith.constant 0 : index
    %48 = vector.load %arg9[%c32_35, %c0_36] : memref<56x256xf32, #tpu.memory_space<vmem>>, vector<16x256xf32>
    tpu.vector_store %arg9[%c32_35, %c0_36], %46 {strides = array<i32>} : memref<56x256xf32, #tpu.memory_space<vmem>>, vector<16x256xf32>,
    %c0_37 = arith.constant 0 : index
    %c0_38 = arith.constant 0 : index
    %49 = vector.load %arg9[%c0_37, %c0_38] : memref<56x256xf32, #tpu.memory_space<vmem>>, vector<56x256xf32>
    %50 = arith.truncf %49 : vector<56x256xf32> to vector<56x256xbf16>
    %c0_39 = arith.constant 0 : index
    %c0_40 = arith.constant 0 : index
    %c0_41 = arith.constant 0 : index
    %51 = vector.load %arg3[%c0_39, %c0_40, %c0_41] : memref<3x256x256xbf16, #tpu.memory_space<vmem>>, vector<1x256x256xbf16>
    %52 = vector.shape_cast %51 : vector<1x256x256xbf16> to vector<256x256xbf16>
    %cst_42 = arith.constant dense<0.000000e+00> : vector<56x256xf32>
    %53 = tpu.matmul %50, %52, %cst_42 {dimension_numbers = #tpu.dot_dimension_numbers<[1], [0], [0], [1], [0, 0, 1, 1], [], []>} : vector<56x256xbf16>, vector<256x256xbf16>, vector<56x256xf32> -> vector<56x256xf32>
    %c1_43 = arith.constant 1 : index
    %c0_44 = arith.constant 0 : index
    %c0_45 = arith.constant 0 : index
    %54 = vector.load %arg3[%c1_43, %c0_44, %c0_45] : memref<3x256x256xbf16, #tpu.memory_space<vmem>>, vector<1x256x256xbf16>
    %55 = vector.shape_cast %54 : vector<1x256x256xbf16> to vector<256x256xbf16>
    %cst_46 = arith.constant dense<0.000000e+00> : vector<56x256xf32>
    %56 = tpu.matmul %50, %55, %cst_46 {dimension_numbers = #tpu.dot_dimension_numbers<[1], [0], [0], [1], [0, 0, 1, 1], [], []>} : vector<56x256xbf16>, vector<256x256xbf16>, vector<56x256xf32> -> vector<56x256xf32>
    %c2_47 = arith.constant 2 : index
    %c0_48 = arith.constant 0 : index
    %c0_49 = arith.constant 0 : index
    %57 = vector.load %arg3[%c2_47, %c0_48, %c0_49] : memref<3x256x256xbf16, #tpu.memory_space<vmem>>, vector<1x256x256xbf16>
    %58 = vector.shape_cast %57 : vector<1x256x256xbf16> to vector<256x256xbf16>
    %cst_50 = arith.constant dense<0.000000e+00> : vector<56x256xf32>
    %59 = tpu.matmul %50, %58, %cst_50 {dimension_numbers = #tpu.dot_dimension_numbers<[1], [0], [0], [1], [0, 0, 1, 1], [], []>} : vector<56x256xbf16>, vector<256x256xbf16>, vector<56x256xf32> -> vector<56x256xf32>
    %60 = vector.extract_strided_slice %53 {offsets = [7, 0], sizes = [16, 256], strides = [1, 1]} : vector<56x256xf32> to vector<16x256xf32>
    %61 = vector.extract_strided_slice %56 {offsets = [8, 0], sizes = [16, 256], strides = [1, 1]} : vector<56x256xf32> to vector<16x256xf32>
    %62 = arith.addf %60, %61 : vector<16x256xf32>
    %63 = vector.extract_strided_slice %59 {offsets = [9, 0], sizes = [16, 256], strides = [1, 1]} : vector<56x256xf32> to vector<16x256xf32>
    %64 = arith.addf %62, %63 : vector<16x256xf32>
    %c0_51 = arith.constant 0 : index
    %c0_52 = arith.constant 0 : index
    %65 = vector.load %arg6[%c0_51, %c0_52] : memref<1x256xf32, #tpu.memory_space<vmem>>, vector<1x256xf32>
    %66 = vector.broadcast %65 : vector<1x256xf32> to vector<16x256xf32>
    %67 = arith.mulf %64, %66 : vector<16x256xf32>
    %c0_53 = arith.constant 0 : index
    %c0_54 = arith.constant 0 : index
    %68 = vector.load %arg7[%c0_53, %c0_54] : memref<1x256xf32, #tpu.memory_space<vmem>>, vector<1x256xf32>
    %69 = vector.broadcast %68 : vector<1x256xf32> to vector<16x256xf32>
    %70 = arith.addf %67, %69 : vector<16x256xf32>
    %71 = vector.extract_strided_slice %53 {offsets = [31, 0], sizes = [16, 256], strides = [1, 1]} : vector<56x256xf32> to vector<16x256xf32>
    %72 = vector.extract_strided_slice %56 {offsets = [32, 0], sizes = [16, 256], strides = [1, 1]} : vector<56x256xf32> to vector<16x256xf32>
    %73 = arith.addf %71, %72 : vector<16x256xf32>
    %74 = vector.extract_strided_slice %59 {offsets = [33, 0], sizes = [16, 256], strides = [1, 1]} : vector<56x256xf32> to vector<16x256xf32>
    %75 = arith.addf %73, %74 : vector<16x256xf32>
    %c0_55 = arith.constant 0 : index
    %c0_56 = arith.constant 0 : index
    %76 = vector.load %arg6[%c0_55, %c0_56] : memref<1x256xf32, #tpu.memory_space<vmem>>, vector<1x256xf32>
    %77 = vector.broadcast %76 : vector<1x256xf32> to vector<16x256xf32>
    %78 = arith.mulf %75, %77 : vector<16x256xf32>
    %c0_57 = arith.constant 0 : index
    %c0_58 = arith.constant 0 : index
    %79 = vector.load %arg7[%c0_57, %c0_58] : memref<1x256xf32, #tpu.memory_space<vmem>>, vector<1x256xf32>
    %80 = vector.broadcast %79 : vector<1x256xf32> to vector<16x256xf32>
    %81 = arith.addf %78, %80 : vector<16x256xf32>
    %c0_59 = arith.constant 0 : index
    %c0_60 = arith.constant 0 : index
    %c0_61 = arith.constant 0 : index
    %82 = vector.load %arg1[%c0_59, %c0_60, %c0_61] : memref<2x16x256xf32, #tpu.memory_space<vmem>>, vector<1x16x256xf32>
    %83 = vector.shape_cast %82 : vector<1x16x256xf32> to vector<16x256xf32>
    %84 = arith.addf %70, %83 : vector<16x256xf32>
    %cst_62 = arith.constant 0.000000e+00 : f32
    %85 = vector.broadcast %cst_62 : f32 to vector<16x256xf32>
    %86 = arith.maximumf %84, %85 : vector<16x256xf32>
    %c0_63 = arith.constant 0 : index
    %c0_64 = arith.constant 0 : index
    %c0_65 = arith.constant 0 : index
    %87 = vector.load %arg8[%c0_63, %c0_64, %c0_65] : memref<2x16x256xf32, #tpu.memory_space<vmem>>, vector<1x16x256xf32>
    %88 = vector.shape_cast %87 : vector<1x16x256xf32> to vector<16x256xf32>
    %89 = vector.shape_cast %86 : vector<16x256xf32> to vector<1x16x256xf32>
    tpu.vector_store %arg8[%c0_63, %c0_64, %c0_65], %89 {strides = array<i32>} : memref<2x16x256xf32, #tpu.memory_space<vmem>>, vector<1x16x256xf32>,
    %c1_66 = arith.constant 1 : index
    %c0_67 = arith.constant 0 : index
    %c0_68 = arith.constant 0 : index
    %90 = vector.load %arg1[%c1_66, %c0_67, %c0_68] : memref<2x16x256xf32, #tpu.memory_space<vmem>>, vector<1x16x256xf32>
    %91 = vector.shape_cast %90 : vector<1x16x256xf32> to vector<16x256xf32>
    %92 = arith.addf %81, %91 : vector<16x256xf32>
    %cst_69 = arith.constant 0.000000e+00 : f32
    %93 = vector.broadcast %cst_69 : f32 to vector<16x256xf32>
    %94 = arith.maximumf %92, %93 : vector<16x256xf32>
    %c1_70 = arith.constant 1 : index
    %c0_71 = arith.constant 0 : index
    %c0_72 = arith.constant 0 : index
    %95 = vector.load %arg8[%c1_70, %c0_71, %c0_72] : memref<2x16x256xf32, #tpu.memory_space<vmem>>, vector<1x16x256xf32>
    %96 = vector.shape_cast %95 : vector<1x16x256xf32> to vector<16x256xf32>
    %97 = vector.shape_cast %94 : vector<16x256xf32> to vector<1x16x256xf32>
    tpu.vector_store %arg8[%c1_70, %c0_71, %c0_72], %97 {strides = array<i32>} : memref<2x16x256xf32, #tpu.memory_space<vmem>>, vector<1x16x256xf32>,
    return
  }
  func.func @transform_0(%arg0: i32) -> (i32, i32, i32) {
    %c0_i32 = arith.constant 0 : i32
    %c0_i32_0 = arith.constant 0 : i32
    %c0_i32_1 = arith.constant 0 : i32
    return %arg0, %c0_i32, %c0_i32_0 : i32, i32, i32
  }
  func.func @transform_1(%arg0: i32) -> (i32, i32, i32) {
    %c0_i32 = arith.constant 0 : i32
    %c0_i32_0 = arith.constant 0 : i32
    %c0_i32_1 = arith.constant 0 : i32
    %c0_i32_2 = arith.constant 0 : i32
    return %c0_i32, %c0_i32_0, %c0_i32_1 : i32, i32, i32
  }
  func.func @transform_2(%arg0: i32) -> (i32, i32, i32) {
    %c0_i32 = arith.constant 0 : i32
    %c0_i32_0 = arith.constant 0 : i32
    %c0_i32_1 = arith.constant 0 : i32
    %c0_i32_2 = arith.constant 0 : i32
    return %c0_i32, %c0_i32_0, %c0_i32_1 : i32, i32, i32
  }
  func.func @transform_3(%arg0: i32) -> (i32, i32) {
    %c0_i32 = arith.constant 0 : i32
    %c0_i32_0 = arith.constant 0 : i32
    %c0_i32_1 = arith.constant 0 : i32
    return %c0_i32, %c0_i32_0 : i32, i32
  }
  func.func @transform_4(%arg0: i32) -> (i32, i32) {
    %c0_i32 = arith.constant 0 : i32
    %c0_i32_0 = arith.constant 0 : i32
    %c0_i32_1 = arith.constant 0 : i32
    return %c0_i32, %c0_i32_0 : i32, i32
  }
  func.func @transform_5(%arg0: i32) -> (i32, i32) {
    %c0_i32 = arith.constant 0 : i32
    %c0_i32_0 = arith.constant 0 : i32
    %c0_i32_1 = arith.constant 0 : i32
    return %c0_i32, %c0_i32_0 : i32, i32
  }
  func.func @transform_6(%arg0: i32) -> (i32, i32) {
    %c0_i32 = arith.constant 0 : i32
    %c0_i32_0 = arith.constant 0 : i32
    %c0_i32_1 = arith.constant 0 : i32
    return %c0_i32, %c0_i32_0 : i32, i32
  }
  func.func @transform_7(%arg0: i32) -> (i32, i32, i32) {
    %c0_i32 = arith.constant 0 : i32
    %c0_i32_0 = arith.constant 0 : i32
    %c0_i32_1 = arith.constant 0 : i32
    return %arg0, %c0_i32, %c0_i32_0 : i32, i32, i32
  }
}

module attributes {stable_mosaic.version = 11 : i64} {
  func.func @trans_block_kernel(%arg0: i32, %arg1: memref<2x16x256xf32, #tpu.memory_space<vmem>>, %arg2: memref<3x256x256xbf16, #tpu.memory_space<vmem>>, %arg3: memref<3x256x256xbf16, #tpu.memory_space<vmem>>, %arg4: memref<1x256xf32, #tpu.memory_space<vmem>>, %arg5: memref<1x256xf32, #tpu.memory_space<vmem>>, %arg6: memref<1x256xf32, #tpu.memory_space<vmem>>, %arg7: memref<1x256xf32, #tpu.memory_space<vmem>>, %arg8: memref<2x16x256xf32, #tpu.memory_space<vmem>>, %arg9: memref<56x256xf32, #tpu.memory_space<vmem>>) attributes {dimension_semantics = [#tpu.dimension_semantics<parallel>], iteration_bounds = array<i64: 2>, scalar_prefetch = 0 : i64, scratch_operands = 1 : i64, tpu.core_type = #tpu.core_type<tc>, window_params = [{transform_indices = @transform_0, window_bounds = array<i64: 2, 16, 256>}, {pipeline_mode = #tpu.pipeline_mode<synchronous>, transform_indices = @transform_1, window_bounds = array<i64: 3, 256, 256>}, {pipeline_mode = #tpu.pipeline_mode<synchronous>, transform_indices = @transform_2, window_bounds = array<i64: 3, 256, 256>}, {pipeline_mode = #tpu.pipeline_mode<synchronous>, transform_indices = @transform_3, window_bounds = array<i64: 1, 256>}, {pipeline_mode = #tpu.pipeline_mode<synchronous>, transform_indices = @transform_4, window_bounds = array<i64: 1, 256>}, {pipeline_mode = #tpu.pipeline_mode<synchronous>, transform_indices = @transform_5, window_bounds = array<i64: 1, 256>}, {pipeline_mode = #tpu.pipeline_mode<synchronous>, transform_indices = @transform_6, window_bounds = array<i64: 1, 256>}, {transform_indices = @transform_7, window_bounds = array<i64: 2, 16, 256>}]} {
    %cst = arith.constant 0.000000e+00 : f32
    %0 = vector.broadcast %cst : f32 to vector<8x256xf32>
    %c0 = arith.constant 0 : index
    %c0_0 = arith.constant 0 : index
    %1 = vector.load %arg9[%c0, %c0_0] : memref<56x256xf32, #tpu.memory_space<vmem>>, vector<8x256xf32>
    tpu.vector_store %arg9[%c0, %c0_0], %0 {strides = array<i32>} : memref<56x256xf32, #tpu.memory_space<vmem>>, vector<8x256xf32>,
    %c24 = arith.constant 24 : index
    %c0_1 = arith.constant 0 : index
    %2 = vector.load %arg9[%c24, %c0_1] : memref<56x256xf32, #tpu.memory_space<vmem>>, vector<8x256xf32>
    tpu.vector_store %arg9[%c24, %c0_1], %0 {strides = array<i32>} : memref<56x256xf32, #tpu.memory_space<vmem>>, vector<8x256xf32>,
    %c48 = arith.constant 48 : index
    %c0_2 = arith.constant 0 : index
    %3 = vector.load %arg9[%c48, %c0_2] : memref<56x256xf32, #tpu.memory_space<vmem>>, vector<8x256xf32>
    tpu.vector_store %arg9[%c48, %c0_2], %0 {strides = array<i32>} : memref<56x256xf32, #tpu.memory_space<vmem>>, vector<8x256xf32>,
    %c0_3 = arith.constant 0 : index
    %c0_4 = arith.constant 0 : index
    %c0_5 = arith.constant 0 : index
    %4 = vector.load %arg1[%c0_3, %c0_4, %c0_5] : memref<2x16x256xf32, #tpu.memory_space<vmem>>, vector<1x16x256xf32>
    %5 = vector.shape_cast %4 : vector<1x16x256xf32> to vector<16x256xf32>
    %c8 = arith.constant 8 : index
    %c0_6 = arith.constant 0 : index
    %6 = vector.load %arg9[%c8, %c0_6] : memref<56x256xf32, #tpu.memory_space<vmem>>, vector<16x256xf32>
    tpu.vector_store %arg9[%c8, %c0_6], %5 {strides = array<i32>} : memref<56x256xf32, #tpu.memory_space<vmem>>, vector<16x256xf32>,
    %c1 = arith.constant 1 : index
    %c0_7 = arith.constant 0 : index
    %c0_8 = arith.constant 0 : index
    %7 = vector.load %arg1[%c1, %c0_7, %c0_8] : memref<2x16x256xf32, #tpu.memory_space<vmem>>, vector<1x16x256xf32>
    %8 = vector.shape_cast %7 : vector<1x16x256xf32> to vector<16x256xf32>
    %c32 = arith.constant 32 : index
    %c0_9 = arith.constant 0 : index
    %9 = vector.load %arg9[%c32, %c0_9] : memref<56x256xf32, #tpu.memory_space<vmem>>, vector<16x256xf32>
    tpu.vector_store %arg9[%c32, %c0_9], %8 {strides = array<i32>} : memref<56x256xf32, #tpu.memory_space<vmem>>, vector<16x256xf32>,
    %c0_10 = arith.constant 0 : index
    %c0_11 = arith.constant 0 : index
    %10 = vector.load %arg9[%c0_10, %c0_11] : memref<56x256xf32, #tpu.memory_space<vmem>>, vector<56x256xf32>
    %11 = arith.truncf %10 : vector<56x256xf32> to vector<56x256xbf16>
    %c0_12 = arith.constant 0 : index
    %c0_13 = arith.constant 0 : index
    %c0_14 = arith.constant 0 : index
    %12 = vector.load %arg2[%c0_12, %c0_13, %c0_14] : memref<3x256x256xbf16, #tpu.memory_space<vmem>>, vector<1x256x256xbf16>
    %13 = vector.shape_cast %12 : vector<1x256x256xbf16> to vector<256x256xbf16>
    %cst_15 = arith.constant dense<0.000000e+00> : vector<56x256xf32>
    %14 = tpu.matmul %11, %13, %cst_15 {dimension_numbers = #tpu.dot_dimension_numbers<[1], [0], [0], [1], [0, 0, 1, 1], [], []>} : vector<56x256xbf16>, vector<256x256xbf16>, vector<56x256xf32> -> vector<56x256xf32>
    %c1_16 = arith.constant 1 : index
    %c0_17 = arith.constant 0 : index
    %c0_18 = arith.constant 0 : index
    %15 = vector.load %arg2[%c1_16, %c0_17, %c0_18] : memref<3x256x256xbf16, #tpu.memory_space<vmem>>, vector<1x256x256xbf16>
    %16 = vector.shape_cast %15 : vector<1x256x256xbf16> to vector<256x256xbf16>
    %cst_19 = arith.constant dense<0.000000e+00> : vector<56x256xf32>
    %17 = tpu.matmul %11, %16, %cst_19 {dimension_numbers = #tpu.dot_dimension_numbers<[1], [0], [0], [1], [0, 0, 1, 1], [], []>} : vector<56x256xbf16>, vector<256x256xbf16>, vector<56x256xf32> -> vector<56x256xf32>
    %c2 = arith.constant 2 : index
    %c0_20 = arith.constant 0 : index
    %c0_21 = arith.constant 0 : index
    %18 = vector.load %arg2[%c2, %c0_20, %c0_21] : memref<3x256x256xbf16, #tpu.memory_space<vmem>>, vector<1x256x256xbf16>
    %19 = vector.shape_cast %18 : vector<1x256x256xbf16> to vector<256x256xbf16>
    %cst_22 = arith.constant dense<0.000000e+00> : vector<56x256xf32>
    %20 = tpu.matmul %11, %19, %cst_22 {dimension_numbers = #tpu.dot_dimension_numbers<[1], [0], [0], [1], [0, 0, 1, 1], [], []>} : vector<56x256xbf16>, vector<256x256xbf16>, vector<56x256xf32> -> vector<56x256xf32>
    %21 = vector.extract_strided_slice %14 {offsets = [7, 0], sizes = [16, 256], strides = [1, 1]} : vector<56x256xf32> to vector<16x256xf32>
    %22 = vector.extract_strided_slice %17 {offsets = [8, 0], sizes = [16, 256], strides = [1, 1]} : vector<56x256xf32> to vector<16x256xf32>
    %23 = arith.addf %21, %22 : vector<16x256xf32>
    %24 = vector.extract_strided_slice %20 {offsets = [9, 0], sizes = [16, 256], strides = [1, 1]} : vector<56x256xf32> to vector<16x256xf32>
    %25 = arith.addf %23, %24 : vector<16x256xf32>
    %c0_23 = arith.constant 0 : index
    %c0_24 = arith.constant 0 : index
    %26 = vector.load %arg4[%c0_23, %c0_24] : memref<1x256xf32, #tpu.memory_space<vmem>>, vector<1x256xf32>
    %27 = vector.broadcast %26 : vector<1x256xf32> to vector<16x256xf32>
    %28 = arith.mulf %25, %27 : vector<16x256xf32>
    %c0_25 = arith.constant 0 : index
    %c0_26 = arith.constant 0 : index
    %29 = vector.load %arg5[%c0_25, %c0_26] : memref<1x256xf32, #tpu.memory_space<vmem>>, vector<1x256xf32>
    %30 = vector.broadcast %29 : vector<1x256xf32> to vector<16x256xf32>
    %31 = arith.addf %28, %30 : vector<16x256xf32>
    %32 = vector.extract_strided_slice %14 {offsets = [31, 0], sizes = [16, 256], strides = [1, 1]} : vector<56x256xf32> to vector<16x256xf32>
    %33 = vector.extract_strided_slice %17 {offsets = [32, 0], sizes = [16, 256], strides = [1, 1]} : vector<56x256xf32> to vector<16x256xf32>
    %34 = arith.addf %32, %33 : vector<16x256xf32>
    %35 = vector.extract_strided_slice %20 {offsets = [33, 0], sizes = [16, 256], strides = [1, 1]} : vector<56x256xf32> to vector<16x256xf32>
    %36 = arith.addf %34, %35 : vector<16x256xf32>
    %c0_27 = arith.constant 0 : index
    %c0_28 = arith.constant 0 : index
    %37 = vector.load %arg4[%c0_27, %c0_28] : memref<1x256xf32, #tpu.memory_space<vmem>>, vector<1x256xf32>
    %38 = vector.broadcast %37 : vector<1x256xf32> to vector<16x256xf32>
    %39 = arith.mulf %36, %38 : vector<16x256xf32>
    %c0_29 = arith.constant 0 : index
    %c0_30 = arith.constant 0 : index
    %40 = vector.load %arg5[%c0_29, %c0_30] : memref<1x256xf32, #tpu.memory_space<vmem>>, vector<1x256xf32>
    %41 = vector.broadcast %40 : vector<1x256xf32> to vector<16x256xf32>
    %42 = arith.addf %39, %41 : vector<16x256xf32>
    %cst_31 = arith.constant 0.000000e+00 : f32
    %43 = vector.broadcast %cst_31 : f32 to vector<16x256xf32>
    %44 = arith.maximumf %31, %43 : vector<16x256xf32>
    %cst_32 = arith.constant 0.000000e+00 : f32
    %45 = vector.broadcast %cst_32 : f32 to vector<16x256xf32>
    %46 = arith.maximumf %42, %45 : vector<16x256xf32>
    %c8_33 = arith.constant 8 : index
    %c0_34 = arith.constant 0 : index
    %47 = vector.load %arg9[%c8_33, %c0_34] : memref<56x256xf32, #tpu.memory_space<vmem>>, vector<16x256xf32>
    tpu.vector_store %arg9[%c8_33, %c0_34], %44 {strides = array<i32>} : memref<56x256xf32, #tpu.memory_space<vmem>>, vector<16x256xf32>,
    %c32_35 = arith.constant 32 : index
    %c0_36 = arith.constant 0 : index
    %48 = vector.load %arg9[%c32_35, %c0_36] : memref<56x256xf32, #tpu.memory_space<vmem>>, vector<16x256xf32>
    tpu.vector_store %arg9[%c32_35, %c0_36], %46 {strides = array<i32>} : memref<56x256xf32, #tpu.memory_space<vmem>>, vector<16x256xf32>,
    %c0_37 = arith.constant 0 : index
    %c0_38 = arith.constant 0 : index
    %49 = vector.load %arg9[%c0_37, %c0_38] : memref<56x256xf32, #tpu.memory_space<vmem>>, vector<56x256xf32>
    %50 = arith.truncf %49 : vector<56x256xf32> to vector<56x256xbf16>
    %c0_39 = arith.constant 0 : index
    %c0_40 = arith.constant 0 : index
    %c0_41 = arith.constant 0 : index
    %51 = vector.load %arg3[%c0_39, %c0_40, %c0_41] : memref<3x256x256xbf16, #tpu.memory_space<vmem>>, vector<1x256x256xbf16>
    %52 = vector.shape_cast %51 : vector<1x256x256xbf16> to vector<256x256xbf16>
    %cst_42 = arith.constant dense<0.000000e+00> : vector<56x256xf32>
    %53 = tpu.matmul %50, %52, %cst_42 {dimension_numbers = #tpu.dot_dimension_numbers<[1], [0], [0], [1], [0, 0, 1, 1], [], []>} : vector<56x256xbf16>, vector<256x256xbf16>, vector<56x256xf32> -> vector<56x256xf32>
    %c1_43 = arith.constant 1 : index
    %c0_44 = arith.constant 0 : index
    %c0_45 = arith.constant 0 : index
    %54 = vector.load %arg3[%c1_43, %c0_44, %c0_45] : memref<3x256x256xbf16, #tpu.memory_space<vmem>>, vector<1x256x256xbf16>
    %55 = vector.shape_cast %54 : vector<1x256x256xbf16> to vector<256x256xbf16>
    %cst_46 = arith.constant dense<0.000000e+00> : vector<56x256xf32>
    %56 = tpu.matmul %50, %55, %cst_46 {dimension_numbers = #tpu.dot_dimension_numbers<[1], [0], [0], [1], [0, 0, 1, 1], [], []>} : vector<56x256xbf16>, vector<256x256xbf16>, vector<56x256xf32> -> vector<56x256xf32>
    %c2_47 = arith.constant 2 : index
    %c0_48 = arith.constant 0 : index
    %c0_49 = arith.constant 0 : index
    %57 = vector.load %arg3[%c2_47, %c0_48, %c0_49] : memref<3x256x256xbf16, #tpu.memory_space<vmem>>, vector<1x256x256xbf16>
    %58 = vector.shape_cast %57 : vector<1x256x256xbf16> to vector<256x256xbf16>
    %cst_50 = arith.constant dense<0.000000e+00> : vector<56x256xf32>
    %59 = tpu.matmul %50, %58, %cst_50 {dimension_numbers = #tpu.dot_dimension_numbers<[1], [0], [0], [1], [0, 0, 1, 1], [], []>} : vector<56x256xbf16>, vector<256x256xbf16>, vector<56x256xf32> -> vector<56x256xf32>
    %60 = vector.extract_strided_slice %53 {offsets = [7, 0], sizes = [16, 256], strides = [1, 1]} : vector<56x256xf32> to vector<16x256xf32>
    %61 = vector.extract_strided_slice %56 {offsets = [8, 0], sizes = [16, 256], strides = [1, 1]} : vector<56x256xf32> to vector<16x256xf32>
    %62 = arith.addf %60, %61 : vector<16x256xf32>
    %63 = vector.extract_strided_slice %59 {offsets = [9, 0], sizes = [16, 256], strides = [1, 1]} : vector<56x256xf32> to vector<16x256xf32>
    %64 = arith.addf %62, %63 : vector<16x256xf32>
    %c0_51 = arith.constant 0 : index
    %c0_52 = arith.constant 0 : index
    %65 = vector.load %arg6[%c0_51, %c0_52] : memref<1x256xf32, #tpu.memory_space<vmem>>, vector<1x256xf32>
    %66 = vector.broadcast %65 : vector<1x256xf32> to vector<16x256xf32>
    %67 = arith.mulf %64, %66 : vector<16x256xf32>
    %c0_53 = arith.constant 0 : index
    %c0_54 = arith.constant 0 : index
    %68 = vector.load %arg7[%c0_53, %c0_54] : memref<1x256xf32, #tpu.memory_space<vmem>>, vector<1x256xf32>
    %69 = vector.broadcast %68 : vector<1x256xf32> to vector<16x256xf32>
    %70 = arith.addf %67, %69 : vector<16x256xf32>
    %71 = vector.extract_strided_slice %53 {offsets = [31, 0], sizes = [16, 256], strides = [1, 1]} : vector<56x256xf32> to vector<16x256xf32>
    %72 = vector.extract_strided_slice %56 {offsets = [32, 0], sizes = [16, 256], strides = [1, 1]} : vector<56x256xf32> to vector<16x256xf32>
    %73 = arith.addf %71, %72 : vector<16x256xf32>
    %74 = vector.extract_strided_slice %59 {offsets = [33, 0], sizes = [16, 256], strides = [1, 1]} : vector<56x256xf32> to vector<16x256xf32>
    %75 = arith.addf %73, %74 : vector<16x256xf32>
    %c0_55 = arith.constant 0 : index
    %c0_56 = arith.constant 0 : index
    %76 = vector.load %arg6[%c0_55, %c0_56] : memref<1x256xf32, #tpu.memory_space<vmem>>, vector<1x256xf32>
    %77 = vector.broadcast %76 : vector<1x256xf32> to vector<16x256xf32>
    %78 = arith.mulf %75, %77 : vector<16x256xf32>
    %c0_57 = arith.constant 0 : index
    %c0_58 = arith.constant 0 : index
    %79 = vector.load %arg7[%c0_57, %c0_58] : memref<1x256xf32, #tpu.memory_space<vmem>>, vector<1x256xf32>
    %80 = vector.broadcast %79 : vector<1x256xf32> to vector<16x256xf32>
    %81 = arith.addf %78, %80 : vector<16x256xf32>
    %c0_59 = arith.constant 0 : index
    %c0_60 = arith.constant 0 : index
    %c0_61 = arith.constant 0 : index
    %82 = vector.load %arg1[%c0_59, %c0_60, %c0_61] : memref<2x16x256xf32, #tpu.memory_space<vmem>>, vector<1x16x256xf32>
    %83 = vector.shape_cast %82 : vector<1x16x256xf32> to vector<16x256xf32>
    %84 = arith.addf %70, %83 : vector<16x256xf32>
    %cst_62 = arith.constant 0.000000e+00 : f32
    %85 = vector.broadcast %cst_62 : f32 to vector<16x256xf32>
    %86 = arith.maximumf %84, %85 : vector<16x256xf32>
    %c0_63 = arith.constant 0 : index
    %c0_64 = arith.constant 0 : index
    %c0_65 = arith.constant 0 : index
    %87 = vector.load %arg8[%c0_63, %c0_64, %c0_65] : memref<2x16x256xf32, #tpu.memory_space<vmem>>, vector<1x16x256xf32>
    %88 = vector.shape_cast %87 : vector<1x16x256xf32> to vector<16x256xf32>
    %89 = vector.shape_cast %86 : vector<16x256xf32> to vector<1x16x256xf32>
    tpu.vector_store %arg8[%c0_63, %c0_64, %c0_65], %89 {strides = array<i32>} : memref<2x16x256xf32, #tpu.memory_space<vmem>>, vector<1x16x256xf32>,
    %c1_66 = arith.constant 1 : index
    %c0_67 = arith.constant 0 : index
    %c0_68 = arith.constant 0 : index
    %90 = vector.load %arg1[%c1_66, %c0_67, %c0_68] : memref<2x16x256xf32, #tpu.memory_space<vmem>>, vector<1x16x256xf32>
    %91 = vector.shape_cast %90 : vector<1x16x256xf32> to vector<16x256xf32>
    %92 = arith.addf %81, %91 : vector<16x256xf32>
    %cst_69 = arith.constant 0.000000e+00 : f32
    %93 = vector.broadcast %cst_69 : f32 to vector<16x256xf32>
    %94 = arith.maximumf %92, %93 : vector<16x256xf32>
    %c1_70 = arith.constant 1 : index
    %c0_71 = arith.constant 0 : index
    %c0_72 = arith.constant 0 : index
    %95 = vector.load %arg8[%c1_70, %c0_71, %c0_72] : memref<2x16x256xf32, #tpu.memory_space<vmem>>, vector<1x16x256xf32>
    %96 = vector.shape_cast %95 : vector<1x16x256xf32> to vector<16x256xf32>
    %97 = vector.shape_cast %94 : vector<16x256xf32> to vector<1x16x256xf32>
    tpu.vector_store %arg8[%c1_70, %c0_71, %c0_72], %97 {strides = array<i32>} : memref<2x16x256xf32, #tpu.memory_space<vmem>>, vector<1x16x256xf32>,
    return
  }
  func.func @transform_0(%arg0: i32) -> (i32, i32, i32) {
    %c0_i32 = arith.constant 0 : i32
    %c0_i32_0 = arith.constant 0 : i32
    %c0_i32_1 = arith.constant 0 : i32
    return %arg0, %c0_i32, %c0_i32_0 : i32, i32, i32
  }
  func.func @transform_1(%arg0: i32) -> (i32, i32, i32) {
    %c0_i32 = arith.constant 0 : i32
    %c0_i32_0 = arith.constant 0 : i32
    %c0_i32_1 = arith.constant 0 : i32
    %c0_i32_2 = arith.constant 0 : i32
    return %c0_i32, %c0_i32_0, %c0_i32_1 : i32, i32, i32
  }
  func.func @transform_2(%arg0: i32) -> (i32, i32, i32) {
    %c0_i32 = arith.constant 0 : i32
    %c0_i32_0 = arith.constant 0 : i32
    %c0_i32_1 = arith.constant 0 : i32
    %c0_i32_2 = arith.constant 0 : i32
    return %c0_i32, %c0_i32_0, %c0_i32_1 : i32, i32, i32
  }
  func.func @transform_3(%arg0: i32) -> (i32, i32) {
    %c0_i32 = arith.constant 0 : i32
    %c0_i32_0 = arith.constant 0 : i32
    %c0_i32_1 = arith.constant 0 : i32
    return %c0_i32, %c0_i32_0 : i32, i32
  }
  func.func @transform_4(%arg0: i32) -> (i32, i32) {
    %c0_i32 = arith.constant 0 : i32
    %c0_i32_0 = arith.constant 0 : i32
    %c0_i32_1 = arith.constant 0 : i32
    return %c0_i32, %c0_i32_0 : i32, i32
  }
  func.func @transform_5(%arg0: i32) -> (i32, i32) {
    %c0_i32 = arith.constant 0 : i32
    %c0_i32_0 = arith.constant 0 : i32
    %c0_i32_1 = arith.constant 0 : i32
    return %c0_i32, %c0_i32_0 : i32, i32
  }
  func.func @transform_6(%arg0: i32) -> (i32, i32) {
    %c0_i32 = arith.constant 0 : i32
    %c0_i32_0 = arith.constant 0 : i32
    %c0_i32_1 = arith.constant 0 : i32
    return %c0_i32, %c0_i32_0 : i32, i32
  }
  func.func @transform_7(%arg0: i32) -> (i32, i32, i32) {
    %c0_i32 = arith.constant 0 : i32
    %c0_i32_0 = arith.constant 0 : i32
    %c0_i32_1 = arith.constant 0 : i32
    return %arg0, %c0_i32, %c0_i32_0 : i32, i32, i32
  }
}

</mosaic_0001>

<llo_original>
// kernel: tpu_custom_call.1
$region0: #{tpu_custom_call.1}
  #allocation0 [shape = 'u32[]', space=smem, size = 0x4, offset = 0x4, fixed_abs, tag = 'smem constant byte address 0x4 - core index']
  #allocation1 [shape = 'u32[72,128]{1,0:T(1,128)}', space=vmem, size = 0x9000, scoped, tag = 'internal scratch']
  #allocation2 [shape = 'f32[56,256]{1,0:T(8,128)}', space=vmem, size = 0xe000, scoped, tag = 'scratch operand']
  %s0 = inlined_call_operand.hbm [shape: f32[4,16,256], index: 0, kind: input, shape index: {}]
  %s1 = inlined_call_operand.hbm [shape: bf16[3,256,256], index: 1, kind: input, shape index: {}]
  %s2 = inlined_call_operand.hbm [shape: bf16[3,256,256], index: 2, kind: input, shape index: {}]
  %s3 = inlined_call_operand.vmem [shape: f32[1,256], index: 3, kind: input, shape index: {}]
  %s4 = inlined_call_operand.hbm [shape: f32[1,256], index: 4, kind: input, shape index: {}]
  %s5 = inlined_call_operand.vmem [shape: f32[1,256], index: 5, kind: input, shape index: {}]
  %s6 = inlined_call_operand.hbm [shape: f32[1,256], index: 6, kind: input, shape index: {}]
  %s7 = inlined_call_operand.hbm [shape: f32[4,16,256], index: 7, kind: output, shape index: {}]
  %s8 = sld [smem:[#allocation0]]
  $region81: #{tpu_custom_call.1} parent=0
    _
  %s10 = ssub.s32 1, %s8
  %s11 = scalar_select 0, %s10, %s8
  $region1: #{tpu_custom_call.1} parent=0
    #allocation3 [shape = 'u8[65536]{0}', space=vmem, size = 0x10000, scoped, tag = 'input window, operand 0']
    #allocation4 [shape = 's32[2]{0}', space=sflag, size = 0x8, scoped, tag = 'scoped memory for tpu_custom_call.1']
    #allocation5 [shape = 's32[2]{0}', space=sflag, size = 0x8, scoped, tag = 'scoped memory for tpu_custom_call.1']
    #allocation6 [shape = 'u8[393216]{0}', space=vmem, size = 0x60000, scoped, tag = 'input window, operand 1, single buffered']
    #allocation7 [shape = 's32[1]{0}', space=sflag, size = 0x4, scoped, tag = 'scoped memory for tpu_custom_call.1']
    #allocation8 [shape = 'u8[393216]{0}', space=vmem, size = 0x60000, scoped, tag = 'input window, operand 2, single buffered']
    #allocation9 [shape = 'u8[1024]{0}', space=vmem, size = 0x400, scoped, tag = 'input window, operand 4, single buffered']
    #allocation10 [shape = 's32[1]{0}', space=sflag, size = 0x4, scoped, tag = 'scoped memory for tpu_custom_call.1']
    #allocation11 [shape = 'u8[1024]{0}', space=vmem, size = 0x400, scoped, tag = 'input window, operand 6, single buffered']
    #allocation12 [shape = 'u8[65536]{0}', space=vmem, size = 0x10000, scoped, tag = 'output window, operand 0']
    %12 = vsyncpa [#allocation4], 0
    %s13 = scalar_lea.sflag [#allocation4], 1
    %14 = vsyncpa %s13, 0
    %15 = vsyncpa [#allocation7], 0
    %16 = vsyncpa [#allocation10], 0
    %17 = vsyncpa [#allocation5], 0
    %s18 = scalar_lea.sflag [#allocation5], 1
    %19 = vsyncpa %s18, 0
    loop: start=0, step=1, limit=4
    $region2: #{tpu_custom_call.1} parent=1 // loop_pre_header
      _
    $region3: #{tpu_custom_call.1} parent=1 // loop_header
      %s21 = sphi 0, %s25
      %p22 = scmp.ge.s32.totalorder %s21, 4
      %s31 = sphi 0, %s33
      %s34 = sphi 0, %s31
      %s35 = sphi 0, %s34
      %s51 = sphi 0, %s35
      %s55 = sphi 0, %s55
      %s57 = sphi 0, %s55
      %s58 = sphi 0, %s57
      %s72 = sphi 0, %s58
      %s76 = sphi 0, %s76
      %s78 = sphi 0, %s76
      %s79 = sphi 0, %s78
      %s93 = sphi 0, %s79
      %s97 = sphi 0, %s97
      %s99 = sphi 0, %s97
      %s100 = sphi 0, %s99
      %s114 = sphi 0, %s100
      %s118 = sphi 0, %s118
      %s120 = sphi 0, %s118
      %s121 = sphi 0, %s120
      %s135 = sphi 0, %s121
      %s139 = sphi 0, %s139
      %s141 = sphi 0, %s139
      %s142 = sphi 0, %s141
      %s156 = sphi 0, %s142
      %s160 = sphi 0, %s160
      %s162 = sphi 0, %s160
      %s163 = sphi 0, %s162
      %s177 = sphi 0, %s163
      %s183 = sphi 0, %s185
      %s186 = sphi 0, %s183
      %s187 = sphi 0, %s186
      %s203 = sphi 0, %s187
    $region4: #{tpu_custom_call.1} parent=1 // loop_header_branch
      %24 = sbr.rel (%p22) target = $region8
    $region5: #{tpu_custom_call.1} parent=1 // loop_body
      %s26 = ssub.s32 %s21, 1
      %s27 = ssub.s32 %s21, 2
      %s28 = sadd.s32 %s21, 1
      %s29 = ssub.s32 %s21, %s28
      %p30 = scmp.eq.s32.totalorder %s29, 0
      %s32 = sadd.s32 %s31, 1
      %s33 = scalar_select %p30, %s31, %s32
      %p36 = pneg %p30
      %p37 = scmp.eq.s32.totalorder %s21, 1
      %p38 = por %p36, %p37
      %p39 = scmp.ne.s32.totalorder %s31, %s34
      %p40 = scmp.eq.s32.totalorder %s21, 0
      %p41 = por %p39, %p40
      %p42 = scmp.ne.s32.totalorder %s31, %s34
      %p43 = scmp.eq.s32.totalorder %s26, 1
      %p44 = por %p42, %p43
      %p45 = scmp.ne.s32.totalorder %s34, %s35
      %p46 = scmp.eq.s32.totalorder %s26, 0
      %p47 = por %p45, %p46
      %p48 = scmp.ne.s32.totalorder %s34, %s35
      %p49 = scmp.eq.s32.totalorder %s27, 1
      %p50 = por %p48, %p49
      %p52 = scmp.ne.s32.totalorder %s35, %s51
      %p53 = scmp.eq.s32.totalorder %s27, 0
      %p54 = por %p52, %p53
      %s56 = sadd.s32 %s55, 1
      %p59 = scmp.eq.s32.totalorder %s21, 1
      %p60 = scmp.ne.s32.totalorder %s55, %s57
      %p61 = scmp.eq.s32.totalorder %s21, 0
      %p62 = por %p60, %p61
      %p63 = scmp.ne.s32.totalorder %s55, %s57
      %p64 = scmp.eq.s32.totalorder %s26, 1
      %p65 = por %p63, %p64
      %p66 = scmp.ne.s32.totalorder %s57, %s58
      %p67 = scmp.eq.s32.totalorder %s26, 0
      %p68 = por %p66, %p67
      %p69 = scmp.ne.s32.totalorder %s57, %s58
      %p70 = scmp.eq.s32.totalorder %s27, 1
      %p71 = por %p69, %p70
      %p73 = scmp.ne.s32.totalorder %s58, %s72
      %p74 = scmp.eq.s32.totalorder %s27, 0
      %p75 = por %p73, %p74
      %s77 = sadd.s32 %s76, 1
      %p80 = scmp.eq.s32.totalorder %s21, 1
      %p81 = scmp.ne.s32.totalorder %s76, %s78
      %p82 = scmp.eq.s32.totalorder %s21, 0
      %p83 = por %p81, %p82
      %p84 = scmp.ne.s32.totalorder %s76, %s78
      %p85 = scmp.eq.s32.totalorder %s26, 1
      %p86 = por %p84, %p85
      %p87 = scmp.ne.s32.totalorder %s78, %s79
      %p88 = scmp.eq.s32.totalorder %s26, 0
      %p89 = por %p87, %p88
      %p90 = scmp.ne.s32.totalorder %s78, %s79
      %p91 = scmp.eq.s32.totalorder %s27, 1
      %p92 = por %p90, %p91
      %p94 = scmp.ne.s32.totalorder %s79, %s93
      %p95 = scmp.eq.s32.totalorder %s27, 0
      %p96 = por %p94, %p95
      %s98 = sadd.s32 %s97, 1
      %p101 = scmp.eq.s32.totalorder %s21, 1
      %p102 = scmp.ne.s32.totalorder %s97, %s99
      %p103 = scmp.eq.s32.totalorder %s21, 0
      %p104 = por %p102, %p103
      %p105 = scmp.ne.s32.totalorder %s97, %s99
      %p106 = scmp.eq.s32.totalorder %s26, 1
      %p107 = por %p105, %p106
      %p108 = scmp.ne.s32.totalorder %s99, %s100
      %p109 = scmp.eq.s32.totalorder %s26, 0
      %p110 = por %p108, %p109
      %p111 = scmp.ne.s32.totalorder %s99, %s100
      %p112 = scmp.eq.s32.totalorder %s27, 1
      %p113 = por %p111, %p112
      %p115 = scmp.ne.s32.totalorder %s100, %s114
      %p116 = scmp.eq.s32.totalorder %s27, 0
      %p117 = por %p115, %p116
      %s119 = sadd.s32 %s118, 1
      %p122 = scmp.eq.s32.totalorder %s21, 1
      %p123 = scmp.ne.s32.totalorder %s118, %s120
      %p124 = scmp.eq.s32.totalorder %s21, 0
      %p125 = por %p123, %p124
      %p126 = scmp.ne.s32.totalorder %s118, %s120
      %p127 = scmp.eq.s32.totalorder %s26, 1
      %p128 = por %p126, %p127
      %p129 = scmp.ne.s32.totalorder %s120, %s121
      %p130 = scmp.eq.s32.totalorder %s26, 0
      %p131 = por %p129, %p130
      %p132 = scmp.ne.s32.totalorder %s120, %s121
      %p133 = scmp.eq.s32.totalorder %s27, 1
      %p134 = por %p132, %p133
      %p136 = scmp.ne.s32.totalorder %s121, %s135
      %p137 = scmp.eq.s32.totalorder %s27, 0
      %p138 = por %p136, %p137
      %s140 = sadd.s32 %s139, 1
      %p143 = scmp.eq.s32.totalorder %s21, 1
      %p144 = scmp.ne.s32.totalorder %s139, %s141
      %p145 = scmp.eq.s32.totalorder %s21, 0
      %p146 = por %p144, %p145
      %p147 = scmp.ne.s32.totalorder %s139, %s141
      %p148 = scmp.eq.s32.totalorder %s26, 1
      %p149 = por %p147, %p148
      %p150 = scmp.ne.s32.totalorder %s141, %s142
      %p151 = scmp.eq.s32.totalorder %s26, 0
      %p152 = por %p150, %p151
      %p153 = scmp.ne.s32.totalorder %s141, %s142
      %p154 = scmp.eq.s32.totalorder %s27, 1
      %p155 = por %p153, %p154
      %p157 = scmp.ne.s32.totalorder %s142, %s156
      %p158 = scmp.eq.s32.totalorder %s27, 0
      %p159 = por %p157, %p158
      %s161 = sadd.s32 %s160, 1
      %p164 = scmp.eq.s32.totalorder %s21, 1
      %p165 = scmp.ne.s32.totalorder %s160, %s162
      %p166 = scmp.eq.s32.totalorder %s21, 0
      %p167 = por %p165, %p166
      %p168 = scmp.ne.s32.totalorder %s160, %s162
      %p169 = scmp.eq.s32.totalorder %s26, 1
      %p170 = por %p168, %p169
      %p171 = scmp.ne.s32.totalorder %s162, %s163
      %p172 = scmp.eq.s32.totalorder %s26, 0
      %p173 = por %p171, %p172
      %p174 = scmp.ne.s32.totalorder %s162, %s163
      %p175 = scmp.eq.s32.totalorder %s27, 1
      %p176 = por %p174, %p175
      %p178 = scmp.ne.s32.totalorder %s163, %s177
      %p179 = scmp.eq.s32.totalorder %s27, 0
      %p180 = por %p178, %p179
      %s181 = ssub.s32 %s21, %s28
      %p182 = scmp.eq.s32.totalorder %s181, 0
      %s184 = sadd.s32 %s183, 1
      %s185 = scalar_select %p182, %s183, %s184
      %p188 = pneg %p182
      %p189 = scmp.eq.s32.totalorder %s21, 1
      %p190 = por %p188, %p189
      %p191 = scmp.ne.s32.totalorder %s183, %s186
      %p192 = scmp.eq.s32.totalorder %s21, 0
      %p193 = por %p191, %p192
      %p194 = scmp.ne.s32.totalorder %s183, %s186
      %p195 = scmp.eq.s32.totalorder %s26, 1
      %p196 = por %p194, %p195
      %p197 = scmp.ne.s32.totalorder %s186, %s187
      %p198 = scmp.eq.s32.totalorder %s26, 0
      %p199 = por %p197, %p198
      %p200 = scmp.ne.s32.totalorder %s186, %s187
      %p201 = scmp.eq.s32.totalorder %s27, 1
      %p202 = por %p200, %p201
      %p204 = scmp.ne.s32.totalorder %s187, %s203
      %p205 = scmp.eq.s32.totalorder %s27, 0
      %p206 = por %p204, %p205
      %p207 = scmp.le.s32.totalorder 1, %s21
      %p208 = scmp.lt.s32.totalorder %s21, 3
      %p209 = pnand %p207, %p208
      %p210 = pneg %p209
      // Predicated region
      $region9: #{tpu_custom_call.1} parent=5 // pred_check
        _
      $region10: #{tpu_custom_call.1} parent=5 // pred_check_branch
        %212 = sbr.rel (%p209) target = $region12
      $region11: #{tpu_custom_call.1} parent=5 // pred_region
        %s213 = ssub.s32 %s21, 1
        // Predicated region
        $region13: #{tpu_custom_call.1} parent=11 // pred_check
          %p214 = pneg %p68
        $region14: #{tpu_custom_call.1} parent=11 // pred_check_branch
          %216 = sbr.rel (%p214) target = $region16
        $region15: #{tpu_custom_call.1} parent=11 // pred_region
          %218 = vsyncadd [#allocation7], 0
          %s219 = sshll.u32 %s1, 4
          %s220 = int_to_ptr.hbm [resolvable:$true] %s219
          %s221 = sshll.u32 [#allocation6], 4
          %s222 = int_to_ptr.vmem [resolvable:$true] %s221
          %227 = dma.hbm_to_vmem [thread:$0]  %s220, 12288, %s222, [#allocation7], 128, 128, 8
        $region16: #{tpu_custom_call.1} parent=11 // pred_fallthru
          _
        // Predicated region
        $region17: #{tpu_custom_call.1} parent=11 // pred_check
          %p228 = pneg %p89
        $region18: #{tpu_custom_call.1} parent=11 // pred_check_branch
          %230 = sbr.rel (%p228) target = $region20
        $region19: #{tpu_custom_call.1} parent=11 // pred_region
          %232 = vsyncadd [#allocation7], 0
          %s233 = sshll.u32 %s2, 4
          %s234 = int_to_ptr.hbm [resolvable:$true] %s233
          %s235 = sshll.u32 [#allocation8], 4
          %s236 = int_to_ptr.vmem [resolvable:$true] %s235
          %241 = dma.hbm_to_vmem [thread:$0]  %s234, 12288, %s236, [#allocation7], 128, 128, 8
        $region20: #{tpu_custom_call.1} parent=11 // pred_fallthru
          _
        // Predicated region
        $region21: #{tpu_custom_call.1} parent=11 // pred_check
          %p242 = pneg %p110
        $region22: #{tpu_custom_call.1} parent=11 // pred_check_branch
          %244 = sbr.rel (%p242) target = $region24
        $region23: #{tpu_custom_call.1} parent=11 // pred_region
          _
        $region24: #{tpu_custom_call.1} parent=11 // pred_fallthru
          _
        // Predicated region
        $region25: #{tpu_custom_call.1} parent=11 // pred_check
          %p245 = pneg %p131
        $region26: #{tpu_custom_call.1} parent=11 // pred_check_branch
          %247 = sbr.rel (%p245) target = $region28
        $region27: #{tpu_custom_call.1} parent=11 // pred_region
          %249 = vsyncadd [#allocation10], 0
          %s251 = sshll.u32 %s4, 4
          %s252 = int_to_ptr.hbm [resolvable:$true] %s251
          %s253 = sshll.u32 [#allocation9], 4
          %s254 = int_to_ptr.vmem [resolvable:$true] %s253
          %256 = dma.hbm_to_vmem [thread:$0]  %s252, 32, %s254, [#allocation10]
        $region28: #{tpu_custom_call.1} parent=11 // pred_fallthru
          _
        // Predicated region
        $region29: #{tpu_custom_call.1} parent=11 // pred_check
          %p257 = pneg %p152
        $region30: #{tpu_custom_call.1} parent=11 // pred_check_branch
          %259 = sbr.rel (%p257) target = $region32
        $region31: #{tpu_custom_call.1} parent=11 // pred_region
          _
        $region32: #{tpu_custom_call.1} parent=11 // pred_fallthru
          _
        // Predicated region
        $region33: #{tpu_custom_call.1} parent=11 // pred_check
          %p260 = pneg %p173
        $region34: #{tpu_custom_call.1} parent=11 // pred_check_branch
          %262 = sbr.rel (%p260) target = $region36
        $region35: #{tpu_custom_call.1} parent=11 // pred_region
          %264 = vsyncadd [#allocation10], 0
          %s266 = sshll.u32 %s6, 4
          %s267 = int_to_ptr.hbm [resolvable:$true] %s266
          %s268 = sshll.u32 [#allocation11], 4
          %s269 = int_to_ptr.vmem [resolvable:$true] %s268
          %271 = dma.hbm_to_vmem [thread:$0]  %s267, 32, %s269, [#allocation10]
        $region36: #{tpu_custom_call.1} parent=11 // pred_fallthru
          _
      $region12: #{tpu_custom_call.1} parent=5 // pred_fallthru
        _
      %p272 = scmp.lt.s32.totalorder %s21, 2
      // Predicated region
      $region37: #{tpu_custom_call.1} parent=5 // pred_check
        %p273 = pneg %p272
      $region38: #{tpu_custom_call.1} parent=5 // pred_check_branch
        %275 = sbr.rel (%p273) target = $region40
      $region39: #{tpu_custom_call.1} parent=5 // pred_region
        // Predicated region
        $region41: #{tpu_custom_call.1} parent=39 // pred_check
          %p276 = pneg %p41
        $region42: #{tpu_custom_call.1} parent=39 // pred_check_branch
          %278 = sbr.rel (%p276) target = $region44
        $region43: #{tpu_custom_call.1} parent=39 // pred_region
          %s279 = sand.u32 %s31, 1
          %s280 = scalar_lea.sflag [#allocation4], %s279
          %s281 = sand.u32 %s31, 1
          %s282 = smul.addr %s281, 64
          %s283 = scalar_lea.vmem [#allocation3], %s282
          %s284 = smul.u32 2, %s21
          %286 = vsyncadd %s280, 0
          %s287 = smul.addr %s284, 4
          %s288 = smul.addr %s287, 8
          %s289 = scalar_lea.hbm %s0, %s288
          %s290 = sshll.u32 %s289, 4
          %s291 = int_to_ptr.hbm [resolvable:$true] %s290
          %s292 = sshll.u32 %s283, 4
          %s293 = int_to_ptr.vmem [resolvable:$true] %s292
          %298 = dma.hbm_to_vmem [thread:$0]  %s291, 1024, %s293, %s280, 256, 256, 16
        $region44: #{tpu_custom_call.1} parent=39 // pred_fallthru
          _
      $region40: #{tpu_custom_call.1} parent=5 // pred_fallthru
        _
      %p299 = scmp.le.s32.totalorder 1, %s21
      %p300 = scmp.lt.s32.totalorder %s21, 3
      %p301 = pnand %p299, %p300
      %p302 = pneg %p301
      // Predicated region
      $region45: #{tpu_custom_call.1} parent=5 // pred_check
        _
      $region46: #{tpu_custom_call.1} parent=5 // pred_check_branch
        %304 = sbr.rel (%p301) target = $region48
      $region47: #{tpu_custom_call.1} parent=5 // pred_region
        %s305 = ssub.s32 %s21, 1
        %s306 = sand.u32 %s34, 1
        %s307 = scalar_lea.sflag [#allocation4], %s306
        %s308 = sand.u32 %s34, 1
        %s309 = smul.addr %s308, 64
        %s310 = scalar_lea.vmem [#allocation3], %s309
        // Predicated region
        $region49: #{tpu_custom_call.1} parent=47 // pred_check
          %p311 = pneg %p47
        $region50: #{tpu_custom_call.1} parent=47 // pred_check_branch
          %313 = sbr.rel (%p311) target = $region52
        $region51: #{tpu_custom_call.1} parent=47 // pred_region
          %315 = dma.done %s307, 1024
        $region52: #{tpu_custom_call.1} parent=47 // pred_fallthru
          _
        // Predicated region
        $region53: #{tpu_custom_call.1} parent=47 // pred_check
          %p316 = pneg %p68
        $region54: #{tpu_custom_call.1} parent=47 // pred_check_branch
          %318 = sbr.rel (%p316) target = $region56
        $region55: #{tpu_custom_call.1} parent=47 // pred_region
          %320 = dma.done [#allocation7], 12288
        $region56: #{tpu_custom_call.1} parent=47 // pred_fallthru
          _
        // Predicated region
        $region57: #{tpu_custom_call.1} parent=47 // pred_check
          %p321 = pneg %p89
        $region58: #{tpu_custom_call.1} parent=47 // pred_check_branch
          %323 = sbr.rel (%p321) target = $region60
        $region59: #{tpu_custom_call.1} parent=47 // pred_region
          %325 = dma.done [#allocation7], 12288
        $region60: #{tpu_custom_call.1} parent=47 // pred_fallthru
          _
        // Predicated region
        $region61: #{tpu_custom_call.1} parent=47 // pred_check
          %p326 = pneg %p131
        $region62: #{tpu_custom_call.1} parent=47 // pred_check_branch
          %328 = sbr.rel (%p326) target = $region64
        $region63: #{tpu_custom_call.1} parent=47 // pred_region
          %330 = dma.done [#allocation10], 32
        $region64: #{tpu_custom_call.1} parent=47 // pred_fallthru
          _
        // Predicated region
        $region65: #{tpu_custom_call.1} parent=47 // pred_check
          %p331 = pneg %p173
        $region66: #{tpu_custom_call.1} parent=47 // pred_check_branch
          %333 = sbr.rel (%p331) target = $region68
        $region67: #{tpu_custom_call.1} parent=47 // pred_region
          %335 = dma.done [#allocation10], 32
        $region68: #{tpu_custom_call.1} parent=47 // pred_fallthru
          _
        %s336 = sand.u32 %s34, 1
        %s337 = scalar_lea.sflag [#allocation4], %s336
        %s338 = sand.u32 %s34, 1
        %s339 = smul.addr %s338, 64
        %s340 = scalar_lea.vmem [#allocation3], %s339
        %p341 = pneg %p47
        %p342 = pneg %p44
        %p343 = pneg %p68
        %p344 = pneg %p65
        %p345 = pneg %p89
        %p346 = pneg %p86
        %p347 = pneg %p110
        %p348 = pneg %p107
        %p349 = pneg %p131
        %p350 = pneg %p128
        %p351 = pneg %p152
        %p352 = pneg %p149
        %p353 = pneg %p173
        %p354 = pneg %p170
        %p355 = pneg %p199
        %p356 = pneg %p196
        %s357 = sand.u32 %s186, 1
        %s358 = scalar_lea.sflag [#allocation5], %s357
        %s359 = sand.u32 %s186, 1
        %s360 = smul.addr %s359, 64
        %s361 = scalar_lea.vmem [#allocation12], %s360
        %s362 = smul.u32 2, %s26
        %s363 = smul.u32 2, %s26
        %364 = vst [vmem:[#allocation2] sm:$0xff] 0.0
        %365 = vst [vmem:[#allocation2 + $0x8] sm:$0xff] 0.0
        %366 = vst [vmem:[#allocation2 + $0x30] sm:$0xff] 0.0
        %367 = vst [vmem:[#allocation2 + $0x38] sm:$0xff] 0.0
        %368 = vst [vmem:[#allocation2 + $0x60] sm:$0xff] 0.0
        %369 = vst [vmem:[#allocation2 + $0x68] sm:$0xff] 0.0
        %v370 = vld [vmem:[%s310] sm:$0xff]
        %v371 = vld [vmem:[%s310 + $0x8] sm:$0xff]
        %v372 = vld [vmem:[%s310 + $0x10] sm:$0xff]
        %v373 = vld [vmem:[%s310 + $0x18] sm:$0xff]
        %374 = vst [vmem:[#allocation2 + $0x10] sm:$0xff] %v370
        %375 = vst [vmem:[#allocation2 + $0x18] sm:$0xff] %v371
        %376 = vst [vmem:[#allocation2 + $0x20] sm:$0xff] %v372
        %377 = vst [vmem:[#allocation2 + $0x28] sm:$0xff] %v373
        %s378 = scalar_lea.vmem %s310, 32 [#allocation3]
        %v379 = vld [vmem:[%s378] sm:$0xff]
        %v380 = vld [vmem:[%s378 + $0x8] sm:$0xff]
        %v381 = vld [vmem:[%s378 + $0x10] sm:$0xff]
        %v382 = vld [vmem:[%s378 + $0x18] sm:$0xff]
        %383 = vst [vmem:[#allocation2 + $0x40] sm:$0xff] %v379
        %384 = vst [vmem:[#allocation2 + $0x48] sm:$0xff] %v380
        %385 = vst [vmem:[#allocation2 + $0x50] sm:$0xff] %v381
        %386 = vst [vmem:[#allocation2 + $0x58] sm:$0xff] %v382
        %v387 = vld [vmem:[#allocation2] sm:$0xff]
        %v388 = vld [vmem:[#allocation2 + $0x8] sm:$0xff]
        %v389 = vld [vmem:[#allocation2 + $0x10] sm:$0xff]
        %v390 = vld [vmem:[#allocation2 + $0x18] sm:$0xff]
        %v391 = vld [vmem:[#allocation2 + $0x20] sm:$0xff]
        %v392 = vld [vmem:[#allocation2 + $0x28] sm:$0xff]
        %v393 = vld [vmem:[#allocation2 + $0x30] sm:$0xff]
        %v394 = vld [vmem:[#allocation2 + $0x38] sm:$0xff]
        %v395 = vld [vmem:[#allocation2 + $0x40] sm:$0xff]
        %v396 = vld [vmem:[#allocation2 + $0x48] sm:$0xff]
        %v397 = vld [vmem:[#allocation2 + $0x50] sm:$0xff]
        %v398 = vld [vmem:[#allocation2 + $0x58] sm:$0xff]
        %v399 = vld [vmem:[#allocation2 + $0x60] sm:$0xff]
        %v400 = vld [vmem:[#allocation2 + $0x68] sm:$0xff]
        %v401 = vpack.c.bf16 %v389, %v387
        %v402 = vpack.c.bf16 %v390, %v388
        %v403 = vpack.c.bf16 %v393, %v391
        %v404 = vpack.c.bf16 %v394, %v392
        %v405 = vpack.c.bf16 %v397, %v395
        %v406 = vpack.c.bf16 %v398, %v396
        %v407 = vpack.c.bf16 %v399, %v399
        %v408 = vpack.c.bf16 %v400, %v400
        %v409 = vld [vmem:[#allocation6] sm:$0xff]
        %v410 = vld [vmem:[#allocation6 + $0x8] sm:$0xff]
        %v411 = vld [vmem:[#allocation6 + $0x10] sm:$0xff]
        %v412 = vld [vmem:[#allocation6 + $0x18] sm:$0xff]
        %v413 = vld [vmem:[#allocation6 + $0x20] sm:$0xff]
        %v414 = vld [vmem:[#allocation6 + $0x28] sm:$0xff]
        %v415 = vld [vmem:[#allocation6 + $0x30] sm:$0xff]
        %v416 = vld [vmem:[#allocation6 + $0x38] sm:$0xff]
        %v417 = vld [vmem:[#allocation6 + $0x40] sm:$0xff]
        %v418 = vld [vmem:[#allocation6 + $0x48] sm:$0xff]
        %v419 = vld [vmem:[#allocation6 + $0x50] sm:$0xff]
        %v420 = vld [vmem:[#allocation6 + $0x58] sm:$0xff]
        %v421 = vld [vmem:[#allocation6 + $0x60] sm:$0xff]
        %v422 = vld [vmem:[#allocation6 + $0x68] sm:$0xff]
        %v423 = vld [vmem:[#allocation6 + $0x70] sm:$0xff]
        %v424 = vld [vmem:[#allocation6 + $0x78] sm:$0xff]
        %v425 = vld [vmem:[#allocation6 + $0x80] sm:$0xff]
        %v426 = vld [vmem:[#allocation6 + $0x88] sm:$0xff]
        %v427 = vld [vmem:[#allocation6 + $0x90] sm:$0xff]
        %v428 = vld [vmem:[#allocation6 + $0x98] sm:$0xff]
        %v429 = vld [vmem:[#allocation6 + $0xa0] sm:$0xff]
        %v430 = vld [vmem:[#allocation6 + $0xa8] sm:$0xff]
        %v431 = vld [vmem:[#allocation6 + $0xb0] sm:$0xff]
        %v432 = vld [vmem:[#allocation6 + $0xb8] sm:$0xff]
        %v433 = vld [vmem:[#allocation6 + $0xc0] sm:$0xff]
        %v434 = vld [vmem:[#allocation6 + $0xc8] sm:$0xff]
        %v435 = vld [vmem:[#allocation6 + $0xd0] sm:$0xff]
        %v436 = vld [vmem:[#allocation6 + $0xd8] sm:$0xff]
        %v437 = vld [vmem:[#allocation6 + $0xe0] sm:$0xff]
        %v438 = vld [vmem:[#allocation6 + $0xe8] sm:$0xff]
        %v439 = vld [vmem:[#allocation6 + $0xf0] sm:$0xff]
        %v440 = vld [vmem:[#allocation6 + $0xf8] sm:$0xff]
        %v473 = vunpack.c.l.b16 %v409
        %v474 = vunpack.c.h.b16 %v409
        %v475 = vunpack.c.l.b16 %v410
        %v476 = vunpack.c.h.b16 %v410
        %v477 = vunpack.c.l.b16 %v411
        %v478 = vunpack.c.h.b16 %v411
        %v479 = vunpack.c.l.b16 %v412
        %v480 = vunpack.c.h.b16 %v412
        %v481 = vunpack.c.l.b16 %v413
        %v482 = vunpack.c.h.b16 %v413
        %v483 = vunpack.c.l.b16 %v414
        %v484 = vunpack.c.h.b16 %v414
        %v485 = vunpack.c.l.b16 %v415
        %v486 = vunpack.c.h.b16 %v415
        %v487 = vunpack.c.l.b16 %v416
        %v488 = vunpack.c.h.b16 %v416
        %v489 = vunpack.c.l.b16 %v417
        %v490 = vunpack.c.h.b16 %v417
        %v491 = vunpack.c.l.b16 %v418
        %v492 = vunpack.c.h.b16 %v418
        %v493 = vunpack.c.l.b16 %v419
        %v494 = vunpack.c.h.b16 %v419
        %v495 = vunpack.c.l.b16 %v420
        %v496 = vunpack.c.h.b16 %v420
        %v497 = vunpack.c.l.b16 %v421
        %v498 = vunpack.c.h.b16 %v421
        %v499 = vunpack.c.l.b16 %v422
        %v500 = vunpack.c.h.b16 %v422
        %v501 = vunpack.c.l.b16 %v423
        %v502 = vunpack.c.h.b16 %v423
        %v503 = vunpack.c.l.b16 %v424
        %v504 = vunpack.c.h.b16 %v424
        %v505 = vunpack.c.l.b16 %v425
        %v506 = vunpack.c.h.b16 %v425
        %v507 = vunpack.c.l.b16 %v426
        %v508 = vunpack.c.h.b16 %v426
        %v509 = vunpack.c.l.b16 %v427
        %v510 = vunpack.c.h.b16 %v427
        %v511 = vunpack.c.l.b16 %v428
        %v512 = vunpack.c.h.b16 %v428
        %v513 = vunpack.c.l.b16 %v429
        %v514 = vunpack.c.h.b16 %v429
        %v515 = vunpack.c.l.b16 %v430
        %v516 = vunpack.c.h.b16 %v430
        %v517 = vunpack.c.l.b16 %v431
        %v518 = vunpack.c.h.b16 %v431
        %v519 = vunpack.c.l.b16 %v432
        %v520 = vunpack.c.h.b16 %v432
        %v521 = vunpack.c.l.b16 %v433
        %v522 = vunpack.c.h.b16 %v433
        %v523 = vunpack.c.l.b16 %v434
        %v524 = vunpack.c.h.b16 %v434
        %v525 = vunpack.c.l.b16 %v435
        %v526 = vunpack.c.h.b16 %v435
        %v527 = vunpack.c.l.b16 %v436
        %v528 = vunpack.c.h.b16 %v436
        %v529 = vunpack.c.l.b16 %v437
        %v530 = vunpack.c.h.b16 %v437
        %v531 = vunpack.c.l.b16 %v438
        %v532 = vunpack.c.h.b16 %v438
        %v533 = vunpack.c.l.b16 %v439
        %v534 = vunpack.c.h.b16 %v439
        %v535 = vunpack.c.l.b16 %v440
        %v536 = vunpack.c.h.b16 %v440
        %v537 = vpack.c.b16 %v475, %v473
        %v538 = vpack.c.b16 %v476, %v474
        %v539 = vpack.c.b16 %v479, %v477
        %v540 = vpack.c.b16 %v480, %v478
        %v541 = vpack.c.b16 %v483, %v481
        %v542 = vpack.c.b16 %v484, %v482
        %v543 = vpack.c.b16 %v487, %v485
        %v544 = vpack.c.b16 %v488, %v486
        %v545 = vpack.c.b16 %v491, %v489
        %v546 = vpack.c.b16 %v492, %v490
        %v547 = vpack.c.b16 %v495, %v493
        %v548 = vpack.c.b16 %v496, %v494
        %v549 = vpack.c.b16 %v499, %v497
        %v550 = vpack.c.b16 %v500, %v498
        %v551 = vpack.c.b16 %v503, %v501
        %v552 = vpack.c.b16 %v504, %v502
        %v553 = vpack.c.b16 %v507, %v505
        %v554 = vpack.c.b16 %v508, %v506
        %v555 = vpack.c.b16 %v511, %v509
        %v556 = vpack.c.b16 %v512, %v510
        %v557 = vpack.c.b16 %v515, %v513
        %v558 = vpack.c.b16 %v516, %v514
        %v559 = vpack.c.b16 %v519, %v517
        %v560 = vpack.c.b16 %v520, %v518
        %v561 = vpack.c.b16 %v523, %v521
        %v562 = vpack.c.b16 %v524, %v522
        %v563 = vpack.c.b16 %v527, %v525
        %v564 = vpack.c.b16 %v528, %v526
        %v565 = vpack.c.b16 %v531, %v529
        %v566 = vpack.c.b16 %v532, %v530
        %v567 = vpack.c.b16 %v535, %v533
        %v568 = vpack.c.b16 %v536, %v534
        %601 = vmatpush.bf16.msra.mxu0 %v551
        %602 = vmatpush.bf16.msra.mxu0 %v549
        %603 = vmatpush.bf16.msra.mxu0 %v547
        %604 = vmatpush.bf16.msra.mxu0 %v545
        %605 = vmatpush.bf16.msra.mxu0 %v543
        %606 = vmatpush.bf16.msra.mxu0 %v541
        %607 = vmatpush.bf16.msra.mxu0 %v539
        %608 = vmatpush.bf16.msra.mxu0 %v537
        %609 = vmatmul.bf16.gmra.mxu0 %v401
        %v610 = vpop.f32.mrf.mxu0
        %v611 = vadd.f32 0.0, %v610
        %v612 = vpop.f32.mrf.mxu0
        %v613 = vadd.f32 0.0, %v612
        %614 = vmatmul.bf16.gmra.mxu0 %v403
        %v615 = vpop.f32.mrf.mxu0
        %v616 = vadd.f32 0.0, %v615
        %v617 = vpop.f32.mrf.mxu0
        %v618 = vadd.f32 0.0, %v617
        %619 = vmatmul.bf16.gmra.mxu0 %v405
        %v620 = vpop.f32.mrf.mxu0
        %v621 = vadd.f32 0.0, %v620
        %v622 = vpop.f32.mrf.mxu0
        %v623 = vadd.f32 0.0, %v622
        %624 = vmatmul.bf16.gmra.mxu0 %v407
        %v625 = vpop.f32.mrf.mxu0
        %v626 = vpop.f32.mrf.mxu0
        %627 = vdwg.mxu0
        %628 = vmatpush.bf16.msra.mxu0 %v567
        %629 = vmatpush.bf16.msra.mxu0 %v565
        %630 = vmatpush.bf16.msra.mxu0 %v563
        %631 = vmatpush.bf16.msra.mxu0 %v561
        %632 = vmatpush.bf16.msra.mxu0 %v559
        %633 = vmatpush.bf16.msra.mxu0 %v557
        %634 = vmatpush.bf16.msra.mxu0 %v555
        %635 = vmatpush.bf16.msra.mxu0 %v553
        %636 = vmatmul.bf16.gmra.mxu0 %v402
        %v637 = vpop.f32.mrf.mxu0
        %v638 = vadd.f32 %v611, %v637
        %v639 = vpop.f32.mrf.mxu0
        %v640 = vadd.f32 %v613, %v639
        %641 = vmatmul.bf16.gmra.mxu0 %v404
        %v642 = vpop.f32.mrf.mxu0
        %v643 = vadd.f32 %v616, %v642
        %v644 = vpop.f32.mrf.mxu0
        %v645 = vadd.f32 %v618, %v644
        %646 = vmatmul.bf16.gmra.mxu0 %v406
        %v647 = vpop.f32.mrf.mxu0
        %v648 = vadd.f32 %v621, %v647
        %v649 = vpop.f32.mrf.mxu0
        %v650 = vadd.f32 %v623, %v649
        %651 = vmatmul.bf16.gmra.mxu0 %v408
        %v652 = vpop.f32.mrf.mxu0
        %v653 = vpop.f32.mrf.mxu0
        %654 = vdwg.mxu0
        %655 = vmatpush.bf16.msra.mxu0 %v552
        %656 = vmatpush.bf16.msra.mxu0 %v550
        %657 = vmatpush.bf16.msra.mxu0 %v548
        %658 = vmatpush.bf16.msra.mxu0 %v546
        %659 = vmatpush.bf16.msra.mxu0 %v544
        %660 = vmatpush.bf16.msra.mxu0 %v542
        %661 = vmatpush.bf16.msra.mxu0 %v540
        %662 = vmatpush.bf16.msra.mxu0 %v538
        %663 = vmatmul.bf16.gmra.mxu0 %v401
        %v664 = vpop.f32.mrf.mxu0
        %v665 = vadd.f32 0.0, %v664
        %v666 = vpop.f32.mrf.mxu0
        %v667 = vadd.f32 0.0, %v666
        %668 = vmatmul.bf16.gmra.mxu0 %v403
        %v669 = vpop.f32.mrf.mxu0
        %v670 = vadd.f32 0.0, %v669
        %v671 = vpop.f32.mrf.mxu0
        %v672 = vadd.f32 0.0, %v671
        %673 = vmatmul.bf16.gmra.mxu0 %v405
        %v674 = vpop.f32.mrf.mxu0
        %v675 = vadd.f32 0.0, %v674
        %v676 = vpop.f32.mrf.mxu0
        %v677 = vadd.f32 0.0, %v676
        %678 = vmatmul.bf16.gmra.mxu0 %v407
        %v679 = vpop.f32.mrf.mxu0
        %v680 = vpop.f32.mrf.mxu0
        %681 = vdwg.mxu0
        %682 = vmatpush.bf16.msra.mxu0 %v568
        %683 = vmatpush.bf16.msra.mxu0 %v566
        %684 = vmatpush.bf16.msra.mxu0 %v564
        %685 = vmatpush.bf16.msra.mxu0 %v562
        %686 = vmatpush.bf16.msra.mxu0 %v560
        %687 = vmatpush.bf16.msra.mxu0 %v558
        %688 = vmatpush.bf16.msra.mxu0 %v556
        %689 = vmatpush.bf16.msra.mxu0 %v554
        %690 = vmatmul.bf16.gmra.mxu0 %v402
        %v691 = vpop.f32.mrf.mxu0
        %v692 = vadd.f32 %v665, %v691
        %v693 = vpop.f32.mrf.mxu0
        %v694 = vadd.f32 %v667, %v693
        %695 = vmatmul.bf16.gmra.mxu0 %v404
        %v696 = vpop.f32.mrf.mxu0
        %v697 = vadd.f32 %v670, %v696
        %v698 = vpop.f32.mrf.mxu0
        %v699 = vadd.f32 %v672, %v698
        %700 = vmatmul.bf16.gmra.mxu0 %v406
        %v701 = vpop.f32.mrf.mxu0
        %v702 = vadd.f32 %v675, %v701
        %v703 = vpop.f32.mrf.mxu0
        %v704 = vadd.f32 %v677, %v703
        %705 = vmatmul.bf16.gmra.mxu0 %v408
        %v706 = vpop.f32.mrf.mxu0
        %v707 = vpop.f32.mrf.mxu0
        %708 = vdwg.mxu0
        %s709 = scalar_lea.vmem [#allocation6], 256
        %v710 = vld [vmem:[%s709] sm:$0xff]
        %v711 = vld [vmem:[%s709 + $0x8] sm:$0xff]
        %v712 = vld [vmem:[%s709 + $0x10] sm:$0xff]
        %v713 = vld [vmem:[%s709 + $0x18] sm:$0xff]
        %v714 = vld [vmem:[%s709 + $0x20] sm:$0xff]
        %v715 = vld [vmem:[%s709 + $0x28] sm:$0xff]
        %v716 = vld [vmem:[%s709 + $0x30] sm:$0xff]
        %v717 = vld [vmem:[%s709 + $0x38] sm:$0xff]
        %v718 = vld [vmem:[%s709 + $0x40] sm:$0xff]
        %v719 = vld [vmem:[%s709 + $0x48] sm:$0xff]
        %v720 = vld [vmem:[%s709 + $0x50] sm:$0xff]
        %v721 = vld [vmem:[%s709 + $0x58] sm:$0xff]
        %v722 = vld [vmem:[%s709 + $0x60] sm:$0xff]
        %v723 = vld [vmem:[%s709 + $0x68] sm:$0xff]
        %v724 = vld [vmem:[%s709 + $0x70] sm:$0xff]
        %v725 = vld [vmem:[%s709 + $0x78] sm:$0xff]
        %v726 = vld [vmem:[%s709 + $0x80] sm:$0xff]
        %v727 = vld [vmem:[%s709 + $0x88] sm:$0xff]
        %v728 = vld [vmem:[%s709 + $0x90] sm:$0xff]
        %v729 = vld [vmem:[%s709 + $0x98] sm:$0xff]
        %v730 = vld [vmem:[%s709 + $0xa0] sm:$0xff]
        %v731 = vld [vmem:[%s709 + $0xa8] sm:$0xff]
        %v732 = vld [vmem:[%s709 + $0xb0] sm:$0xff]
        %v733 = vld [vmem:[%s709 + $0xb8] sm:$0xff]
        %v734 = vld [vmem:[%s709 + $0xc0] sm:$0xff]
        %v735 = vld [vmem:[%s709 + $0xc8] sm:$0xff]
        %v736 = vld [vmem:[%s709 + $0xd0] sm:$0xff]
        %v737 = vld [vmem:[%s709 + $0xd8] sm:$0xff]
        %v738 = vld [vmem:[%s709 + $0xe0] sm:$0xff]
        %v739 = vld [vmem:[%s709 + $0xe8] sm:$0xff]
        %v740 = vld [vmem:[%s709 + $0xf0] sm:$0xff]
        %v741 = vld [vmem:[%s709 + $0xf8] sm:$0xff]
        %v774 = vunpack.c.l.b16 %v710
        %v775 = vunpack.c.h.b16 %v710
        %v776 = vunpack.c.l.b16 %v711
        %v777 = vunpack.c.h.b16 %v711
        %v778 = vunpack.c.l.b16 %v712
        %v779 = vunpack.c.h.b16 %v712
        %v780 = vunpack.c.l.b16 %v713
        %v781 = vunpack.c.h.b16 %v713
        %v782 = vunpack.c.l.b16 %v714
        %v783 = vunpack.c.h.b16 %v714
        %v784 = vunpack.c.l.b16 %v715
        %v785 = vunpack.c.h.b16 %v715
        %v786 = vunpack.c.l.b16 %v716
        %v787 = vunpack.c.h.b16 %v716
        %v788 = vunpack.c.l.b16 %v717
        %v789 = vunpack.c.h.b16 %v717
        %v790 = vunpack.c.l.b16 %v718
        %v791 = vunpack.c.h.b16 %v718
        %v792 = vunpack.c.l.b16 %v719
        %v793 = vunpack.c.h.b16 %v719
        %v794 = vunpack.c.l.b16 %v720
        %v795 = vunpack.c.h.b16 %v720
        %v796 = vunpack.c.l.b16 %v721
        %v797 = vunpack.c.h.b16 %v721
        %v798 = vunpack.c.l.b16 %v722
        %v799 = vunpack.c.h.b16 %v722
        %v800 = vunpack.c.l.b16 %v723
        %v801 = vunpack.c.h.b16 %v723
        %v802 = vunpack.c.l.b16 %v724
        %v803 = vunpack.c.h.b16 %v724
        %v804 = vunpack.c.l.b16 %v725
        %v805 = vunpack.c.h.b16 %v725
        %v806 = vunpack.c.l.b16 %v726
        %v807 = vunpack.c.h.b16 %v726
        %v808 = vunpack.c.l.b16 %v727
        %v809 = vunpack.c.h.b16 %v727
        %v810 = vunpack.c.l.b16 %v728
        %v811 = vunpack.c.h.b16 %v728
        %v812 = vunpack.c.l.b16 %v729
        %v813 = vunpack.c.h.b16 %v729
        %v814 = vunpack.c.l.b16 %v730
        %v815 = vunpack.c.h.b16 %v730
        %v816 = vunpack.c.l.b16 %v731
        %v817 = vunpack.c.h.b16 %v731
        %v818 = vunpack.c.l.b16 %v732
        %v819 = vunpack.c.h.b16 %v732
        %v820 = vunpack.c.l.b16 %v733
        %v821 = vunpack.c.h.b16 %v733
        %v822 = vunpack.c.l.b16 %v734
        %v823 = vunpack.c.h.b16 %v734
        %v824 = vunpack.c.l.b16 %v735
        %v825 = vunpack.c.h.b16 %v735
        %v826 = vunpack.c.l.b16 %v736
        %v827 = vunpack.c.h.b16 %v736
        %v828 = vunpack.c.l.b16 %v737
        %v829 = vunpack.c.h.b16 %v737
        %v830 = vunpack.c.l.b16 %v738
        %v831 = vunpack.c.h.b16 %v738
        %v832 = vunpack.c.l.b16 %v739
        %v833 = vunpack.c.h.b16 %v739
        %v834 = vunpack.c.l.b16 %v740
        %v835 = vunpack.c.h.b16 %v740
        %v836 = vunpack.c.l.b16 %v741
        %v837 = vunpack.c.h.b16 %v741
        %v838 = vpack.c.b16 %v776, %v774
        %v839 = vpack.c.b16 %v777, %v775
        %v840 = vpack.c.b16 %v780, %v778
        %v841 = vpack.c.b16 %v781, %v779
        %v842 = vpack.c.b16 %v784, %v782
        %v843 = vpack.c.b16 %v785, %v783
        %v844 = vpack.c.b16 %v788, %v786
        %v845 = vpack.c.b16 %v789, %v787
        %v846 = vpack.c.b16 %v792, %v790
        %v847 = vpack.c.b16 %v793, %v791
        %v848 = vpack.c.b16 %v796, %v794
        %v849 = vpack.c.b16 %v797, %v795
        %v850 = vpack.c.b16 %v800, %v798
        %v851 = vpack.c.b16 %v801, %v799
        %v852 = vpack.c.b16 %v804, %v802
        %v853 = vpack.c.b16 %v805, %v803
        %v854 = vpack.c.b16 %v808, %v806
        %v855 = vpack.c.b16 %v809, %v807
        %v856 = vpack.c.b16 %v812, %v810
        %v857 = vpack.c.b16 %v813, %v811
        %v858 = vpack.c.b16 %v816, %v814
        %v859 = vpack.c.b16 %v817, %v815
        %v860 = vpack.c.b16 %v820, %v818
        %v861 = vpack.c.b16 %v821, %v819
        %v862 = vpack.c.b16 %v824, %v822
        %v863 = vpack.c.b16 %v825, %v823
        %v864 = vpack.c.b16 %v828, %v826
        %v865 = vpack.c.b16 %v829, %v827
        %v866 = vpack.c.b16 %v832, %v830
        %v867 = vpack.c.b16 %v833, %v831
        %v868 = vpack.c.b16 %v836, %v834
        %v869 = vpack.c.b16 %v837, %v835
        %902 = vmatpush.bf16.msra.mxu0 %v852
        %903 = vmatpush.bf16.msra.mxu0 %v850
        %904 = vmatpush.bf16.msra.mxu0 %v848
        %905 = vmatpush.bf16.msra.mxu0 %v846
        %906 = vmatpush.bf16.msra.mxu0 %v844
        %907 = vmatpush.bf16.msra.mxu0 %v842
        %908 = vmatpush.bf16.msra.mxu0 %v840
        %909 = vmatpush.bf16.msra.mxu0 %v838
        %910 = vmatmul.bf16.gmra.mxu0 %v401
        %v911 = vpop.f32.mrf.mxu0
        %v912 = vpop.f32.mrf.mxu0
        %v913 = vadd.f32 0.0, %v912
        %914 = vmatmul.bf16.gmra.mxu0 %v403
        %v915 = vpop.f32.mrf.mxu0
        %v916 = vadd.f32 0.0, %v915
        %v917 = vpop.f32.mrf.mxu0
        %918 = vmatmul.bf16.gmra.mxu0 %v405
        %v919 = vpop.f32.mrf.mxu0
        %v920 = vadd.f32 0.0, %v919
        %v921 = vpop.f32.mrf.mxu0
        %v922 = vadd.f32 0.0, %v921
        %923 = vmatmul.bf16.gmra.mxu0 %v407
        %v924 = vpop.f32.mrf.mxu0
        %v925 = vpop.f32.mrf.mxu0
        %926 = vdwg.mxu0
        %927 = vmatpush.bf16.msra.mxu0 %v868
        %928 = vmatpush.bf16.msra.mxu0 %v866
        %929 = vmatpush.bf16.msra.mxu0 %v864
        %930 = vmatpush.bf16.msra.mxu0 %v862
        %931 = vmatpush.bf16.msra.mxu0 %v860
        %932 = vmatpush.bf16.msra.mxu0 %v858
        %933 = vmatpush.bf16.msra.mxu0 %v856
        %934 = vmatpush.bf16.msra.mxu0 %v854
        %935 = vmatmul.bf16.gmra.mxu0 %v402
        %v936 = vpop.f32.mrf.mxu0
        %v937 = vpop.f32.mrf.mxu0
        %v938 = vadd.f32 %v913, %v937
        %939 = vmatmul.bf16.gmra.mxu0 %v404
        %v940 = vpop.f32.mrf.mxu0
        %v941 = vadd.f32 %v916, %v940
        %v942 = vpop.f32.mrf.mxu0
        %943 = vmatmul.bf16.gmra.mxu0 %v406
        %v944 = vpop.f32.mrf.mxu0
        %v945 = vadd.f32 %v920, %v944
        %v946 = vpop.f32.mrf.mxu0
        %v947 = vadd.f32 %v922, %v946
        %948 = vmatmul.bf16.gmra.mxu0 %v408
        %v949 = vpop.f32.mrf.mxu0
        %v950 = vpop.f32.mrf.mxu0
        %951 = vdwg.mxu0
        %952 = vmatpush.bf16.msra.mxu0 %v853
        %953 = vmatpush.bf16.msra.mxu0 %v851
        %954 = vmatpush.bf16.msra.mxu0 %v849
        %955 = vmatpush.bf16.msra.mxu0 %v847
        %956 = vmatpush.bf16.msra.mxu0 %v845
        %957 = vmatpush.bf16.msra.mxu0 %v843
        %958 = vmatpush.bf16.msra.mxu0 %v841
        %959 = vmatpush.bf16.msra.mxu0 %v839
        %960 = vmatmul.bf16.gmra.mxu0 %v401
        %v961 = vpop.f32.mrf.mxu0
        %v962 = vpop.f32.mrf.mxu0
        %v963 = vadd.f32 0.0, %v962
        %964 = vmatmul.bf16.gmra.mxu0 %v403
        %v965 = vpop.f32.mrf.mxu0
        %v966 = vadd.f32 0.0, %v965
        %v967 = vpop.f32.mrf.mxu0
        %968 = vmatmul.bf16.gmra.mxu0 %v405
        %v969 = vpop.f32.mrf.mxu0
        %v970 = vadd.f32 0.0, %v969
        %v971 = vpop.f32.mrf.mxu0
        %v972 = vadd.f32 0.0, %v971
        %973 = vmatmul.bf16.gmra.mxu0 %v407
        %v974 = vpop.f32.mrf.mxu0
        %v975 = vpop.f32.mrf.mxu0
        %976 = vdwg.mxu0
        %977 = vmatpush.bf16.msra.mxu0 %v869
        %978 = vmatpush.bf16.msra.mxu0 %v867
        %979 = vmatpush.bf16.msra.mxu0 %v865
        %980 = vmatpush.bf16.msra.mxu0 %v863
        %981 = vmatpush.bf16.msra.mxu0 %v861
        %982 = vmatpush.bf16.msra.mxu0 %v859
        %983 = vmatpush.bf16.msra.mxu0 %v857
        %984 = vmatpush.bf16.msra.mxu0 %v855
        %985 = vmatmul.bf16.gmra.mxu0 %v402
        %v986 = vpop.f32.mrf.mxu0
        %v987 = vpop.f32.mrf.mxu0
        %v988 = vadd.f32 %v963, %v987
        %989 = vmatmul.bf16.gmra.mxu0 %v404
        %v990 = vpop.f32.mrf.mxu0
        %v991 = vadd.f32 %v966, %v990
        %v992 = vpop.f32.mrf.mxu0
        %993 = vmatmul.bf16.gmra.mxu0 %v406
        %v994 = vpop.f32.mrf.mxu0
        %v995 = vadd.f32 %v970, %v994
        %v996 = vpop.f32.mrf.mxu0
        %v997 = vadd.f32 %v972, %v996
        %998 = vmatmul.bf16.gmra.mxu0 %v408
        %v999 = vpop.f32.mrf.mxu0
        %v1000 = vpop.f32.mrf.mxu0
        %1001 = vdwg.mxu0
        %s1002 = scalar_lea.vmem [#allocation6], 512
        %v1003 = vld [vmem:[%s1002] sm:$0xff]
        %v1004 = vld [vmem:[%s1002 + $0x8] sm:$0xff]
        %v1005 = vld [vmem:[%s1002 + $0x10] sm:$0xff]
        %v1006 = vld [vmem:[%s1002 + $0x18] sm:$0xff]
        %v1007 = vld [vmem:[%s1002 + $0x20] sm:$0xff]
        %v1008 = vld [vmem:[%s1002 + $0x28] sm:$0xff]
        %v1009 = vld [vmem:[%s1002 + $0x30] sm:$0xff]
        %v1010 = vld [vmem:[%s1002 + $0x38] sm:$0xff]
        %v1011 = vld [vmem:[%s1002 + $0x40] sm:$0xff]
        %v1012 = vld [vmem:[%s1002 + $0x48] sm:$0xff]
        %v1013 = vld [vmem:[%s1002 + $0x50] sm:$0xff]
        %v1014 = vld [vmem:[%s1002 + $0x58] sm:$0xff]
        %v1015 = vld [vmem:[%s1002 + $0x60] sm:$0xff]
        %v1016 = vld [vmem:[%s1002 + $0x68] sm:$0xff]
        %v1017 = vld [vmem:[%s1002 + $0x70] sm:$0xff]
        %v1018 = vld [vmem:[%s1002 + $0x78] sm:$0xff]
        %v1019 = vld [vmem:[%s1002 + $0x80] sm:$0xff]
        %v1020 = vld [vmem:[%s1002 + $0x88] sm:$0xff]
        %v1021 = vld [vmem:[%s1002 + $0x90] sm:$0xff]
        %v1022 = vld [vmem:[%s1002 + $0x98] sm:$0xff]
        %v1023 = vld [vmem:[%s1002 + $0xa0] sm:$0xff]
        %v1024 = vld [vmem:[%s1002 + $0xa8] sm:$0xff]
        %v1025 = vld [vmem:[%s1002 + $0xb0] sm:$0xff]
        %v1026 = vld [vmem:[%s1002 + $0xb8] sm:$0xff]
        %v1027 = vld [vmem:[%s1002 + $0xc0] sm:$0xff]
        %v1028 = vld [vmem:[%s1002 + $0xc8] sm:$0xff]
        %v1029 = vld [vmem:[%s1002 + $0xd0] sm:$0xff]
        %v1030 = vld [vmem:[%s1002 + $0xd8] sm:$0xff]
        %v1031 = vld [vmem:[%s1002 + $0xe0] sm:$0xff]
        %v1032 = vld [vmem:[%s1002 + $0xe8] sm:$0xff]
        %v1033 = vld [vmem:[%s1002 + $0xf0] sm:$0xff]
        %v1034 = vld [vmem:[%s1002 + $0xf8] sm:$0xff]
        %v1067 = vunpack.c.l.b16 %v1003
        %v1068 = vunpack.c.h.b16 %v1003
        %v1069 = vunpack.c.l.b16 %v1004
        %v1070 = vunpack.c.h.b16 %v1004
        %v1071 = vunpack.c.l.b16 %v1005
        %v1072 = vunpack.c.h.b16 %v1005
        %v1073 = vunpack.c.l.b16 %v1006
        %v1074 = vunpack.c.h.b16 %v1006
        %v1075 = vunpack.c.l.b16 %v1007
        %v1076 = vunpack.c.h.b16 %v1007
        %v1077 = vunpack.c.l.b16 %v1008
        %v1078 = vunpack.c.h.b16 %v1008
        %v1079 = vunpack.c.l.b16 %v1009
        %v1080 = vunpack.c.h.b16 %v1009
        %v1081 = vunpack.c.l.b16 %v1010
        %v1082 = vunpack.c.h.b16 %v1010
        %v1083 = vunpack.c.l.b16 %v1011
        %v1084 = vunpack.c.h.b16 %v1011
        %v1085 = vunpack.c.l.b16 %v1012
        %v1086 = vunpack.c.h.b16 %v1012
        %v1087 = vunpack.c.l.b16 %v1013
        %v1088 = vunpack.c.h.b16 %v1013
        %v1089 = vunpack.c.l.b16 %v1014
        %v1090 = vunpack.c.h.b16 %v1014
        %v1091 = vunpack.c.l.b16 %v1015
        %v1092 = vunpack.c.h.b16 %v1015
        %v1093 = vunpack.c.l.b16 %v1016
        %v1094 = vunpack.c.h.b16 %v1016
        %v1095 = vunpack.c.l.b16 %v1017
        %v1096 = vunpack.c.h.b16 %v1017
        %v1097 = vunpack.c.l.b16 %v1018
        %v1098 = vunpack.c.h.b16 %v1018
        %v1099 = vunpack.c.l.b16 %v1019
        %v1100 = vunpack.c.h.b16 %v1019
        %v1101 = vunpack.c.l.b16 %v1020
        %v1102 = vunpack.c.h.b16 %v1020
        %v1103 = vunpack.c.l.b16 %v1021
        %v1104 = vunpack.c.h.b16 %v1021
        %v1105 = vunpack.c.l.b16 %v1022
        %v1106 = vunpack.c.h.b16 %v1022
        %v1107 = vunpack.c.l.b16 %v1023
        %v1108 = vunpack.c.h.b16 %v1023
        %v1109 = vunpack.c.l.b16 %v1024
        %v1110 = vunpack.c.h.b16 %v1024
        %v1111 = vunpack.c.l.b16 %v1025
        %v1112 = vunpack.c.h.b16 %v1025
        %v1113 = vunpack.c.l.b16 %v1026
        %v1114 = vunpack.c.h.b16 %v1026
        %v1115 = vunpack.c.l.b16 %v1027
        %v1116 = vunpack.c.h.b16 %v1027
        %v1117 = vunpack.c.l.b16 %v1028
        %v1118 = vunpack.c.h.b16 %v1028
        %v1119 = vunpack.c.l.b16 %v1029
        %v1120 = vunpack.c.h.b16 %v1029
        %v1121 = vunpack.c.l.b16 %v1030
        %v1122 = vunpack.c.h.b16 %v1030
        %v1123 = vunpack.c.l.b16 %v1031
        %v1124 = vunpack.c.h.b16 %v1031
        %v1125 = vunpack.c.l.b16 %v1032
        %v1126 = vunpack.c.h.b16 %v1032
        %v1127 = vunpack.c.l.b16 %v1033
        %v1128 = vunpack.c.h.b16 %v1033
        %v1129 = vunpack.c.l.b16 %v1034
        %v1130 = vunpack.c.h.b16 %v1034
        %v1131 = vpack.c.b16 %v1069, %v1067
        %v1132 = vpack.c.b16 %v1070, %v1068
        %v1133 = vpack.c.b16 %v1073, %v1071
        %v1134 = vpack.c.b16 %v1074, %v1072
        %v1135 = vpack.c.b16 %v1077, %v1075
        %v1136 = vpack.c.b16 %v1078, %v1076
        %v1137 = vpack.c.b16 %v1081, %v1079
        %v1138 = vpack.c.b16 %v1082, %v1080
        %v1139 = vpack.c.b16 %v1085, %v1083
        %v1140 = vpack.c.b16 %v1086, %v1084
        %v1141 = vpack.c.b16 %v1089, %v1087
        %v1142 = vpack.c.b16 %v1090, %v1088
        %v1143 = vpack.c.b16 %v1093, %v1091
        %v1144 = vpack.c.b16 %v1094, %v1092
        %v1145 = vpack.c.b16 %v1097, %v1095
        %v1146 = vpack.c.b16 %v1098, %v1096
        %v1147 = vpack.c.b16 %v1101, %v1099
        %v1148 = vpack.c.b16 %v1102, %v1100
        %v1149 = vpack.c.b16 %v1105, %v1103
        %v1150 = vpack.c.b16 %v1106, %v1104
        %v1151 = vpack.c.b16 %v1109, %v1107
        %v1152 = vpack.c.b16 %v1110, %v1108
        %v1153 = vpack.c.b16 %v1113, %v1111
        %v1154 = vpack.c.b16 %v1114, %v1112
        %v1155 = vpack.c.b16 %v1117, %v1115
        %v1156 = vpack.c.b16 %v1118, %v1116
        %v1157 = vpack.c.b16 %v1121, %v1119
        %v1158 = vpack.c.b16 %v1122, %v1120
        %v1159 = vpack.c.b16 %v1125, %v1123
        %v1160 = vpack.c.b16 %v1126, %v1124
        %v1161 = vpack.c.b16 %v1129, %v1127
        %v1162 = vpack.c.b16 %v1130, %v1128
        %1195 = vmatpush.bf16.msra.mxu0 %v1145
        %1196 = vmatpush.bf16.msra.mxu0 %v1143
        %1197 = vmatpush.bf16.msra.mxu0 %v1141
        %1198 = vmatpush.bf16.msra.mxu0 %v1139
        %1199 = vmatpush.bf16.msra.mxu0 %v1137
        %1200 = vmatpush.bf16.msra.mxu0 %v1135
        %1201 = vmatpush.bf16.msra.mxu0 %v1133
        %1202 = vmatpush.bf16.msra.mxu0 %v1131
        %1203 = vmatmul.bf16.gmra.mxu0 %v401
        %v1204 = vpop.f32.mrf.mxu0
        %v1205 = vpop.f32.mrf.mxu0
        %v1206 = vadd.f32 0.0, %v1205
        %1207 = vmatmul.bf16.gmra.mxu0 %v403
        %v1208 = vpop.f32.mrf.mxu0
        %v1209 = vadd.f32 0.0, %v1208
        %v1210 = vpop.f32.mrf.mxu0
        %v1211 = vadd.f32 0.0, %v1210
        %1212 = vmatmul.bf16.gmra.mxu0 %v405
        %v1213 = vpop.f32.mrf.mxu0
        %v1214 = vadd.f32 0.0, %v1213
        %v1215 = vpop.f32.mrf.mxu0
        %v1216 = vadd.f32 0.0, %v1215
        %1217 = vmatmul.bf16.gmra.mxu0 %v407
        %v1218 = vpop.f32.mrf.mxu0
        %v1219 = vadd.f32 0.0, %v1218
        %v1220 = vpop.f32.mrf.mxu0
        %1221 = vdwg.mxu0
        %1222 = vmatpush.bf16.msra.mxu0 %v1161
        %1223 = vmatpush.bf16.msra.mxu0 %v1159
        %1224 = vmatpush.bf16.msra.mxu0 %v1157
        %1225 = vmatpush.bf16.msra.mxu0 %v1155
        %1226 = vmatpush.bf16.msra.mxu0 %v1153
        %1227 = vmatpush.bf16.msra.mxu0 %v1151
        %1228 = vmatpush.bf16.msra.mxu0 %v1149
        %1229 = vmatpush.bf16.msra.mxu0 %v1147
        %1230 = vmatmul.bf16.gmra.mxu0 %v402
        %v1231 = vpop.f32.mrf.mxu0
        %v1232 = vpop.f32.mrf.mxu0
        %v1233 = vadd.f32 %v1206, %v1232
        %1234 = vmatmul.bf16.gmra.mxu0 %v404
        %v1235 = vpop.f32.mrf.mxu0
        %v1236 = vadd.f32 %v1209, %v1235
        %v1237 = vpop.f32.mrf.mxu0
        %v1238 = vadd.f32 %v1211, %v1237
        %1239 = vmatmul.bf16.gmra.mxu0 %v406
        %v1240 = vpop.f32.mrf.mxu0
        %v1241 = vadd.f32 %v1214, %v1240
        %v1242 = vpop.f32.mrf.mxu0
        %v1243 = vadd.f32 %v1216, %v1242
        %1244 = vmatmul.bf16.gmra.mxu0 %v408
        %v1245 = vpop.f32.mrf.mxu0
        %v1246 = vadd.f32 %v1219, %v1245
        %v1247 = vpop.f32.mrf.mxu0
        %1248 = vdwg.mxu0
        %1249 = vmatpush.bf16.msra.mxu0 %v1146
        %1250 = vmatpush.bf16.msra.mxu0 %v1144
        %1251 = vmatpush.bf16.msra.mxu0 %v1142
        %1252 = vmatpush.bf16.msra.mxu0 %v1140
        %1253 = vmatpush.bf16.msra.mxu0 %v1138
        %1254 = vmatpush.bf16.msra.mxu0 %v1136
        %1255 = vmatpush.bf16.msra.mxu0 %v1134
        %1256 = vmatpush.bf16.msra.mxu0 %v1132
        %1257 = vmatmul.bf16.gmra.mxu0 %v401
        %v1258 = vpop.f32.mrf.mxu0
        %v1259 = vpop.f32.mrf.mxu0
        %v1260 = vadd.f32 0.0, %v1259
        %1261 = vmatmul.bf16.gmra.mxu0 %v403
        %v1262 = vpop.f32.mrf.mxu0
        %v1263 = vadd.f32 0.0, %v1262
        %v1264 = vpop.f32.mrf.mxu0
        %v1265 = vadd.f32 0.0, %v1264
        %1266 = vmatmul.bf16.gmra.mxu0 %v405
        %v1267 = vpop.f32.mrf.mxu0
        %v1268 = vadd.f32 0.0, %v1267
        %v1269 = vpop.f32.mrf.mxu0
        %v1270 = vadd.f32 0.0, %v1269
        %1271 = vmatmul.bf16.gmra.mxu0 %v407
        %v1272 = vpop.f32.mrf.mxu0
        %v1273 = vadd.f32 0.0, %v1272
        %v1274 = vpop.f32.mrf.mxu0
        %1275 = vdwg.mxu0
        %1276 = vmatpush.bf16.msra.mxu0 %v1162
        %1277 = vmatpush.bf16.msra.mxu0 %v1160
        %1278 = vmatpush.bf16.msra.mxu0 %v1158
        %1279 = vmatpush.bf16.msra.mxu0 %v1156
        %1280 = vmatpush.bf16.msra.mxu0 %v1154
        %1281 = vmatpush.bf16.msra.mxu0 %v1152
        %1282 = vmatpush.bf16.msra.mxu0 %v1150
        %1283 = vmatpush.bf16.msra.mxu0 %v1148
        %1284 = vmatmul.bf16.gmra.mxu0 %v402
        %v1285 = vpop.f32.mrf.mxu0
        %v1286 = vpop.f32.mrf.mxu0
        %v1287 = vadd.f32 %v1260, %v1286
        %1288 = vmatmul.bf16.gmra.mxu0 %v404
        %v1289 = vpop.f32.mrf.mxu0
        %v1290 = vadd.f32 %v1263, %v1289
        %v1291 = vpop.f32.mrf.mxu0
        %v1292 = vadd.f32 %v1265, %v1291
        %1293 = vmatmul.bf16.gmra.mxu0 %v406
        %v1294 = vpop.f32.mrf.mxu0
        %v1295 = vadd.f32 %v1268, %v1294
        %v1296 = vpop.f32.mrf.mxu0
        %v1297 = vadd.f32 %v1270, %v1296
        %1298 = vmatmul.bf16.gmra.mxu0 %v408
        %v1299 = vpop.f32.mrf.mxu0
        %v1300 = vadd.f32 %v1273, %v1299
        %v1301 = vpop.f32.mrf.mxu0
        %1302 = vdwg.mxu0
        %vm1307 = vcmask 1046528
        %v1308 = vrot.slane %v938, 1
        %v1309 = vrot.slane %v988, 1
        %v1310 = vrot.slane %v941, 1
        %v1311 = vsel %vm1307, %v1308, %v1310
        %v1312 = vrot.slane %v991, 1
        %v1313 = vsel %vm1307, %v1309, %v1312
        %v1320 = vadd.f32 %v638, %v1308
        %v1321 = vadd.f32 %v692, %v1309
        %v1322 = vadd.f32 %v640, %v1311
        %v1323 = vadd.f32 %v694, %v1313
        %v1324 = vadd.f32 %v643, %v1310
        %v1325 = vadd.f32 %v697, %v1312
        %vm1332 = vcmask 1045504
        %v1333 = vrot.slane %v1233, 2
        %v1334 = vrot.slane %v1287, 2
        %v1335 = vrot.slane %v1236, 2
        %v1336 = vsel %vm1332, %v1333, %v1335
        %v1337 = vrot.slane %v1290, 2
        %v1338 = vsel %vm1332, %v1334, %v1337
        %v1339 = vrot.slane %v1238, 2
        %v1340 = vsel %vm1332, %v1335, %v1339
        %v1341 = vrot.slane %v1292, 2
        %v1342 = vsel %vm1332, %v1337, %v1341
        %v1349 = vadd.f32 %v1320, %v1333
        %v1350 = vadd.f32 %v1321, %v1334
        %v1351 = vadd.f32 %v1322, %v1336
        %v1352 = vadd.f32 %v1323, %v1338
        %v1353 = vadd.f32 %v1324, %v1340
        %v1354 = vadd.f32 %v1325, %v1342
        %v1355 = vld [vmem:[%s3] sm:$0x3]
        %v1357 = vperm.slane %v1355, 0
        %v1358 = vperm.slane %v1355, 1
        %v1361 = vmul.f32 %v1349, %v1357
        %v1362 = vmul.f32 %v1350, %v1358
        %v1363 = vmul.f32 %v1351, %v1357
        %v1364 = vmul.f32 %v1352, %v1358
        %v1365 = vmul.f32 %v1353, %v1357
        %v1366 = vmul.f32 %v1354, %v1358
        %v1367 = vld [vmem:[#allocation9] sm:$0x3]
        %v1369 = vperm.slane %v1367, 0
        %v1370 = vperm.slane %v1367, 1
        %v1373 = vadd.f32 %v1361, %v1369
        %v1374 = vadd.f32 %v1362, %v1370
        %v1375 = vadd.f32 %v1363, %v1369
        %v1376 = vadd.f32 %v1364, %v1370
        %v1377 = vadd.f32 %v1365, %v1369
        %v1378 = vadd.f32 %v1366, %v1370
        %v1383 = vrot.slane %v945, 1
        %v1384 = vrot.slane %v995, 1
        %v1385 = vrot.slane %v947, 1
        %v1386 = vsel %vm1307, %v1383, %v1385
        %v1387 = vrot.slane %v997, 1
        %v1388 = vsel %vm1307, %v1384, %v1387
        %v1395 = vadd.f32 %v645, %v1383
        %v1396 = vadd.f32 %v699, %v1384
        %v1397 = vadd.f32 %v648, %v1386
        %v1398 = vadd.f32 %v702, %v1388
        %v1399 = vadd.f32 %v650, %v1385
        %v1400 = vadd.f32 %v704, %v1387
        %v1407 = vrot.slane %v1241, 2
        %v1408 = vrot.slane %v1295, 2
        %v1409 = vrot.slane %v1243, 2
        %v1410 = vsel %vm1332, %v1407, %v1409
        %v1411 = vrot.slane %v1297, 2
        %v1412 = vsel %vm1332, %v1408, %v1411
        %v1413 = vrot.slane %v1246, 2
        %v1414 = vsel %vm1332, %v1409, %v1413
        %v1415 = vrot.slane %v1300, 2
        %v1416 = vsel %vm1332, %v1411, %v1415
        %v1423 = vadd.f32 %v1395, %v1407
        %v1424 = vadd.f32 %v1396, %v1408
        %v1425 = vadd.f32 %v1397, %v1410
        %v1426 = vadd.f32 %v1398, %v1412
        %v1427 = vadd.f32 %v1399, %v1414
        %v1428 = vadd.f32 %v1400, %v1416
        %v1429 = vmul.f32 %v1423, %v1357
        %v1430 = vmul.f32 %v1424, %v1358
        %v1431 = vmul.f32 %v1425, %v1357
        %v1432 = vmul.f32 %v1426, %v1358
        %v1433 = vmul.f32 %v1427, %v1357
        %v1434 = vmul.f32 %v1428, %v1358
        %v1435 = vadd.f32 %v1429, %v1369
        %v1436 = vadd.f32 %v1430, %v1370
        %v1437 = vadd.f32 %v1431, %v1369
        %v1438 = vadd.f32 %v1432, %v1370
        %v1439 = vadd.f32 %v1433, %v1369
        %v1440 = vadd.f32 %v1434, %v1370
        %v1441 = vmax.f32 %v1373, 0.0
        %v1442 = vmax.f32 %v1374, 0.0
        %v1443 = vmax.f32 %v1375, 0.0
        %v1444 = vmax.f32 %v1376, 0.0
        %v1445 = vmax.f32 %v1377, 0.0
        %v1446 = vmax.f32 %v1378, 0.0
        %v1447 = vmax.f32 %v1435, 0.0
        %v1448 = vmax.f32 %v1436, 0.0
        %v1449 = vmax.f32 %v1437, 0.0
        %v1450 = vmax.f32 %v1438, 0.0
        %v1451 = vmax.f32 %v1439, 0.0
        %v1452 = vmax.f32 %v1440, 0.0
        %vm1459 = vcmask 1040384
        %v1460 = vrot.slane %v1441, 7
        %v1461 = vrot.slane %v1443, 7
        %v1462 = vsel %vm1459, %v1460, %v1461
        %v1463 = vrot.slane %v1442, 7
        %v1464 = vrot.slane %v1444, 7
        %v1465 = vsel %vm1459, %v1463, %v1464
        %v1466 = vrot.slane %v1445, 7
        %v1467 = vsel %vm1459, %v1461, %v1466
        %v1468 = vrot.slane %v1446, 7
        %v1469 = vsel %vm1459, %v1464, %v1468
        %1474 = vst [vmem:[#allocation2 + $0x10] sm:$0xff] %v1462
        %1475 = vst [vmem:[#allocation2 + $0x18] sm:$0xff] %v1465
        %1476 = vst [vmem:[#allocation2 + $0x20] sm:$0xff] %v1467
        %1477 = vst [vmem:[#allocation2 + $0x28] sm:$0xff] %v1469
        %v1484 = vrot.slane %v1447, 7
        %v1485 = vrot.slane %v1449, 7
        %v1486 = vsel %vm1459, %v1484, %v1485
        %v1487 = vrot.slane %v1448, 7
        %v1488 = vrot.slane %v1450, 7
        %v1489 = vsel %vm1459, %v1487, %v1488
        %v1490 = vrot.slane %v1451, 7
        %v1491 = vsel %vm1459, %v1485, %v1490
        %v1492 = vrot.slane %v1452, 7
        %v1493 = vsel %vm1459, %v1488, %v1492
        %1498 = vst [vmem:[#allocation2 + $0x40] sm:$0xff] %v1486
        %1499 = vst [vmem:[#allocation2 + $0x48] sm:$0xff] %v1489
        %1500 = vst [vmem:[#allocation2 + $0x50] sm:$0xff] %v1491
        %1501 = vst [vmem:[#allocation2 + $0x58] sm:$0xff] %v1493
        %v1502 = vld [vmem:[#allocation2] sm:$0xff]
        %v1503 = vld [vmem:[#allocation2 + $0x8] sm:$0xff]
        %v1504 = vld [vmem:[#allocation2 + $0x10] sm:$0xff]
        %v1505 = vld [vmem:[#allocation2 + $0x18] sm:$0xff]
        %v1506 = vld [vmem:[#allocation2 + $0x20] sm:$0xff]
        %v1507 = vld [vmem:[#allocation2 + $0x28] sm:$0xff]
        %v1508 = vld [vmem:[#allocation2 + $0x30] sm:$0xff]
        %v1509 = vld [vmem:[#allocation2 + $0x38] sm:$0xff]
        %v1510 = vld [vmem:[#allocation2 + $0x40] sm:$0xff]
        %v1511 = vld [vmem:[#allocation2 + $0x48] sm:$0xff]
        %v1512 = vld [vmem:[#allocation2 + $0x50] sm:$0xff]
        %v1513 = vld [vmem:[#allocation2 + $0x58] sm:$0xff]
        %v1514 = vld [vmem:[#allocation2 + $0x60] sm:$0xff]
        %v1515 = vld [vmem:[#allocation2 + $0x68] sm:$0xff]
        %v1516 = vpack.c.bf16 %v1504, %v1502
        %v1517 = vpack.c.bf16 %v1505, %v1503
        %v1518 = vpack.c.bf16 %v1508, %v1506
        %v1519 = vpack.c.bf16 %v1509, %v1507
        %v1520 = vpack.c.bf16 %v1512, %v1510
        %v1521 = vpack.c.bf16 %v1513, %v1511
        %v1522 = vpack.c.bf16 %v1514, %v1514
        %v1523 = vpack.c.bf16 %v1515, %v1515
        %v1524 = vld [vmem:[#allocation8] sm:$0xff]
        %v1525 = vld [vmem:[#allocation8 + $0x8] sm:$0xff]
        %v1526 = vld [vmem:[#allocation8 + $0x10] sm:$0xff]
        %v1527 = vld [vmem:[#allocation8 + $0x18] sm:$0xff]
        %v1528 = vld [vmem:[#allocation8 + $0x20] sm:$0xff]
        %v1529 = vld [vmem:[#allocation8 + $0x28] sm:$0xff]
        %v1530 = vld [vmem:[#allocation8 + $0x30] sm:$0xff]
        %v1531 = vld [vmem:[#allocation8 + $0x38] sm:$0xff]
        %v1532 = vld [vmem:[#allocation8 + $0x40] sm:$0xff]
        %v1533 = vld [vmem:[#allocation8 + $0x48] sm:$0xff]
        %v1534 = vld [vmem:[#allocation8 + $0x50] sm:$0xff]
        %v1535 = vld [vmem:[#allocation8 + $0x58] sm:$0xff]
        %v1536 = vld [vmem:[#allocation8 + $0x60] sm:$0xff]
        %v1537 = vld [vmem:[#allocation8 + $0x68] sm:$0xff]
        %v1538 = vld [vmem:[#allocation8 + $0x70] sm:$0xff]
        %v1539 = vld [vmem:[#allocation8 + $0x78] sm:$0xff]
        %v1540 = vld [vmem:[#allocation8 + $0x80] sm:$0xff]
        %v1541 = vld [vmem:[#allocation8 + $0x88] sm:$0xff]
        %v1542 = vld [vmem:[#allocation8 + $0x90] sm:$0xff]
        %v1543 = vld [vmem:[#allocation8 + $0x98] sm:$0xff]
        %v1544 = vld [vmem:[#allocation8 + $0xa0] sm:$0xff]
        %v1545 = vld [vmem:[#allocation8 + $0xa8] sm:$0xff]
        %v1546 = vld [vmem:[#allocation8 + $0xb0] sm:$0xff]
        %v1547 = vld [vmem:[#allocation8 + $0xb8] sm:$0xff]
        %v1548 = vld [vmem:[#allocation8 + $0xc0] sm:$0xff]
        %v1549 = vld [vmem:[#allocation8 + $0xc8] sm:$0xff]
        %v1550 = vld [vmem:[#allocation8 + $0xd0] sm:$0xff]
        %v1551 = vld [vmem:[#allocation8 + $0xd8] sm:$0xff]
        %v1552 = vld [vmem:[#allocation8 + $0xe0] sm:$0xff]
        %v1553 = vld [vmem:[#allocation8 + $0xe8] sm:$0xff]
        %v1554 = vld [vmem:[#allocation8 + $0xf0] sm:$0xff]
        %v1555 = vld [vmem:[#allocation8 + $0xf8] sm:$0xff]
        %v1588 = vunpack.c.l.b16 %v1524
        %v1589 = vunpack.c.h.b16 %v1524
        %v1590 = vunpack.c.l.b16 %v1525
        %v1591 = vunpack.c.h.b16 %v1525
        %v1592 = vunpack.c.l.b16 %v1526
        %v1593 = vunpack.c.h.b16 %v1526
        %v1594 = vunpack.c.l.b16 %v1527
        %v1595 = vunpack.c.h.b16 %v1527
        %v1596 = vunpack.c.l.b16 %v1528
        %v1597 = vunpack.c.h.b16 %v1528
        %v1598 = vunpack.c.l.b16 %v1529
        %v1599 = vunpack.c.h.b16 %v1529
        %v1600 = vunpack.c.l.b16 %v1530
        %v1601 = vunpack.c.h.b16 %v1530
        %v1602 = vunpack.c.l.b16 %v1531
        %v1603 = vunpack.c.h.b16 %v1531
        %v1604 = vunpack.c.l.b16 %v1532
        %v1605 = vunpack.c.h.b16 %v1532
        %v1606 = vunpack.c.l.b16 %v1533
        %v1607 = vunpack.c.h.b16 %v1533
        %v1608 = vunpack.c.l.b16 %v1534
        %v1609 = vunpack.c.h.b16 %v1534
        %v1610 = vunpack.c.l.b16 %v1535
        %v1611 = vunpack.c.h.b16 %v1535
        %v1612 = vunpack.c.l.b16 %v1536
        %v1613 = vunpack.c.h.b16 %v1536
        %v1614 = vunpack.c.l.b16 %v1537
        %v1615 = vunpack.c.h.b16 %v1537
        %v1616 = vunpack.c.l.b16 %v1538
        %v1617 = vunpack.c.h.b16 %v1538
        %v1618 = vunpack.c.l.b16 %v1539
        %v1619 = vunpack.c.h.b16 %v1539
        %v1620 = vunpack.c.l.b16 %v1540
        %v1621 = vunpack.c.h.b16 %v1540
        %v1622 = vunpack.c.l.b16 %v1541
        %v1623 = vunpack.c.h.b16 %v1541
        %v1624 = vunpack.c.l.b16 %v1542
        %v1625 = vunpack.c.h.b16 %v1542
        %v1626 = vunpack.c.l.b16 %v1543
        %v1627 = vunpack.c.h.b16 %v1543
        %v1628 = vunpack.c.l.b16 %v1544
        %v1629 = vunpack.c.h.b16 %v1544
        %v1630 = vunpack.c.l.b16 %v1545
        %v1631 = vunpack.c.h.b16 %v1545
        %v1632 = vunpack.c.l.b16 %v1546
        %v1633 = vunpack.c.h.b16 %v1546
        %v1634 = vunpack.c.l.b16 %v1547
        %v1635 = vunpack.c.h.b16 %v1547
        %v1636 = vunpack.c.l.b16 %v1548
        %v1637 = vunpack.c.h.b16 %v1548
        %v1638 = vunpack.c.l.b16 %v1549
        %v1639 = vunpack.c.h.b16 %v1549
        %v1640 = vunpack.c.l.b16 %v1550
        %v1641 = vunpack.c.h.b16 %v1550
        %v1642 = vunpack.c.l.b16 %v1551
        %v1643 = vunpack.c.h.b16 %v1551
        %v1644 = vunpack.c.l.b16 %v1552
        %v1645 = vunpack.c.h.b16 %v1552
        %v1646 = vunpack.c.l.b16 %v1553
        %v1647 = vunpack.c.h.b16 %v1553
        %v1648 = vunpack.c.l.b16 %v1554
        %v1649 = vunpack.c.h.b16 %v1554
        %v1650 = vunpack.c.l.b16 %v1555
        %v1651 = vunpack.c.h.b16 %v1555
        %v1652 = vpack.c.b16 %v1590, %v1588
        %v1653 = vpack.c.b16 %v1591, %v1589
        %v1654 = vpack.c.b16 %v1594, %v1592
        %v1655 = vpack.c.b16 %v1595, %v1593
        %v1656 = vpack.c.b16 %v1598, %v1596
        %v1657 = vpack.c.b16 %v1599, %v1597
        %v1658 = vpack.c.b16 %v1602, %v1600
        %v1659 = vpack.c.b16 %v1603, %v1601
        %v1660 = vpack.c.b16 %v1606, %v1604
        %v1661 = vpack.c.b16 %v1607, %v1605
        %v1662 = vpack.c.b16 %v1610, %v1608
        %v1663 = vpack.c.b16 %v1611, %v1609
        %v1664 = vpack.c.b16 %v1614, %v1612
        %v1665 = vpack.c.b16 %v1615, %v1613
        %v1666 = vpack.c.b16 %v1618, %v1616
        %v1667 = vpack.c.b16 %v1619, %v1617
        %v1668 = vpack.c.b16 %v1622, %v1620
        %v1669 = vpack.c.b16 %v1623, %v1621
        %v1670 = vpack.c.b16 %v1626, %v1624
        %v1671 = vpack.c.b16 %v1627, %v1625
        %v1672 = vpack.c.b16 %v1630, %v1628
        %v1673 = vpack.c.b16 %v1631, %v1629
        %v1674 = vpack.c.b16 %v1634, %v1632
        %v1675 = vpack.c.b16 %v1635, %v1633
        %v1676 = vpack.c.b16 %v1638, %v1636
        %v1677 = vpack.c.b16 %v1639, %v1637
        %v1678 = vpack.c.b16 %v1642, %v1640
        %v1679 = vpack.c.b16 %v1643, %v1641
        %v1680 = vpack.c.b16 %v1646, %v1644
        %v1681 = vpack.c.b16 %v1647, %v1645
        %v1682 = vpack.c.b16 %v1650, %v1648
        %v1683 = vpack.c.b16 %v1651, %v1649
        %1716 = vmatpush.bf16.msra.mxu0 %v1666
        %1717 = vmatpush.bf16.msra.mxu0 %v1664
        %1718 = vmatpush.bf16.msra.mxu0 %v1662
        %1719 = vmatpush.bf16.msra.mxu0 %v1660
        %1720 = vmatpush.bf16.msra.mxu0 %v1658
        %1721 = vmatpush.bf16.msra.mxu0 %v1656
        %1722 = vmatpush.bf16.msra.mxu0 %v1654
        %1723 = vmatpush.bf16.msra.mxu0 %v1652
        %1724 = vmatmul.bf16.gmra.mxu0 %v1516
        %v1725 = vpop.f32.mrf.mxu0
        %v1726 = vadd.f32 0.0, %v1725
        %v1727 = vpop.f32.mrf.mxu0
        %v1728 = vadd.f32 0.0, %v1727
        %1729 = vmatmul.bf16.gmra.mxu0 %v1518
        %v1730 = vpop.f32.mrf.mxu0
        %v1731 = vadd.f32 0.0, %v1730
        %v1732 = vpop.f32.mrf.mxu0
        %v1733 = vadd.f32 0.0, %v1732
        %1734 = vmatmul.bf16.gmra.mxu0 %v1520
        %v1735 = vpop.f32.mrf.mxu0
        %v1736 = vadd.f32 0.0, %v1735
        %v1737 = vpop.f32.mrf.mxu0
        %v1738 = vadd.f32 0.0, %v1737
        %1739 = vmatmul.bf16.gmra.mxu0 %v1522
        %v1740 = vpop.f32.mrf.mxu0
        %v1741 = vpop.f32.mrf.mxu0
        %1742 = vdwg.mxu0
        %1743 = vmatpush.bf16.msra.mxu0 %v1682
        %1744 = vmatpush.bf16.msra.mxu0 %v1680
        %1745 = vmatpush.bf16.msra.mxu0 %v1678
        %1746 = vmatpush.bf16.msra.mxu0 %v1676
        %1747 = vmatpush.bf16.msra.mxu0 %v1674
        %1748 = vmatpush.bf16.msra.mxu0 %v1672
        %1749 = vmatpush.bf16.msra.mxu0 %v1670
        %1750 = vmatpush.bf16.msra.mxu0 %v1668
        %1751 = vmatmul.bf16.gmra.mxu0 %v1517
        %v1752 = vpop.f32.mrf.mxu0
        %v1753 = vadd.f32 %v1726, %v1752
        %v1754 = vpop.f32.mrf.mxu0
        %v1755 = vadd.f32 %v1728, %v1754
        %1756 = vmatmul.bf16.gmra.mxu0 %v1519
        %v1757 = vpop.f32.mrf.mxu0
        %v1758 = vadd.f32 %v1731, %v1757
        %v1759 = vpop.f32.mrf.mxu0
        %v1760 = vadd.f32 %v1733, %v1759
        %1761 = vmatmul.bf16.gmra.mxu0 %v1521
        %v1762 = vpop.f32.mrf.mxu0
        %v1763 = vadd.f32 %v1736, %v1762
        %v1764 = vpop.f32.mrf.mxu0
        %v1765 = vadd.f32 %v1738, %v1764
        %1766 = vmatmul.bf16.gmra.mxu0 %v1523
        %v1767 = vpop.f32.mrf.mxu0
        %v1768 = vpop.f32.mrf.mxu0
        %1769 = vdwg.mxu0
        %1770 = vmatpush.bf16.msra.mxu0 %v1667
        %1771 = vmatpush.bf16.msra.mxu0 %v1665
        %1772 = vmatpush.bf16.msra.mxu0 %v1663
        %1773 = vmatpush.bf16.msra.mxu0 %v1661
        %1774 = vmatpush.bf16.msra.mxu0 %v1659
        %1775 = vmatpush.bf16.msra.mxu0 %v1657
        %1776 = vmatpush.bf16.msra.mxu0 %v1655
        %1777 = vmatpush.bf16.msra.mxu0 %v1653
        %1778 = vmatmul.bf16.gmra.mxu0 %v1516
        %v1779 = vpop.f32.mrf.mxu0
        %v1780 = vadd.f32 0.0, %v1779
        %v1781 = vpop.f32.mrf.mxu0
        %v1782 = vadd.f32 0.0, %v1781
        %1783 = vmatmul.bf16.gmra.mxu0 %v1518
        %v1784 = vpop.f32.mrf.mxu0
        %v1785 = vadd.f32 0.0, %v1784
        %v1786 = vpop.f32.mrf.mxu0
        %v1787 = vadd.f32 0.0, %v1786
        %1788 = vmatmul.bf16.gmra.mxu0 %v1520
        %v1789 = vpop.f32.mrf.mxu0
        %v1790 = vadd.f32 0.0, %v1789
        %v1791 = vpop.f32.mrf.mxu0
        %v1792 = vadd.f32 0.0, %v1791
        %1793 = vmatmul.bf16.gmra.mxu0 %v1522
        %v1794 = vpop.f32.mrf.mxu0
        %v1795 = vpop.f32.mrf.mxu0
        %1796 = vdwg.mxu0
        %1797 = vmatpush.bf16.msra.mxu0 %v1683
        %1798 = vmatpush.bf16.msra.mxu0 %v1681
        %1799 = vmatpush.bf16.msra.mxu0 %v1679
        %1800 = vmatpush.bf16.msra.mxu0 %v1677
        %1801 = vmatpush.bf16.msra.mxu0 %v1675
        %1802 = vmatpush.bf16.msra.mxu0 %v1673
        %1803 = vmatpush.bf16.msra.mxu0 %v1671
        %1804 = vmatpush.bf16.msra.mxu0 %v1669
        %1805 = vmatmul.bf16.gmra.mxu0 %v1517
        %v1806 = vpop.f32.mrf.mxu0
        %v1807 = vadd.f32 %v1780, %v1806
        %v1808 = vpop.f32.mrf.mxu0
        %v1809 = vadd.f32 %v1782, %v1808
        %1810 = vmatmul.bf16.gmra.mxu0 %v1519
        %v1811 = vpop.f32.mrf.mxu0
        %v1812 = vadd.f32 %v1785, %v1811
        %v1813 = vpop.f32.mrf.mxu0
        %v1814 = vadd.f32 %v1787, %v1813
        %1815 = vmatmul.bf16.gmra.mxu0 %v1521
        %v1816 = vpop.f32.mrf.mxu0
        %v1817 = vadd.f32 %v1790, %v1816
        %v1818 = vpop.f32.mrf.mxu0
        %v1819 = vadd.f32 %v1792, %v1818
        %1820 = vmatmul.bf16.gmra.mxu0 %v1523
        %v1821 = vpop.f32.mrf.mxu0
        %v1822 = vpop.f32.mrf.mxu0
        %1823 = vdwg.mxu0
        %s1824 = scalar_lea.vmem [#allocation8], 256
        %v1825 = vld [vmem:[%s1824] sm:$0xff]
        %v1826 = vld [vmem:[%s1824 + $0x8] sm:$0xff]
        %v1827 = vld [vmem:[%s1824 + $0x10] sm:$0xff]
        %v1828 = vld [vmem:[%s1824 + $0x18] sm:$0xff]
        %v1829 = vld [vmem:[%s1824 + $0x20] sm:$0xff]
        %v1830 = vld [vmem:[%s1824 + $0x28] sm:$0xff]
        %v1831 = vld [vmem:[%s1824 + $0x30] sm:$0xff]
        %v1832 = vld [vmem:[%s1824 + $0x38] sm:$0xff]
        %v1833 = vld [vmem:[%s1824 + $0x40] sm:$0xff]
        %v1834 = vld [vmem:[%s1824 + $0x48] sm:$0xff]
        %v1835 = vld [vmem:[%s1824 + $0x50] sm:$0xff]
        %v1836 = vld [vmem:[%s1824 + $0x58] sm:$0xff]
        %v1837 = vld [vmem:[%s1824 + $0x60] sm:$0xff]
        %v1838 = vld [vmem:[%s1824 + $0x68] sm:$0xff]
        %v1839 = vld [vmem:[%s1824 + $0x70] sm:$0xff]
        %v1840 = vld [vmem:[%s1824 + $0x78] sm:$0xff]
        %v1841 = vld [vmem:[%s1824 + $0x80] sm:$0xff]
        %v1842 = vld [vmem:[%s1824 + $0x88] sm:$0xff]
        %v1843 = vld [vmem:[%s1824 + $0x90] sm:$0xff]
        %v1844 = vld [vmem:[%s1824 + $0x98] sm:$0xff]
        %v1845 = vld [vmem:[%s1824 + $0xa0] sm:$0xff]
        %v1846 = vld [vmem:[%s1824 + $0xa8] sm:$0xff]
        %v1847 = vld [vmem:[%s1824 + $0xb0] sm:$0xff]
        %v1848 = vld [vmem:[%s1824 + $0xb8] sm:$0xff]
        %v1849 = vld [vmem:[%s1824 + $0xc0] sm:$0xff]
        %v1850 = vld [vmem:[%s1824 + $0xc8] sm:$0xff]
        %v1851 = vld [vmem:[%s1824 + $0xd0] sm:$0xff]
        %v1852 = vld [vmem:[%s1824 + $0xd8] sm:$0xff]
        %v1853 = vld [vmem:[%s1824 + $0xe0] sm:$0xff]
        %v1854 = vld [vmem:[%s1824 + $0xe8] sm:$0xff]
        %v1855 = vld [vmem:[%s1824 + $0xf0] sm:$0xff]
        %v1856 = vld [vmem:[%s1824 + $0xf8] sm:$0xff]
        %v1889 = vunpack.c.l.b16 %v1825
        %v1890 = vunpack.c.h.b16 %v1825
        %v1891 = vunpack.c.l.b16 %v1826
        %v1892 = vunpack.c.h.b16 %v1826
        %v1893 = vunpack.c.l.b16 %v1827
        %v1894 = vunpack.c.h.b16 %v1827
        %v1895 = vunpack.c.l.b16 %v1828
        %v1896 = vunpack.c.h.b16 %v1828
        %v1897 = vunpack.c.l.b16 %v1829
        %v1898 = vunpack.c.h.b16 %v1829
        %v1899 = vunpack.c.l.b16 %v1830
        %v1900 = vunpack.c.h.b16 %v1830
        %v1901 = vunpack.c.l.b16 %v1831
        %v1902 = vunpack.c.h.b16 %v1831
        %v1903 = vunpack.c.l.b16 %v1832
        %v1904 = vunpack.c.h.b16 %v1832
        %v1905 = vunpack.c.l.b16 %v1833
        %v1906 = vunpack.c.h.b16 %v1833
        %v1907 = vunpack.c.l.b16 %v1834
        %v1908 = vunpack.c.h.b16 %v1834
        %v1909 = vunpack.c.l.b16 %v1835
        %v1910 = vunpack.c.h.b16 %v1835
        %v1911 = vunpack.c.l.b16 %v1836
        %v1912 = vunpack.c.h.b16 %v1836
        %v1913 = vunpack.c.l.b16 %v1837
        %v1914 = vunpack.c.h.b16 %v1837
        %v1915 = vunpack.c.l.b16 %v1838
        %v1916 = vunpack.c.h.b16 %v1838
        %v1917 = vunpack.c.l.b16 %v1839
        %v1918 = vunpack.c.h.b16 %v1839
        %v1919 = vunpack.c.l.b16 %v1840
        %v1920 = vunpack.c.h.b16 %v1840
        %v1921 = vunpack.c.l.b16 %v1841
        %v1922 = vunpack.c.h.b16 %v1841
        %v1923 = vunpack.c.l.b16 %v1842
        %v1924 = vunpack.c.h.b16 %v1842
        %v1925 = vunpack.c.l.b16 %v1843
        %v1926 = vunpack.c.h.b16 %v1843
        %v1927 = vunpack.c.l.b16 %v1844
        %v1928 = vunpack.c.h.b16 %v1844
        %v1929 = vunpack.c.l.b16 %v1845
        %v1930 = vunpack.c.h.b16 %v1845
        %v1931 = vunpack.c.l.b16 %v1846
        %v1932 = vunpack.c.h.b16 %v1846
        %v1933 = vunpack.c.l.b16 %v1847
        %v1934 = vunpack.c.h.b16 %v1847
        %v1935 = vunpack.c.l.b16 %v1848
        %v1936 = vunpack.c.h.b16 %v1848
        %v1937 = vunpack.c.l.b16 %v1849
        %v1938 = vunpack.c.h.b16 %v1849
        %v1939 = vunpack.c.l.b16 %v1850
        %v1940 = vunpack.c.h.b16 %v1850
        %v1941 = vunpack.c.l.b16 %v1851
        %v1942 = vunpack.c.h.b16 %v1851
        %v1943 = vunpack.c.l.b16 %v1852
        %v1944 = vunpack.c.h.b16 %v1852
        %v1945 = vunpack.c.l.b16 %v1853
        %v1946 = vunpack.c.h.b16 %v1853
        %v1947 = vunpack.c.l.b16 %v1854
        %v1948 = vunpack.c.h.b16 %v1854
        %v1949 = vunpack.c.l.b16 %v1855
        %v1950 = vunpack.c.h.b16 %v1855
        %v1951 = vunpack.c.l.b16 %v1856
        %v1952 = vunpack.c.h.b16 %v1856
        %v1953 = vpack.c.b16 %v1891, %v1889
        %v1954 = vpack.c.b16 %v1892, %v1890
        %v1955 = vpack.c.b16 %v1895, %v1893
        %v1956 = vpack.c.b16 %v1896, %v1894
        %v1957 = vpack.c.b16 %v1899, %v1897
        %v1958 = vpack.c.b16 %v1900, %v1898
        %v1959 = vpack.c.b16 %v1903, %v1901
        %v1960 = vpack.c.b16 %v1904, %v1902
        %v1961 = vpack.c.b16 %v1907, %v1905
        %v1962 = vpack.c.b16 %v1908, %v1906
        %v1963 = vpack.c.b16 %v1911, %v1909
        %v1964 = vpack.c.b16 %v1912, %v1910
        %v1965 = vpack.c.b16 %v1915, %v1913
        %v1966 = vpack.c.b16 %v1916, %v1914
        %v1967 = vpack.c.b16 %v1919, %v1917
        %v1968 = vpack.c.b16 %v1920, %v1918
        %v1969 = vpack.c.b16 %v1923, %v1921
        %v1970 = vpack.c.b16 %v1924, %v1922
        %v1971 = vpack.c.b16 %v1927, %v1925
        %v1972 = vpack.c.b16 %v1928, %v1926
        %v1973 = vpack.c.b16 %v1931, %v1929
        %v1974 = vpack.c.b16 %v1932, %v1930
        %v1975 = vpack.c.b16 %v1935, %v1933
        %v1976 = vpack.c.b16 %v1936, %v1934
        %v1977 = vpack.c.b16 %v1939, %v1937
        %v1978 = vpack.c.b16 %v1940, %v1938
        %v1979 = vpack.c.b16 %v1943, %v1941
        %v1980 = vpack.c.b16 %v1944, %v1942
        %v1981 = vpack.c.b16 %v1947, %v1945
        %v1982 = vpack.c.b16 %v1948, %v1946
        %v1983 = vpack.c.b16 %v1951, %v1949
        %v1984 = vpack.c.b16 %v1952, %v1950
        %2017 = vmatpush.bf16.msra.mxu0 %v1967
        %2018 = vmatpush.bf16.msra.mxu0 %v1965
        %2019 = vmatpush.bf16.msra.mxu0 %v1963
        %2020 = vmatpush.bf16.msra.mxu0 %v1961
        %2021 = vmatpush.bf16.msra.mxu0 %v1959
        %2022 = vmatpush.bf16.msra.mxu0 %v1957
        %2023 = vmatpush.bf16.msra.mxu0 %v1955
        %2024 = vmatpush.bf16.msra.mxu0 %v1953
        %2025 = vmatmul.bf16.gmra.mxu0 %v1516
        %v2026 = vpop.f32.mrf.mxu0
        %v2027 = vpop.f32.mrf.mxu0
        %v2028 = vadd.f32 0.0, %v2027
        %2029 = vmatmul.bf16.gmra.mxu0 %v1518
        %v2030 = vpop.f32.mrf.mxu0
        %v2031 = vadd.f32 0.0, %v2030
        %v2032 = vpop.f32.mrf.mxu0
        %2033 = vmatmul.bf16.gmra.mxu0 %v1520
        %v2034 = vpop.f32.mrf.mxu0
        %v2035 = vadd.f32 0.0, %v2034
        %v2036 = vpop.f32.mrf.mxu0
        %v2037 = vadd.f32 0.0, %v2036
        %2038 = vmatmul.bf16.gmra.mxu0 %v1522
        %v2039 = vpop.f32.mrf.mxu0
        %v2040 = vpop.f32.mrf.mxu0
        %2041 = vdwg.mxu0
        %2042 = vmatpush.bf16.msra.mxu0 %v1983
        %2043 = vmatpush.bf16.msra.mxu0 %v1981
        %2044 = vmatpush.bf16.msra.mxu0 %v1979
        %2045 = vmatpush.bf16.msra.mxu0 %v1977
        %2046 = vmatpush.bf16.msra.mxu0 %v1975
        %2047 = vmatpush.bf16.msra.mxu0 %v1973
        %2048 = vmatpush.bf16.msra.mxu0 %v1971
        %2049 = vmatpush.bf16.msra.mxu0 %v1969
        %2050 = vmatmul.bf16.gmra.mxu0 %v1517
        %v2051 = vpop.f32.mrf.mxu0
        %v2052 = vpop.f32.mrf.mxu0
        %v2053 = vadd.f32 %v2028, %v2052
        %2054 = vmatmul.bf16.gmra.mxu0 %v1519
        %v2055 = vpop.f32.mrf.mxu0
        %v2056 = vadd.f32 %v2031, %v2055
        %v2057 = vpop.f32.mrf.mxu0
        %2058 = vmatmul.bf16.gmra.mxu0 %v1521
        %v2059 = vpop.f32.mrf.mxu0
        %v2060 = vadd.f32 %v2035, %v2059
        %v2061 = vpop.f32.mrf.mxu0
        %v2062 = vadd.f32 %v2037, %v2061
        %2063 = vmatmul.bf16.gmra.mxu0 %v1523
        %v2064 = vpop.f32.mrf.mxu0
        %v2065 = vpop.f32.mrf.mxu0
        %2066 = vdwg.mxu0
        %2067 = vmatpush.bf16.msra.mxu0 %v1968
        %2068 = vmatpush.bf16.msra.mxu0 %v1966
        %2069 = vmatpush.bf16.msra.mxu0 %v1964
        %2070 = vmatpush.bf16.msra.mxu0 %v1962
        %2071 = vmatpush.bf16.msra.mxu0 %v1960
        %2072 = vmatpush.bf16.msra.mxu0 %v1958
        %2073 = vmatpush.bf16.msra.mxu0 %v1956
        %2074 = vmatpush.bf16.msra.mxu0 %v1954
        %2075 = vmatmul.bf16.gmra.mxu0 %v1516
        %v2076 = vpop.f32.mrf.mxu0
        %v2077 = vpop.f32.mrf.mxu0
        %v2078 = vadd.f32 0.0, %v2077
        %2079 = vmatmul.bf16.gmra.mxu0 %v1518
        %v2080 = vpop.f32.mrf.mxu0
        %v2081 = vadd.f32 0.0, %v2080
        %v2082 = vpop.f32.mrf.mxu0
        %2083 = vmatmul.bf16.gmra.mxu0 %v1520
        %v2084 = vpop.f32.mrf.mxu0
        %v2085 = vadd.f32 0.0, %v2084
        %v2086 = vpop.f32.mrf.mxu0
        %v2087 = vadd.f32 0.0, %v2086
        %2088 = vmatmul.bf16.gmra.mxu0 %v1522
        %v2089 = vpop.f32.mrf.mxu0
        %v2090 = vpop.f32.mrf.mxu0
        %2091 = vdwg.mxu0
        %2092 = vmatpush.bf16.msra.mxu0 %v1984
        %2093 = vmatpush.bf16.msra.mxu0 %v1982
        %2094 = vmatpush.bf16.msra.mxu0 %v1980
        %2095 = vmatpush.bf16.msra.mxu0 %v1978
        %2096 = vmatpush.bf16.msra.mxu0 %v1976
        %2097 = vmatpush.bf16.msra.mxu0 %v1974
        %2098 = vmatpush.bf16.msra.mxu0 %v1972
        %2099 = vmatpush.bf16.msra.mxu0 %v1970
        %2100 = vmatmul.bf16.gmra.mxu0 %v1517
        %v2101 = vpop.f32.mrf.mxu0
        %v2102 = vpop.f32.mrf.mxu0
        %v2103 = vadd.f32 %v2078, %v2102
        %2104 = vmatmul.bf16.gmra.mxu0 %v1519
        %v2105 = vpop.f32.mrf.mxu0
        %v2106 = vadd.f32 %v2081, %v2105
        %v2107 = vpop.f32.mrf.mxu0
        %2108 = vmatmul.bf16.gmra.mxu0 %v1521
        %v2109 = vpop.f32.mrf.mxu0
        %v2110 = vadd.f32 %v2085, %v2109
        %v2111 = vpop.f32.mrf.mxu0
        %v2112 = vadd.f32 %v2087, %v2111
        %2113 = vmatmul.bf16.gmra.mxu0 %v1523
        %v2114 = vpop.f32.mrf.mxu0
        %v2115 = vpop.f32.mrf.mxu0
        %2116 = vdwg.mxu0
        %s2117 = scalar_lea.vmem [#allocation8], 512
        %v2118 = vld [vmem:[%s2117] sm:$0xff]
        %v2119 = vld [vmem:[%s2117 + $0x8] sm:$0xff]
        %v2120 = vld [vmem:[%s2117 + $0x10] sm:$0xff]
        %v2121 = vld [vmem:[%s2117 + $0x18] sm:$0xff]
        %v2122 = vld [vmem:[%s2117 + $0x20] sm:$0xff]
        %v2123 = vld [vmem:[%s2117 + $0x28] sm:$0xff]
        %v2124 = vld [vmem:[%s2117 + $0x30] sm:$0xff]
        %v2125 = vld [vmem:[%s2117 + $0x38] sm:$0xff]
        %v2126 = vld [vmem:[%s2117 + $0x40] sm:$0xff]
        %v2127 = vld [vmem:[%s2117 + $0x48] sm:$0xff]
        %v2128 = vld [vmem:[%s2117 + $0x50] sm:$0xff]
        %v2129 = vld [vmem:[%s2117 + $0x58] sm:$0xff]
        %v2130 = vld [vmem:[%s2117 + $0x60] sm:$0xff]
        %v2131 = vld [vmem:[%s2117 + $0x68] sm:$0xff]
        %v2132 = vld [vmem:[%s2117 + $0x70] sm:$0xff]
        %v2133 = vld [vmem:[%s2117 + $0x78] sm:$0xff]
        %v2134 = vld [vmem:[%s2117 + $0x80] sm:$0xff]
        %v2135 = vld [vmem:[%s2117 + $0x88] sm:$0xff]
        %v2136 = vld [vmem:[%s2117 + $0x90] sm:$0xff]
        %v2137 = vld [vmem:[%s2117 + $0x98] sm:$0xff]
        %v2138 = vld [vmem:[%s2117 + $0xa0] sm:$0xff]
        %v2139 = vld [vmem:[%s2117 + $0xa8] sm:$0xff]
        %v2140 = vld [vmem:[%s2117 + $0xb0] sm:$0xff]
        %v2141 = vld [vmem:[%s2117 + $0xb8] sm:$0xff]
        %v2142 = vld [vmem:[%s2117 + $0xc0] sm:$0xff]
        %v2143 = vld [vmem:[%s2117 + $0xc8] sm:$0xff]
        %v2144 = vld [vmem:[%s2117 + $0xd0] sm:$0xff]
        %v2145 = vld [vmem:[%s2117 + $0xd8] sm:$0xff]
        %v2146 = vld [vmem:[%s2117 + $0xe0] sm:$0xff]
        %v2147 = vld [vmem:[%s2117 + $0xe8] sm:$0xff]
        %v2148 = vld [vmem:[%s2117 + $0xf0] sm:$0xff]
        %v2149 = vld [vmem:[%s2117 + $0xf8] sm:$0xff]
        %v2182 = vunpack.c.l.b16 %v2118
        %v2183 = vunpack.c.h.b16 %v2118
        %v2184 = vunpack.c.l.b16 %v2119
        %v2185 = vunpack.c.h.b16 %v2119
        %v2186 = vunpack.c.l.b16 %v2120
        %v2187 = vunpack.c.h.b16 %v2120
        %v2188 = vunpack.c.l.b16 %v2121
        %v2189 = vunpack.c.h.b16 %v2121
        %v2190 = vunpack.c.l.b16 %v2122
        %v2191 = vunpack.c.h.b16 %v2122
        %v2192 = vunpack.c.l.b16 %v2123
        %v2193 = vunpack.c.h.b16 %v2123
        %v2194 = vunpack.c.l.b16 %v2124
        %v2195 = vunpack.c.h.b16 %v2124
        %v2196 = vunpack.c.l.b16 %v2125
        %v2197 = vunpack.c.h.b16 %v2125
        %v2198 = vunpack.c.l.b16 %v2126
        %v2199 = vunpack.c.h.b16 %v2126
        %v2200 = vunpack.c.l.b16 %v2127
        %v2201 = vunpack.c.h.b16 %v2127
        %v2202 = vunpack.c.l.b16 %v2128
        %v2203 = vunpack.c.h.b16 %v2128
        %v2204 = vunpack.c.l.b16 %v2129
        %v2205 = vunpack.c.h.b16 %v2129
        %v2206 = vunpack.c.l.b16 %v2130
        %v2207 = vunpack.c.h.b16 %v2130
        %v2208 = vunpack.c.l.b16 %v2131
        %v2209 = vunpack.c.h.b16 %v2131
        %v2210 = vunpack.c.l.b16 %v2132
        %v2211 = vunpack.c.h.b16 %v2132
        %v2212 = vunpack.c.l.b16 %v2133
        %v2213 = vunpack.c.h.b16 %v2133
        %v2214 = vunpack.c.l.b16 %v2134
        %v2215 = vunpack.c.h.b16 %v2134
        %v2216 = vunpack.c.l.b16 %v2135
        %v2217 = vunpack.c.h.b16 %v2135
        %v2218 = vunpack.c.l.b16 %v2136
        %v2219 = vunpack.c.h.b16 %v2136
        %v2220 = vunpack.c.l.b16 %v2137
        %v2221 = vunpack.c.h.b16 %v2137
        %v2222 = vunpack.c.l.b16 %v2138
        %v2223 = vunpack.c.h.b16 %v2138
        %v2224 = vunpack.c.l.b16 %v2139
        %v2225 = vunpack.c.h.b16 %v2139
        %v2226 = vunpack.c.l.b16 %v2140
        %v2227 = vunpack.c.h.b16 %v2140
        %v2228 = vunpack.c.l.b16 %v2141
        %v2229 = vunpack.c.h.b16 %v2141
        %v2230 = vunpack.c.l.b16 %v2142
        %v2231 = vunpack.c.h.b16 %v2142
        %v2232 = vunpack.c.l.b16 %v2143
        %v2233 = vunpack.c.h.b16 %v2143
        %v2234 = vunpack.c.l.b16 %v2144
        %v2235 = vunpack.c.h.b16 %v2144
        %v2236 = vunpack.c.l.b16 %v2145
        %v2237 = vunpack.c.h.b16 %v2145
        %v2238 = vunpack.c.l.b16 %v2146
        %v2239 = vunpack.c.h.b16 %v2146
        %v2240 = vunpack.c.l.b16 %v2147
        %v2241 = vunpack.c.h.b16 %v2147
        %v2242 = vunpack.c.l.b16 %v2148
        %v2243 = vunpack.c.h.b16 %v2148
        %v2244 = vunpack.c.l.b16 %v2149
        %v2245 = vunpack.c.h.b16 %v2149
        %v2246 = vpack.c.b16 %v2184, %v2182
        %v2247 = vpack.c.b16 %v2185, %v2183
        %v2248 = vpack.c.b16 %v2188, %v2186
        %v2249 = vpack.c.b16 %v2189, %v2187
        %v2250 = vpack.c.b16 %v2192, %v2190
        %v2251 = vpack.c.b16 %v2193, %v2191
        %v2252 = vpack.c.b16 %v2196, %v2194
        %v2253 = vpack.c.b16 %v2197, %v2195
        %v2254 = vpack.c.b16 %v2200, %v2198
        %v2255 = vpack.c.b16 %v2201, %v2199
        %v2256 = vpack.c.b16 %v2204, %v2202
        %v2257 = vpack.c.b16 %v2205, %v2203
        %v2258 = vpack.c.b16 %v2208, %v2206
        %v2259 = vpack.c.b16 %v2209, %v2207
        %v2260 = vpack.c.b16 %v2212, %v2210
        %v2261 = vpack.c.b16 %v2213, %v2211
        %v2262 = vpack.c.b16 %v2216, %v2214
        %v2263 = vpack.c.b16 %v2217, %v2215
        %v2264 = vpack.c.b16 %v2220, %v2218
        %v2265 = vpack.c.b16 %v2221, %v2219
        %v2266 = vpack.c.b16 %v2224, %v2222
        %v2267 = vpack.c.b16 %v2225, %v2223
        %v2268 = vpack.c.b16 %v2228, %v2226
        %v2269 = vpack.c.b16 %v2229, %v2227
        %v2270 = vpack.c.b16 %v2232, %v2230
        %v2271 = vpack.c.b16 %v2233, %v2231
        %v2272 = vpack.c.b16 %v2236, %v2234
        %v2273 = vpack.c.b16 %v2237, %v2235
        %v2274 = vpack.c.b16 %v2240, %v2238
        %v2275 = vpack.c.b16 %v2241, %v2239
        %v2276 = vpack.c.b16 %v2244, %v2242
        %v2277 = vpack.c.b16 %v2245, %v2243
        %2310 = vmatpush.bf16.msra.mxu0 %v2260
        %2311 = vmatpush.bf16.msra.mxu0 %v2258
        %2312 = vmatpush.bf16.msra.mxu0 %v2256
        %2313 = vmatpush.bf16.msra.mxu0 %v2254
        %2314 = vmatpush.bf16.msra.mxu0 %v2252
        %2315 = vmatpush.bf16.msra.mxu0 %v2250
        %2316 = vmatpush.bf16.msra.mxu0 %v2248
        %2317 = vmatpush.bf16.msra.mxu0 %v2246
        %2318 = vmatmul.bf16.gmra.mxu0 %v1516
        %v2319 = vpop.f32.mrf.mxu0
        %v2320 = vpop.f32.mrf.mxu0
        %v2321 = vadd.f32 0.0, %v2320
        %2322 = vmatmul.bf16.gmra.mxu0 %v1518
        %v2323 = vpop.f32.mrf.mxu0
        %v2324 = vadd.f32 0.0, %v2323
        %v2325 = vpop.f32.mrf.mxu0
        %v2326 = vadd.f32 0.0, %v2325
        %2327 = vmatmul.bf16.gmra.mxu0 %v1520
        %v2328 = vpop.f32.mrf.mxu0
        %v2329 = vadd.f32 0.0, %v2328
        %v2330 = vpop.f32.mrf.mxu0
        %v2331 = vadd.f32 0.0, %v2330
        %2332 = vmatmul.bf16.gmra.mxu0 %v1522
        %v2333 = vpop.f32.mrf.mxu0
        %v2334 = vadd.f32 0.0, %v2333
        %v2335 = vpop.f32.mrf.mxu0
        %2336 = vdwg.mxu0
        %2337 = vmatpush.bf16.msra.mxu0 %v2276
        %2338 = vmatpush.bf16.msra.mxu0 %v2274
        %2339 = vmatpush.bf16.msra.mxu0 %v2272
        %2340 = vmatpush.bf16.msra.mxu0 %v2270
        %2341 = vmatpush.bf16.msra.mxu0 %v2268
        %2342 = vmatpush.bf16.msra.mxu0 %v2266
        %2343 = vmatpush.bf16.msra.mxu0 %v2264
        %2344 = vmatpush.bf16.msra.mxu0 %v2262
        %2345 = vmatmul.bf16.gmra.mxu0 %v1517
        %v2346 = vpop.f32.mrf.mxu0
        %v2347 = vpop.f32.mrf.mxu0
        %v2348 = vadd.f32 %v2321, %v2347
        %2349 = vmatmul.bf16.gmra.mxu0 %v1519
        %v2350 = vpop.f32.mrf.mxu0
        %v2351 = vadd.f32 %v2324, %v2350
        %v2352 = vpop.f32.mrf.mxu0
        %v2353 = vadd.f32 %v2326, %v2352
        %2354 = vmatmul.bf16.gmra.mxu0 %v1521
        %v2355 = vpop.f32.mrf.mxu0
        %v2356 = vadd.f32 %v2329, %v2355
        %v2357 = vpop.f32.mrf.mxu0
        %v2358 = vadd.f32 %v2331, %v2357
        %2359 = vmatmul.bf16.gmra.mxu0 %v1523
        %v2360 = vpop.f32.mrf.mxu0
        %v2361 = vadd.f32 %v2334, %v2360
        %v2362 = vpop.f32.mrf.mxu0
        %2363 = vdwg.mxu0
        %2364 = vmatpush.bf16.msra.mxu0 %v2261
        %2365 = vmatpush.bf16.msra.mxu0 %v2259
        %2366 = vmatpush.bf16.msra.mxu0 %v2257
        %2367 = vmatpush.bf16.msra.mxu0 %v2255
        %2368 = vmatpush.bf16.msra.mxu0 %v2253
        %2369 = vmatpush.bf16.msra.mxu0 %v2251
        %2370 = vmatpush.bf16.msra.mxu0 %v2249
        %2371 = vmatpush.bf16.msra.mxu0 %v2247
        %2372 = vmatmul.bf16.gmra.mxu0 %v1516
        %v2373 = vpop.f32.mrf.mxu0
        %v2374 = vpop.f32.mrf.mxu0
        %v2375 = vadd.f32 0.0, %v2374
        %2376 = vmatmul.bf16.gmra.mxu0 %v1518
        %v2377 = vpop.f32.mrf.mxu0
        %v2378 = vadd.f32 0.0, %v2377
        %v2379 = vpop.f32.mrf.mxu0
        %v2380 = vadd.f32 0.0, %v2379
        %2381 = vmatmul.bf16.gmra.mxu0 %v1520
        %v2382 = vpop.f32.mrf.mxu0
        %v2383 = vadd.f32 0.0, %v2382
        %v2384 = vpop.f32.mrf.mxu0
        %v2385 = vadd.f32 0.0, %v2384
        %2386 = vmatmul.bf16.gmra.mxu0 %v1522
        %v2387 = vpop.f32.mrf.mxu0
        %v2388 = vadd.f32 0.0, %v2387
        %v2389 = vpop.f32.mrf.mxu0
        %2390 = vdwg.mxu0
        %2391 = vmatpush.bf16.msra.mxu0 %v2277
        %2392 = vmatpush.bf16.msra.mxu0 %v2275
        %2393 = vmatpush.bf16.msra.mxu0 %v2273
        %2394 = vmatpush.bf16.msra.mxu0 %v2271
        %2395 = vmatpush.bf16.msra.mxu0 %v2269
        %2396 = vmatpush.bf16.msra.mxu0 %v2267
        %2397 = vmatpush.bf16.msra.mxu0 %v2265
        %2398 = vmatpush.bf16.msra.mxu0 %v2263
        %2399 = vmatmul.bf16.gmra.mxu0 %v1517
        %v2400 = vpop.f32.mrf.mxu0
        %v2401 = vpop.f32.mrf.mxu0
        %v2402 = vadd.f32 %v2375, %v2401
        %2403 = vmatmul.bf16.gmra.mxu0 %v1519
        %v2404 = vpop.f32.mrf.mxu0
        %v2405 = vadd.f32 %v2378, %v2404
        %v2406 = vpop.f32.mrf.mxu0
        %v2407 = vadd.f32 %v2380, %v2406
        %2408 = vmatmul.bf16.gmra.mxu0 %v1521
        %v2409 = vpop.f32.mrf.mxu0
        %v2410 = vadd.f32 %v2383, %v2409
        %v2411 = vpop.f32.mrf.mxu0
        %v2412 = vadd.f32 %v2385, %v2411
        %2413 = vmatmul.bf16.gmra.mxu0 %v1523
        %v2414 = vpop.f32.mrf.mxu0
        %v2415 = vadd.f32 %v2388, %v2414
        %v2416 = vpop.f32.mrf.mxu0
        %2417 = vdwg.mxu0
        %v2422 = vrot.slane %v2053, 1
        %v2423 = vrot.slane %v2103, 1
        %v2424 = vrot.slane %v2056, 1
        %v2425 = vsel %vm1307, %v2422, %v2424
        %v2426 = vrot.slane %v2106, 1
        %v2427 = vsel %vm1307, %v2423, %v2426
        %v2434 = vadd.f32 %v1753, %v2422
        %v2435 = vadd.f32 %v1807, %v2423
        %v2436 = vadd.f32 %v1755, %v2425
        %v2437 = vadd.f32 %v1809, %v2427
        %v2438 = vadd.f32 %v1758, %v2424
        %v2439 = vadd.f32 %v1812, %v2426
        %v2446 = vrot.slane %v2348, 2
        %v2447 = vrot.slane %v2402, 2
        %v2448 = vrot.slane %v2351, 2
        %v2449 = vsel %vm1332, %v2446, %v2448
        %v2450 = vrot.slane %v2405, 2
        %v2451 = vsel %vm1332, %v2447, %v2450
        %v2452 = vrot.slane %v2353, 2
        %v2453 = vsel %vm1332, %v2448, %v2452
        %v2454 = vrot.slane %v2407, 2
        %v2455 = vsel %vm1332, %v2450, %v2454
        %v2462 = vadd.f32 %v2434, %v2446
        %v2463 = vadd.f32 %v2435, %v2447
        %v2464 = vadd.f32 %v2436, %v2449
        %v2465 = vadd.f32 %v2437, %v2451
        %v2466 = vadd.f32 %v2438, %v2453
        %v2467 = vadd.f32 %v2439, %v2455
        %v2468 = vld [vmem:[%s5] sm:$0x3]
        %v2470 = vperm.slane %v2468, 0
        %v2471 = vperm.slane %v2468, 1
        %v2474 = vmul.f32 %v2462, %v2470
        %v2475 = vmul.f32 %v2463, %v2471
        %v2476 = vmul.f32 %v2464, %v2470
        %v2477 = vmul.f32 %v2465, %v2471
        %v2478 = vmul.f32 %v2466, %v2470
        %v2479 = vmul.f32 %v2467, %v2471
        %v2480 = vld [vmem:[#allocation11] sm:$0x3]
        %v2482 = vperm.slane %v2480, 0
        %v2483 = vperm.slane %v2480, 1
        %v2486 = vadd.f32 %v2474, %v2482
        %v2487 = vadd.f32 %v2475, %v2483
        %v2488 = vadd.f32 %v2476, %v2482
        %v2489 = vadd.f32 %v2477, %v2483
        %v2490 = vadd.f32 %v2478, %v2482
        %v2491 = vadd.f32 %v2479, %v2483
        %v2496 = vrot.slane %v2060, 1
        %v2497 = vrot.slane %v2110, 1
        %v2498 = vrot.slane %v2062, 1
        %v2499 = vsel %vm1307, %v2496, %v2498
        %v2500 = vrot.slane %v2112, 1
        %v2501 = vsel %vm1307, %v2497, %v2500
        %v2508 = vadd.f32 %v1760, %v2496
        %v2509 = vadd.f32 %v1814, %v2497
        %v2510 = vadd.f32 %v1763, %v2499
        %v2511 = vadd.f32 %v1817, %v2501
        %v2512 = vadd.f32 %v1765, %v2498
        %v2513 = vadd.f32 %v1819, %v2500
        %v2520 = vrot.slane %v2356, 2
        %v2521 = vrot.slane %v2410, 2
        %v2522 = vrot.slane %v2358, 2
        %v2523 = vsel %vm1332, %v2520, %v2522
        %v2524 = vrot.slane %v2412, 2
        %v2525 = vsel %vm1332, %v2521, %v2524
        %v2526 = vrot.slane %v2361, 2
        %v2527 = vsel %vm1332, %v2522, %v2526
        %v2528 = vrot.slane %v2415, 2
        %v2529 = vsel %vm1332, %v2524, %v2528
        %v2536 = vadd.f32 %v2508, %v2520
        %v2537 = vadd.f32 %v2509, %v2521
        %v2538 = vadd.f32 %v2510, %v2523
        %v2539 = vadd.f32 %v2511, %v2525
        %v2540 = vadd.f32 %v2512, %v2527
        %v2541 = vadd.f32 %v2513, %v2529
        %v2542 = vmul.f32 %v2536, %v2470
        %v2543 = vmul.f32 %v2537, %v2471
        %v2544 = vmul.f32 %v2538, %v2470
        %v2545 = vmul.f32 %v2539, %v2471
        %v2546 = vmul.f32 %v2540, %v2470
        %v2547 = vmul.f32 %v2541, %v2471
        %v2548 = vadd.f32 %v2542, %v2482
        %v2549 = vadd.f32 %v2543, %v2483
        %v2550 = vadd.f32 %v2544, %v2482
        %v2551 = vadd.f32 %v2545, %v2483
        %v2552 = vadd.f32 %v2546, %v2482
        %v2553 = vadd.f32 %v2547, %v2483
        %v2554 = vld [vmem:[%s310] sm:$0xff]
        %v2555 = vld [vmem:[%s310 + $0x8] sm:$0xff]
        %v2556 = vld [vmem:[%s310 + $0x10] sm:$0xff]
        %v2557 = vld [vmem:[%s310 + $0x18] sm:$0xff]
        %v2562 = vrot.slane %v2554, 1
        %v2563 = vrot.slane %v2555, 1
        %v2564 = vrot.slane %v2556, 1
        %v2565 = vsel %vm1307, %v2562, %v2564
        %v2566 = vrot.slane %v2557, 1
        %v2567 = vsel %vm1307, %v2563, %v2566
        %v2574 = vadd.f32 %v2486, %v2562
        %v2575 = vadd.f32 %v2487, %v2563
        %v2576 = vadd.f32 %v2488, %v2565
        %v2577 = vadd.f32 %v2489, %v2567
        %v2578 = vadd.f32 %v2490, %v2564
        %v2579 = vadd.f32 %v2491, %v2566
        %v2580 = vmax.f32 %v2574, 0.0
        %v2581 = vmax.f32 %v2575, 0.0
        %v2582 = vmax.f32 %v2576, 0.0
        %v2583 = vmax.f32 %v2577, 0.0
        %v2584 = vmax.f32 %v2578, 0.0
        %v2585 = vmax.f32 %v2579, 0.0
        %v2592 = vrot.slane %v2580, 7
        %v2593 = vrot.slane %v2582, 7
        %v2594 = vsel %vm1459, %v2592, %v2593
        %v2595 = vrot.slane %v2581, 7
        %v2596 = vrot.slane %v2583, 7
        %v2597 = vsel %vm1459, %v2595, %v2596
        %v2598 = vrot.slane %v2584, 7
        %v2599 = vsel %vm1459, %v2593, %v2598
        %v2600 = vrot.slane %v2585, 7
        %v2601 = vsel %vm1459, %v2596, %v2600
        %2606 = vst [vmem:[%s361] sm:$0xff] %v2594
        %2607 = vst [vmem:[%s361 + $0x8] sm:$0xff] %v2597
        %2608 = vst [vmem:[%s361 + $0x10] sm:$0xff] %v2599
        %2609 = vst [vmem:[%s361 + $0x18] sm:$0xff] %v2601
        %v2610 = vld [vmem:[%s378] sm:$0xff]
        %v2611 = vld [vmem:[%s378 + $0x8] sm:$0xff]
        %v2612 = vld [vmem:[%s378 + $0x10] sm:$0xff]
        %v2613 = vld [vmem:[%s378 + $0x18] sm:$0xff]
        %v2618 = vrot.slane %v2610, 1
        %v2619 = vrot.slane %v2611, 1
        %v2620 = vrot.slane %v2612, 1
        %v2621 = vsel %vm1307, %v2618, %v2620
        %v2622 = vrot.slane %v2613, 1
        %v2623 = vsel %vm1307, %v2619, %v2622
        %v2630 = vadd.f32 %v2548, %v2618
        %v2631 = vadd.f32 %v2549, %v2619
        %v2632 = vadd.f32 %v2550, %v2621
        %v2633 = vadd.f32 %v2551, %v2623
        %v2634 = vadd.f32 %v2552, %v2620
        %v2635 = vadd.f32 %v2553, %v2622
        %v2636 = vmax.f32 %v2630, 0.0
        %v2637 = vmax.f32 %v2631, 0.0
        %v2638 = vmax.f32 %v2632, 0.0
        %v2639 = vmax.f32 %v2633, 0.0
        %v2640 = vmax.f32 %v2634, 0.0
        %v2641 = vmax.f32 %v2635, 0.0
        %v2648 = vrot.slane %v2636, 7
        %v2649 = vrot.slane %v2638, 7
        %v2650 = vsel %vm1459, %v2648, %v2649
        %v2651 = vrot.slane %v2637, 7
        %v2652 = vrot.slane %v2639, 7
        %v2653 = vsel %vm1459, %v2651, %v2652
        %v2654 = vrot.slane %v2640, 7
        %v2655 = vsel %vm1459, %v2649, %v2654
        %v2656 = vrot.slane %v2641, 7
        %v2657 = vsel %vm1459, %v2652, %v2656
        %s2662 = scalar_lea.vmem %s361, 32 [#allocation12]
        %2663 = vst [vmem:[%s2662] sm:$0xff] %v2650
        %2664 = vst [vmem:[%s2662 + $0x8] sm:$0xff] %v2653
        %2665 = vst [vmem:[%s2662 + $0x10] sm:$0xff] %v2655
        %2666 = vst [vmem:[%s2662 + $0x18] sm:$0xff] %v2657
        %s2667 = sand.u32 %s186, 1
        %s2668 = scalar_lea.sflag [#allocation5], %s2667
        %s2669 = sand.u32 %s186, 1
        %s2670 = smul.addr %s2669, 64
        %s2671 = scalar_lea.vmem [#allocation12], %s2670
        // Predicated region
        $region69: #{tpu_custom_call.1} parent=47 // pred_check
          %p2672 = pneg %p196
        $region70: #{tpu_custom_call.1} parent=47 // pred_check_branch
          %2674 = sbr.rel (%p2672) target = $region72
        $region71: #{tpu_custom_call.1} parent=47 // pred_region
          %s2675 = smul.u32 2, %s26
          %2677 = vsyncadd %s2668, 0
          %s2678 = smul.addr %s2675, 4
          %s2679 = smul.addr %s2678, 8
          %s2680 = scalar_lea.hbm %s7, %s2679
          %s2681 = sshll.u32 %s2671, 4
          %s2682 = int_to_ptr.vmem [resolvable:$true] %s2681
          %s2683 = sshll.u32 %s2680, 4
          %s2684 = int_to_ptr.hbm [resolvable:$true] %s2683
          %2689 = dma.vmem_to_hbm [thread:$0]  %s2682, 1024, %s2684, %s2668, 256, 256, 16
        $region72: #{tpu_custom_call.1} parent=47 // pred_fallthru
          _
      $region48: #{tpu_custom_call.1} parent=5 // pred_fallthru
        _
      %p2690 = scmp.le.s32.totalorder 2, %s21
      // Predicated region
      $region73: #{tpu_custom_call.1} parent=5 // pred_check
        %p2691 = pneg %p2690
      $region74: #{tpu_custom_call.1} parent=5 // pred_check_branch
        %2693 = sbr.rel (%p2691) target = $region76
      $region75: #{tpu_custom_call.1} parent=5 // pred_region
        %s2694 = ssub.s32 %s21, 2
        // Predicated region
        $region77: #{tpu_custom_call.1} parent=75 // pred_check
          %p2695 = pneg %p202
        $region78: #{tpu_custom_call.1} parent=75 // pred_check_branch
          %2697 = sbr.rel (%p2695) target = $region80
        $region79: #{tpu_custom_call.1} parent=75 // pred_region
          %s2698 = sand.u32 %s187, 1
          %s2699 = scalar_lea.sflag [#allocation5], %s2698
          %s2700 = sand.u32 %s187, 1
          %s2701 = smul.addr %s2700, 64
          %s2702 = scalar_lea.vmem [#allocation12], %s2701
          %2704 = dma.done %s2699, 1024
        $region80: #{tpu_custom_call.1} parent=75 // pred_fallthru
          _
      $region76: #{tpu_custom_call.1} parent=5 // pred_fallthru
        _
    $region6: #{tpu_custom_call.1} parent=1 // loop_footer
      %s25 = sadd.s32 1, %s21
    $region7: #{tpu_custom_call.1} parent=1 // loop_footer_branch
      %20 = sbr.rel target = $region3
    $region8: #{tpu_custom_call.1} parent=1 // loop_exit
      _
    %2705 = vsyncpa [#allocation4], 1
    %s2706 = scalar_lea.sflag [#allocation4], 1
    %2707 = vsyncpa %s2706, 1
    %2708 = vsyncpa [#allocation7], 1
    %2709 = vsyncpa [#allocation10], 1
    %2710 = vsyncpa [#allocation5], 1
    %s2711 = scalar_lea.sflag [#allocation5], 1
    %2712 = vsyncpa %s2711, 1

// kernel: tpu_custom_call.1
$region0: #{tpu_custom_call.1}
  #allocation0 [shape = 'u32[]', space=smem, size = 0x4, offset = 0x4, fixed_abs, tag = 'smem constant byte address 0x4 - core index']
  #allocation1 [shape = 'u32[72,128]{1,0:T(1,128)}', space=vmem, size = 0x9000, scoped, tag = 'internal scratch']
  #allocation2 [shape = 'f32[56,256]{1,0:T(8,128)}', space=vmem, size = 0xe000, scoped, tag = 'scratch operand']
  %s0 = inlined_call_operand.hbm [shape: f32[4,16,256], index: 0, kind: input, shape index: {}]
  %s1 = inlined_call_operand.hbm [shape: bf16[3,256,256], index: 1, kind: input, shape index: {}]
  %s2 = inlined_call_operand.hbm [shape: bf16[3,256,256], index: 2, kind: input, shape index: {}]
  %s3 = inlined_call_operand.vmem [shape: f32[1,256], index: 3, kind: input, shape index: {}]
  %s4 = inlined_call_operand.hbm [shape: f32[1,256], index: 4, kind: input, shape index: {}]
  %s5 = inlined_call_operand.vmem [shape: f32[1,256], index: 5, kind: input, shape index: {}]
  %s6 = inlined_call_operand.hbm [shape: f32[1,256], index: 6, kind: input, shape index: {}]
  %s7 = inlined_call_operand.hbm [shape: f32[4,16,256], index: 7, kind: output, shape index: {}]
  %s8 = sld [smem:[#allocation0]]
  $region81: #{tpu_custom_call.1} parent=0
    _
  %s10 = ssub.s32 1, %s8
  %s11 = scalar_select 0, %s10, %s8
  $region1: #{tpu_custom_call.1} parent=0
    #allocation3 [shape = 'u8[65536]{0}', space=vmem, size = 0x10000, scoped, tag = 'input window, operand 0']
    #allocation4 [shape = 's32[2]{0}', space=sflag, size = 0x8, scoped, tag = 'scoped memory for tpu_custom_call.1']
    #allocation5 [shape = 's32[2]{0}', space=sflag, size = 0x8, scoped, tag = 'scoped memory for tpu_custom_call.1']
    #allocation6 [shape = 'u8[393216]{0}', space=vmem, size = 0x60000, scoped, tag = 'input window, operand 1, single buffered']
    #allocation7 [shape = 's32[1]{0}', space=sflag, size = 0x4, scoped, tag = 'scoped memory for tpu_custom_call.1']
    #allocation8 [shape = 'u8[393216]{0}', space=vmem, size = 0x60000, scoped, tag = 'input window, operand 2, single buffered']
    #allocation9 [shape = 'u8[1024]{0}', space=vmem, size = 0x400, scoped, tag = 'input window, operand 4, single buffered']
    #allocation10 [shape = 's32[1]{0}', space=sflag, size = 0x4, scoped, tag = 'scoped memory for tpu_custom_call.1']
    #allocation11 [shape = 'u8[1024]{0}', space=vmem, size = 0x400, scoped, tag = 'input window, operand 6, single buffered']
    #allocation12 [shape = 'u8[65536]{0}', space=vmem, size = 0x10000, scoped, tag = 'output window, operand 0']
    %12 = vsyncpa [#allocation4], 0
    %s13 = scalar_lea.sflag [#allocation4], 1
    %14 = vsyncpa %s13, 0
    %15 = vsyncpa [#allocation7], 0
    %16 = vsyncpa [#allocation10], 0
    %17 = vsyncpa [#allocation5], 0
    %s18 = scalar_lea.sflag [#allocation5], 1
    %19 = vsyncpa %s18, 0
    loop: start=0, step=1, limit=4
    $region2: #{tpu_custom_call.1} parent=1 // loop_pre_header
      _
    $region3: #{tpu_custom_call.1} parent=1 // loop_header
      %s21 = sphi 0, %s25
      %p22 = scmp.ge.s32.totalorder %s21, 4
      %s31 = sphi 0, %s33
      %s34 = sphi 0, %s31
      %s35 = sphi 0, %s34
      %s51 = sphi 0, %s35
      %s55 = sphi 0, %s55
      %s57 = sphi 0, %s55
      %s58 = sphi 0, %s57
      %s72 = sphi 0, %s58
      %s76 = sphi 0, %s76
      %s78 = sphi 0, %s76
      %s79 = sphi 0, %s78
      %s93 = sphi 0, %s79
      %s97 = sphi 0, %s97
      %s99 = sphi 0, %s97
      %s100 = sphi 0, %s99
      %s114 = sphi 0, %s100
      %s118 = sphi 0, %s118
      %s120 = sphi 0, %s118
      %s121 = sphi 0, %s120
      %s135 = sphi 0, %s121
      %s139 = sphi 0, %s139
      %s141 = sphi 0, %s139
      %s142 = sphi 0, %s141
      %s156 = sphi 0, %s142
      %s160 = sphi 0, %s160
      %s162 = sphi 0, %s160
      %s163 = sphi 0, %s162
      %s177 = sphi 0, %s163
      %s183 = sphi 0, %s185
      %s186 = sphi 0, %s183
      %s187 = sphi 0, %s186
      %s203 = sphi 0, %s187
    $region4: #{tpu_custom_call.1} parent=1 // loop_header_branch
      %24 = sbr.rel (%p22) target = $region8
    $region5: #{tpu_custom_call.1} parent=1 // loop_body
      %s26 = ssub.s32 %s21, 1
      %s27 = ssub.s32 %s21, 2
      %s28 = sadd.s32 %s21, 1
      %s29 = ssub.s32 %s21, %s28
      %p30 = scmp.eq.s32.totalorder %s29, 0
      %s32 = sadd.s32 %s31, 1
      %s33 = scalar_select %p30, %s31, %s32
      %p36 = pneg %p30
      %p37 = scmp.eq.s32.totalorder %s21, 1
      %p38 = por %p36, %p37
      %p39 = scmp.ne.s32.totalorder %s31, %s34
      %p40 = scmp.eq.s32.totalorder %s21, 0
      %p41 = por %p39, %p40
      %p42 = scmp.ne.s32.totalorder %s31, %s34
      %p43 = scmp.eq.s32.totalorder %s26, 1
      %p44 = por %p42, %p43
      %p45 = scmp.ne.s32.totalorder %s34, %s35
      %p46 = scmp.eq.s32.totalorder %s26, 0
      %p47 = por %p45, %p46
      %p48 = scmp.ne.s32.totalorder %s34, %s35
      %p49 = scmp.eq.s32.totalorder %s27, 1
      %p50 = por %p48, %p49
      %p52 = scmp.ne.s32.totalorder %s35, %s51
      %p53 = scmp.eq.s32.totalorder %s27, 0
      %p54 = por %p52, %p53
      %s56 = sadd.s32 %s55, 1
      %p59 = scmp.eq.s32.totalorder %s21, 1
      %p60 = scmp.ne.s32.totalorder %s55, %s57
      %p61 = scmp.eq.s32.totalorder %s21, 0
      %p62 = por %p60, %p61
      %p63 = scmp.ne.s32.totalorder %s55, %s57
      %p64 = scmp.eq.s32.totalorder %s26, 1
      %p65 = por %p63, %p64
      %p66 = scmp.ne.s32.totalorder %s57, %s58
      %p67 = scmp.eq.s32.totalorder %s26, 0
      %p68 = por %p66, %p67
      %p69 = scmp.ne.s32.totalorder %s57, %s58
      %p70 = scmp.eq.s32.totalorder %s27, 1
      %p71 = por %p69, %p70
      %p73 = scmp.ne.s32.totalorder %s58, %s72
      %p74 = scmp.eq.s32.totalorder %s27, 0
      %p75 = por %p73, %p74
      %s77 = sadd.s32 %s76, 1
      %p80 = scmp.eq.s32.totalorder %s21, 1
      %p81 = scmp.ne.s32.totalorder %s76, %s78
      %p82 = scmp.eq.s32.totalorder %s21, 0
      %p83 = por %p81, %p82
      %p84 = scmp.ne.s32.totalorder %s76, %s78
      %p85 = scmp.eq.s32.totalorder %s26, 1
      %p86 = por %p84, %p85
      %p87 = scmp.ne.s32.totalorder %s78, %s79
      %p88 = scmp.eq.s32.totalorder %s26, 0
      %p89 = por %p87, %p88
      %p90 = scmp.ne.s32.totalorder %s78, %s79
      %p91 = scmp.eq.s32.totalorder %s27, 1
      %p92 = por %p90, %p91
      %p94 = scmp.ne.s32.totalorder %s79, %s93
      %p95 = scmp.eq.s32.totalorder %s27, 0
      %p96 = por %p94, %p95
      %s98 = sadd.s32 %s97, 1
      %p101 = scmp.eq.s32.totalorder %s21, 1
      %p102 = scmp.ne.s32.totalorder %s97, %s99
      %p103 = scmp.eq.s32.totalorder %s21, 0
      %p104 = por %p102, %p103
      %p105 = scmp.ne.s32.totalorder %s97, %s99
      %p106 = scmp.eq.s32.totalorder %s26, 1
      %p107 = por %p105, %p106
      %p108 = scmp.ne.s32.totalorder %s99, %s100
      %p109 = scmp.eq.s32.totalorder %s26, 0
      %p110 = por %p108, %p109
      %p111 = scmp.ne.s32.totalorder %s99, %s100
      %p112 = scmp.eq.s32.totalorder %s27, 1
      %p113 = por %p111, %p112
      %p115 = scmp.ne.s32.totalorder %s100, %s114
      %p116 = scmp.eq.s32.totalorder %s27, 0
      %p117 = por %p115, %p116
      %s119 = sadd.s32 %s118, 1
      %p122 = scmp.eq.s32.totalorder %s21, 1
      %p123 = scmp.ne.s32.totalorder %s118, %s120
      %p124 = scmp.eq.s32.totalorder %s21, 0
      %p125 = por %p123, %p124
      %p126 = scmp.ne.s32.totalorder %s118, %s120
      %p127 = scmp.eq.s32.totalorder %s26, 1
      %p128 = por %p126, %p127
      %p129 = scmp.ne.s32.totalorder %s120, %s121
      %p130 = scmp.eq.s32.totalorder %s26, 0
      %p131 = por %p129, %p130
      %p132 = scmp.ne.s32.totalorder %s120, %s121
      %p133 = scmp.eq.s32.totalorder %s27, 1
      %p134 = por %p132, %p133
      %p136 = scmp.ne.s32.totalorder %s121, %s135
      %p137 = scmp.eq.s32.totalorder %s27, 0
      %p138 = por %p136, %p137
      %s140 = sadd.s32 %s139, 1
      %p143 = scmp.eq.s32.totalorder %s21, 1
      %p144 = scmp.ne.s32.totalorder %s139, %s141
      %p145 = scmp.eq.s32.totalorder %s21, 0
      %p146 = por %p144, %p145
      %p147 = scmp.ne.s32.totalorder %s139, %s141
      %p148 = scmp.eq.s32.totalorder %s26, 1
      %p149 = por %p147, %p148
      %p150 = scmp.ne.s32.totalorder %s141, %s142
      %p151 = scmp.eq.s32.totalorder %s26, 0
      %p152 = por %p150, %p151
      %p153 = scmp.ne.s32.totalorder %s141, %s142
      %p154 = scmp.eq.s32.totalorder %s27, 1
      %p155 = por %p153, %p154
      %p157 = scmp.ne.s32.totalorder %s142, %s156
      %p158 = scmp.eq.s32.totalorder %s27, 0
      %p159 = por %p157, %p158
      %s161 = sadd.s32 %s160, 1
      %p164 = scmp.eq.s32.totalorder %s21, 1
      %p165 = scmp.ne.s32.totalorder %s160, %s162
      %p166 = scmp.eq.s32.totalorder %s21, 0
      %p167 = por %p165, %p166
      %p168 = scmp.ne.s32.totalorder %s160, %s162
      %p169 = scmp.eq.s32.totalorder %s26, 1
      %p170 = por %p168, %p169
      %p171 = scmp.ne.s32.totalorder %s162, %s163
      %p172 = scmp.eq.s32.totalorder %s26, 0
      %p173 = por %p171, %p172
      %p174 = scmp.ne.s32.totalorder %s162, %s163
      %p175 = scmp.eq.s32.totalorder %s27, 1
      %p176 = por %p174, %p175
      %p178 = scmp.ne.s32.totalorder %s163, %s177
      %p179 = scmp.eq.s32.totalorder %s27, 0
      %p180 = por %p178, %p179
      %s181 = ssub.s32 %s21, %s28
      %p182 = scmp.eq.s32.totalorder %s181, 0
      %s184 = sadd.s32 %s183, 1
      %s185 = scalar_select %p182, %s183, %s184
      %p188 = pneg %p182
      %p189 = scmp.eq.s32.totalorder %s21, 1
      %p190 = por %p188, %p189
      %p191 = scmp.ne.s32.totalorder %s183, %s186
      %p192 = scmp.eq.s32.totalorder %s21, 0
      %p193 = por %p191, %p192
      %p194 = scmp.ne.s32.totalorder %s183, %s186
      %p195 = scmp.eq.s32.totalorder %s26, 1
      %p196 = por %p194, %p195
      %p197 = scmp.ne.s32.totalorder %s186, %s187
      %p198 = scmp.eq.s32.totalorder %s26, 0
      %p199 = por %p197, %p198
      %p200 = scmp.ne.s32.totalorder %s186, %s187
      %p201 = scmp.eq.s32.totalorder %s27, 1
      %p202 = por %p200, %p201
      %p204 = scmp.ne.s32.totalorder %s187, %s203
      %p205 = scmp.eq.s32.totalorder %s27, 0
      %p206 = por %p204, %p205
      %p207 = scmp.le.s32.totalorder 1, %s21
      %p208 = scmp.lt.s32.totalorder %s21, 3
      %p209 = pnand %p207, %p208
      %p210 = pneg %p209
      // Predicated region
      $region9: #{tpu_custom_call.1} parent=5 // pred_check
        _
      $region10: #{tpu_custom_call.1} parent=5 // pred_check_branch
        %212 = sbr.rel (%p209) target = $region12
      $region11: #{tpu_custom_call.1} parent=5 // pred_region
        %s213 = ssub.s32 %s21, 1
        // Predicated region
        $region13: #{tpu_custom_call.1} parent=11 // pred_check
          %p214 = pneg %p68
        $region14: #{tpu_custom_call.1} parent=11 // pred_check_branch
          %216 = sbr.rel (%p214) target = $region16
        $region15: #{tpu_custom_call.1} parent=11 // pred_region
          %218 = vsyncadd [#allocation7], 0
          %s219 = sshll.u32 %s1, 4
          %s220 = int_to_ptr.hbm [resolvable:$true] %s219
          %s221 = sshll.u32 [#allocation6], 4
          %s222 = int_to_ptr.vmem [resolvable:$true] %s221
          %227 = dma.hbm_to_vmem [thread:$0]  %s220, 12288, %s222, [#allocation7], 128, 128, 8
        $region16: #{tpu_custom_call.1} parent=11 // pred_fallthru
          _
        // Predicated region
        $region17: #{tpu_custom_call.1} parent=11 // pred_check
          %p228 = pneg %p89
        $region18: #{tpu_custom_call.1} parent=11 // pred_check_branch
          %230 = sbr.rel (%p228) target = $region20
        $region19: #{tpu_custom_call.1} parent=11 // pred_region
          %232 = vsyncadd [#allocation7], 0
          %s233 = sshll.u32 %s2, 4
          %s234 = int_to_ptr.hbm [resolvable:$true] %s233
          %s235 = sshll.u32 [#allocation8], 4
          %s236 = int_to_ptr.vmem [resolvable:$true] %s235
          %241 = dma.hbm_to_vmem [thread:$0]  %s234, 12288, %s236, [#allocation7], 128, 128, 8
        $region20: #{tpu_custom_call.1} parent=11 // pred_fallthru
          _
        // Predicated region
        $region21: #{tpu_custom_call.1} parent=11 // pred_check
          %p242 = pneg %p110
        $region22: #{tpu_custom_call.1} parent=11 // pred_check_branch
          %244 = sbr.rel (%p242) target = $region24
        $region23: #{tpu_custom_call.1} parent=11 // pred_region
          _
        $region24: #{tpu_custom_call.1} parent=11 // pred_fallthru
          _
        // Predicated region
        $region25: #{tpu_custom_call.1} parent=11 // pred_check
          %p245 = pneg %p131
        $region26: #{tpu_custom_call.1} parent=11 // pred_check_branch
          %247 = sbr.rel (%p245) target = $region28
        $region27: #{tpu_custom_call.1} parent=11 // pred_region
          %249 = vsyncadd [#allocation10], 0
          %s251 = sshll.u32 %s4, 4
          %s252 = int_to_ptr.hbm [resolvable:$true] %s251
          %s253 = sshll.u32 [#allocation9], 4
          %s254 = int_to_ptr.vmem [resolvable:$true] %s253
          %256 = dma.hbm_to_vmem [thread:$0]  %s252, 32, %s254, [#allocation10]
        $region28: #{tpu_custom_call.1} parent=11 // pred_fallthru
          _
        // Predicated region
        $region29: #{tpu_custom_call.1} parent=11 // pred_check
          %p257 = pneg %p152
        $region30: #{tpu_custom_call.1} parent=11 // pred_check_branch
          %259 = sbr.rel (%p257) target = $region32
        $region31: #{tpu_custom_call.1} parent=11 // pred_region
          _
        $region32: #{tpu_custom_call.1} parent=11 // pred_fallthru
          _
        // Predicated region
        $region33: #{tpu_custom_call.1} parent=11 // pred_check
          %p260 = pneg %p173
        $region34: #{tpu_custom_call.1} parent=11 // pred_check_branch
          %262 = sbr.rel (%p260) target = $region36
        $region35: #{tpu_custom_call.1} parent=11 // pred_region
          %264 = vsyncadd [#allocation10], 0
          %s266 = sshll.u32 %s6, 4
          %s267 = int_to_ptr.hbm [resolvable:$true] %s266
          %s268 = sshll.u32 [#allocation11], 4
          %s269 = int_to_ptr.vmem [resolvable:$true] %s268
          %271 = dma.hbm_to_vmem [thread:$0]  %s267, 32, %s269, [#allocation10]
        $region36: #{tpu_custom_call.1} parent=11 // pred_fallthru
          _
      $region12: #{tpu_custom_call.1} parent=5 // pred_fallthru
        _
      %p272 = scmp.lt.s32.totalorder %s21, 2
      // Predicated region
      $region37: #{tpu_custom_call.1} parent=5 // pred_check
        %p273 = pneg %p272
      $region38: #{tpu_custom_call.1} parent=5 // pred_check_branch
        %275 = sbr.rel (%p273) target = $region40
      $region39: #{tpu_custom_call.1} parent=5 // pred_region
        // Predicated region
        $region41: #{tpu_custom_call.1} parent=39 // pred_check
          %p276 = pneg %p41
        $region42: #{tpu_custom_call.1} parent=39 // pred_check_branch
          %278 = sbr.rel (%p276) target = $region44
        $region43: #{tpu_custom_call.1} parent=39 // pred_region
          %s279 = sand.u32 %s31, 1
          %s280 = scalar_lea.sflag [#allocation4], %s279
          %s281 = sand.u32 %s31, 1
          %s282 = smul.addr %s281, 64
          %s283 = scalar_lea.vmem [#allocation3], %s282
          %s284 = smul.u32 2, %s21
          %286 = vsyncadd %s280, 0
          %s287 = smul.addr %s284, 4
          %s288 = smul.addr %s287, 8
          %s289 = scalar_lea.hbm %s0, %s288
          %s290 = sshll.u32 %s289, 4
          %s291 = int_to_ptr.hbm [resolvable:$true] %s290
          %s292 = sshll.u32 %s283, 4
          %s293 = int_to_ptr.vmem [resolvable:$true] %s292
          %298 = dma.hbm_to_vmem [thread:$0]  %s291, 1024, %s293, %s280, 256, 256, 16
        $region44: #{tpu_custom_call.1} parent=39 // pred_fallthru
          _
      $region40: #{tpu_custom_call.1} parent=5 // pred_fallthru
        _
      %p299 = scmp.le.s32.totalorder 1, %s21
      %p300 = scmp.lt.s32.totalorder %s21, 3
      %p301 = pnand %p299, %p300
      %p302 = pneg %p301
      // Predicated region
      $region45: #{tpu_custom_call.1} parent=5 // pred_check
        _
      $region46: #{tpu_custom_call.1} parent=5 // pred_check_branch
        %304 = sbr.rel (%p301) target = $region48
      $region47: #{tpu_custom_call.1} parent=5 // pred_region
        %s305 = ssub.s32 %s21, 1
        %s306 = sand.u32 %s34, 1
        %s307 = scalar_lea.sflag [#allocation4], %s306
        %s308 = sand.u32 %s34, 1
        %s309 = smul.addr %s308, 64
        %s310 = scalar_lea.vmem [#allocation3], %s309
        // Predicated region
        $region49: #{tpu_custom_call.1} parent=47 // pred_check
          %p311 = pneg %p47
        $region50: #{tpu_custom_call.1} parent=47 // pred_check_branch
          %313 = sbr.rel (%p311) target = $region52
        $region51: #{tpu_custom_call.1} parent=47 // pred_region
          %315 = dma.done %s307, 1024
        $region52: #{tpu_custom_call.1} parent=47 // pred_fallthru
          _
        // Predicated region
        $region53: #{tpu_custom_call.1} parent=47 // pred_check
          %p316 = pneg %p68
        $region54: #{tpu_custom_call.1} parent=47 // pred_check_branch
          %318 = sbr.rel (%p316) target = $region56
        $region55: #{tpu_custom_call.1} parent=47 // pred_region
          %320 = dma.done [#allocation7], 12288
        $region56: #{tpu_custom_call.1} parent=47 // pred_fallthru
          _
        // Predicated region
        $region57: #{tpu_custom_call.1} parent=47 // pred_check
          %p321 = pneg %p89
        $region58: #{tpu_custom_call.1} parent=47 // pred_check_branch
          %323 = sbr.rel (%p321) target = $region60
        $region59: #{tpu_custom_call.1} parent=47 // pred_region
          %325 = dma.done [#allocation7], 12288
        $region60: #{tpu_custom_call.1} parent=47 // pred_fallthru
          _
        // Predicated region
        $region61: #{tpu_custom_call.1} parent=47 // pred_check
          %p326 = pneg %p131
        $region62: #{tpu_custom_call.1} parent=47 // pred_check_branch
          %328 = sbr.rel (%p326) target = $region64
        $region63: #{tpu_custom_call.1} parent=47 // pred_region
          %330 = dma.done [#allocation10], 32
        $region64: #{tpu_custom_call.1} parent=47 // pred_fallthru
          _
        // Predicated region
        $region65: #{tpu_custom_call.1} parent=47 // pred_check
          %p331 = pneg %p173
        $region66: #{tpu_custom_call.1} parent=47 // pred_check_branch
          %333 = sbr.rel (%p331) target = $region68
        $region67: #{tpu_custom_call.1} parent=47 // pred_region
          %335 = dma.done [#allocation10], 32
        $region68: #{tpu_custom_call.1} parent=47 // pred_fallthru
          _
        %s336 = sand.u32 %s34, 1
        %s337 = scalar_lea.sflag [#allocation4], %s336
        %s338 = sand.u32 %s34, 1
        %s339 = smul.addr %s338, 64
        %s340 = scalar_lea.vmem [#allocation3], %s339
        %p341 = pneg %p47
        %p342 = pneg %p44
        %p343 = pneg %p68
        %p344 = pneg %p65
        %p345 = pneg %p89
        %p346 = pneg %p86
        %p347 = pneg %p110
        %p348 = pneg %p107
        %p349 = pneg %p131
        %p350 = pneg %p128
        %p351 = pneg %p152
        %p352 = pneg %p149
        %p353 = pneg %p173
        %p354 = pneg %p170
        %p355 = pneg %p199
        %p356 = pneg %p196
        %s357 = sand.u32 %s186, 1
        %s358 = scalar_lea.sflag [#allocation5], %s357
        %s359 = sand.u32 %s186, 1
        %s360 = smul.addr %s359, 64
        %s361 = scalar_lea.vmem [#allocation12], %s360
        %s362 = smul.u32 2, %s26
        %s363 = smul.u32 2, %s26
        %364 = vst [vmem:[#allocation2] sm:$0xff] 0.0
        %365 = vst [vmem:[#allocation2 + $0x8] sm:$0xff] 0.0
        %366 = vst [vmem:[#allocation2 + $0x30] sm:$0xff] 0.0
        %367 = vst [vmem:[#allocation2 + $0x38] sm:$0xff] 0.0
        %368 = vst [vmem:[#allocation2 + $0x60] sm:$0xff] 0.0
        %369 = vst [vmem:[#allocation2 + $0x68] sm:$0xff] 0.0
        %v370 = vld [vmem:[%s310] sm:$0xff]
        %v371 = vld [vmem:[%s310 + $0x8] sm:$0xff]
        %v372 = vld [vmem:[%s310 + $0x10] sm:$0xff]
        %v373 = vld [vmem:[%s310 + $0x18] sm:$0xff]
        %374 = vst [vmem:[#allocation2 + $0x10] sm:$0xff] %v370
        %375 = vst [vmem:[#allocation2 + $0x18] sm:$0xff] %v371
        %376 = vst [vmem:[#allocation2 + $0x20] sm:$0xff] %v372
        %377 = vst [vmem:[#allocation2 + $0x28] sm:$0xff] %v373
        %s378 = scalar_lea.vmem %s310, 32 [#allocation3]
        %v379 = vld [vmem:[%s378] sm:$0xff]
        %v380 = vld [vmem:[%s378 + $0x8] sm:$0xff]
        %v381 = vld [vmem:[%s378 + $0x10] sm:$0xff]
        %v382 = vld [vmem:[%s378 + $0x18] sm:$0xff]
        %383 = vst [vmem:[#allocation2 + $0x40] sm:$0xff] %v379
        %384 = vst [vmem:[#allocation2 + $0x48] sm:$0xff] %v380
        %385 = vst [vmem:[#allocation2 + $0x50] sm:$0xff] %v381
        %386 = vst [vmem:[#allocation2 + $0x58] sm:$0xff] %v382
        %v387 = vld [vmem:[#allocation2] sm:$0xff]
        %v388 = vld [vmem:[#allocation2 + $0x8] sm:$0xff]
        %v389 = vld [vmem:[#allocation2 + $0x10] sm:$0xff]
        %v390 = vld [vmem:[#allocation2 + $0x18] sm:$0xff]
        %v391 = vld [vmem:[#allocation2 + $0x20] sm:$0xff]
        %v392 = vld [vmem:[#allocation2 + $0x28] sm:$0xff]
        %v393 = vld [vmem:[#allocation2 + $0x30] sm:$0xff]
        %v394 = vld [vmem:[#allocation2 + $0x38] sm:$0xff]
        %v395 = vld [vmem:[#allocation2 + $0x40] sm:$0xff]
        %v396 = vld [vmem:[#allocation2 + $0x48] sm:$0xff]
        %v397 = vld [vmem:[#allocation2 + $0x50] sm:$0xff]
        %v398 = vld [vmem:[#allocation2 + $0x58] sm:$0xff]
        %v399 = vld [vmem:[#allocation2 + $0x60] sm:$0xff]
        %v400 = vld [vmem:[#allocation2 + $0x68] sm:$0xff]
        %v401 = vpack.c.bf16 %v389, %v387
        %v402 = vpack.c.bf16 %v390, %v388
        %v403 = vpack.c.bf16 %v393, %v391
        %v404 = vpack.c.bf16 %v394, %v392
        %v405 = vpack.c.bf16 %v397, %v395
        %v406 = vpack.c.bf16 %v398, %v396
        %v407 = vpack.c.bf16 %v399, %v399
        %v408 = vpack.c.bf16 %v400, %v400
        %v409 = vld [vmem:[#allocation6] sm:$0xff]
        %v410 = vld [vmem:[#allocation6 + $0x8] sm:$0xff]
        %v411 = vld [vmem:[#allocation6 + $0x10] sm:$0xff]
        %v412 = vld [vmem:[#allocation6 + $0x18] sm:$0xff]
        %v413 = vld [vmem:[#allocation6 + $0x20] sm:$0xff]
        %v414 = vld [vmem:[#allocation6 + $0x28] sm:$0xff]
        %v415 = vld [vmem:[#allocation6 + $0x30] sm:$0xff]
        %v416 = vld [vmem:[#allocation6 + $0x38] sm:$0xff]
        %v417 = vld [vmem:[#allocation6 + $0x40] sm:$0xff]
        %v418 = vld [vmem:[#allocation6 + $0x48] sm:$0xff]
        %v419 = vld [vmem:[#allocation6 + $0x50] sm:$0xff]
        %v420 = vld [vmem:[#allocation6 + $0x58] sm:$0xff]
        %v421 = vld [vmem:[#allocation6 + $0x60] sm:$0xff]
        %v422 = vld [vmem:[#allocation6 + $0x68] sm:$0xff]
        %v423 = vld [vmem:[#allocation6 + $0x70] sm:$0xff]
        %v424 = vld [vmem:[#allocation6 + $0x78] sm:$0xff]
        %v425 = vld [vmem:[#allocation6 + $0x80] sm:$0xff]
        %v426 = vld [vmem:[#allocation6 + $0x88] sm:$0xff]
        %v427 = vld [vmem:[#allocation6 + $0x90] sm:$0xff]
        %v428 = vld [vmem:[#allocation6 + $0x98] sm:$0xff]
        %v429 = vld [vmem:[#allocation6 + $0xa0] sm:$0xff]
        %v430 = vld [vmem:[#allocation6 + $0xa8] sm:$0xff]
        %v431 = vld [vmem:[#allocation6 + $0xb0] sm:$0xff]
        %v432 = vld [vmem:[#allocation6 + $0xb8] sm:$0xff]
        %v433 = vld [vmem:[#allocation6 + $0xc0] sm:$0xff]
        %v434 = vld [vmem:[#allocation6 + $0xc8] sm:$0xff]
        %v435 = vld [vmem:[#allocation6 + $0xd0] sm:$0xff]
        %v436 = vld [vmem:[#allocation6 + $0xd8] sm:$0xff]
        %v437 = vld [vmem:[#allocation6 + $0xe0] sm:$0xff]
        %v438 = vld [vmem:[#allocation6 + $0xe8] sm:$0xff]
        %v439 = vld [vmem:[#allocation6 + $0xf0] sm:$0xff]
        %v440 = vld [vmem:[#allocation6 + $0xf8] sm:$0xff]
        %v473 = vunpack.c.l.b16 %v409
        %v474 = vunpack.c.h.b16 %v409
        %v475 = vunpack.c.l.b16 %v410
        %v476 = vunpack.c.h.b16 %v410
        %v477 = vunpack.c.l.b16 %v411
        %v478 = vunpack.c.h.b16 %v411
        %v479 = vunpack.c.l.b16 %v412
        %v480 = vunpack.c.h.b16 %v412
        %v481 = vunpack.c.l.b16 %v413
        %v482 = vunpack.c.h.b16 %v413
        %v483 = vunpack.c.l.b16 %v414
        %v484 = vunpack.c.h.b16 %v414
        %v485 = vunpack.c.l.b16 %v415
        %v486 = vunpack.c.h.b16 %v415
        %v487 = vunpack.c.l.b16 %v416
        %v488 = vunpack.c.h.b16 %v416
        %v489 = vunpack.c.l.b16 %v417
        %v490 = vunpack.c.h.b16 %v417
        %v491 = vunpack.c.l.b16 %v418
        %v492 = vunpack.c.h.b16 %v418
        %v493 = vunpack.c.l.b16 %v419
        %v494 = vunpack.c.h.b16 %v419
        %v495 = vunpack.c.l.b16 %v420
        %v496 = vunpack.c.h.b16 %v420
        %v497 = vunpack.c.l.b16 %v421
        %v498 = vunpack.c.h.b16 %v421
        %v499 = vunpack.c.l.b16 %v422
        %v500 = vunpack.c.h.b16 %v422
        %v501 = vunpack.c.l.b16 %v423
        %v502 = vunpack.c.h.b16 %v423
        %v503 = vunpack.c.l.b16 %v424
        %v504 = vunpack.c.h.b16 %v424
        %v505 = vunpack.c.l.b16 %v425
        %v506 = vunpack.c.h.b16 %v425
        %v507 = vunpack.c.l.b16 %v426
        %v508 = vunpack.c.h.b16 %v426
        %v509 = vunpack.c.l.b16 %v427
        %v510 = vunpack.c.h.b16 %v427
        %v511 = vunpack.c.l.b16 %v428
        %v512 = vunpack.c.h.b16 %v428
        %v513 = vunpack.c.l.b16 %v429
        %v514 = vunpack.c.h.b16 %v429
        %v515 = vunpack.c.l.b16 %v430
        %v516 = vunpack.c.h.b16 %v430
        %v517 = vunpack.c.l.b16 %v431
        %v518 = vunpack.c.h.b16 %v431
        %v519 = vunpack.c.l.b16 %v432
        %v520 = vunpack.c.h.b16 %v432
        %v521 = vunpack.c.l.b16 %v433
        %v522 = vunpack.c.h.b16 %v433
        %v523 = vunpack.c.l.b16 %v434
        %v524 = vunpack.c.h.b16 %v434
        %v525 = vunpack.c.l.b16 %v435
        %v526 = vunpack.c.h.b16 %v435
        %v527 = vunpack.c.l.b16 %v436
        %v528 = vunpack.c.h.b16 %v436
        %v529 = vunpack.c.l.b16 %v437
        %v530 = vunpack.c.h.b16 %v437
        %v531 = vunpack.c.l.b16 %v438
        %v532 = vunpack.c.h.b16 %v438
        %v533 = vunpack.c.l.b16 %v439
        %v534 = vunpack.c.h.b16 %v439
        %v535 = vunpack.c.l.b16 %v440
        %v536 = vunpack.c.h.b16 %v440
        %v537 = vpack.c.b16 %v475, %v473
        %v538 = vpack.c.b16 %v476, %v474
        %v539 = vpack.c.b16 %v479, %v477
        %v540 = vpack.c.b16 %v480, %v478
        %v541 = vpack.c.b16 %v483, %v481
        %v542 = vpack.c.b16 %v484, %v482
        %v543 = vpack.c.b16 %v487, %v485
        %v544 = vpack.c.b16 %v488, %v486
        %v545 = vpack.c.b16 %v491, %v489
        %v546 = vpack.c.b16 %v492, %v490
        %v547 = vpack.c.b16 %v495, %v493
        %v548 = vpack.c.b16 %v496, %v494
        %v549 = vpack.c.b16 %v499, %v497
        %v550 = vpack.c.b16 %v500, %v498
        %v551 = vpack.c.b16 %v503, %v501
        %v552 = vpack.c.b16 %v504, %v502
        %v553 = vpack.c.b16 %v507, %v505
        %v554 = vpack.c.b16 %v508, %v506
        %v555 = vpack.c.b16 %v511, %v509
        %v556 = vpack.c.b16 %v512, %v510
        %v557 = vpack.c.b16 %v515, %v513
        %v558 = vpack.c.b16 %v516, %v514
        %v559 = vpack.c.b16 %v519, %v517
        %v560 = vpack.c.b16 %v520, %v518
        %v561 = vpack.c.b16 %v523, %v521
        %v562 = vpack.c.b16 %v524, %v522
        %v563 = vpack.c.b16 %v527, %v525
        %v564 = vpack.c.b16 %v528, %v526
        %v565 = vpack.c.b16 %v531, %v529
        %v566 = vpack.c.b16 %v532, %v530
        %v567 = vpack.c.b16 %v535, %v533
        %v568 = vpack.c.b16 %v536, %v534
        %601 = vmatpush.bf16.msra.mxu0 %v551
        %602 = vmatpush.bf16.msra.mxu0 %v549
        %603 = vmatpush.bf16.msra.mxu0 %v547
        %604 = vmatpush.bf16.msra.mxu0 %v545
        %605 = vmatpush.bf16.msra.mxu0 %v543
        %606 = vmatpush.bf16.msra.mxu0 %v541
        %607 = vmatpush.bf16.msra.mxu0 %v539
        %608 = vmatpush.bf16.msra.mxu0 %v537
        %609 = vmatmul.bf16.gmra.mxu0 %v401
        %v610 = vpop.f32.mrf.mxu0
        %v611 = vadd.f32 0.0, %v610
        %v612 = vpop.f32.mrf.mxu0
        %v613 = vadd.f32 0.0, %v612
        %614 = vmatmul.bf16.gmra.mxu0 %v403
        %v615 = vpop.f32.mrf.mxu0
        %v616 = vadd.f32 0.0, %v615
        %v617 = vpop.f32.mrf.mxu0
        %v618 = vadd.f32 0.0, %v617
        %619 = vmatmul.bf16.gmra.mxu0 %v405
        %v620 = vpop.f32.mrf.mxu0
        %v621 = vadd.f32 0.0, %v620
        %v622 = vpop.f32.mrf.mxu0
        %v623 = vadd.f32 0.0, %v622
        %624 = vmatmul.bf16.gmra.mxu0 %v407
        %v625 = vpop.f32.mrf.mxu0
        %v626 = vpop.f32.mrf.mxu0
        %627 = vdwg.mxu0
        %628 = vmatpush.bf16.msra.mxu0 %v567
        %629 = vmatpush.bf16.msra.mxu0 %v565
        %630 = vmatpush.bf16.msra.mxu0 %v563
        %631 = vmatpush.bf16.msra.mxu0 %v561
        %632 = vmatpush.bf16.msra.mxu0 %v559
        %633 = vmatpush.bf16.msra.mxu0 %v557
        %634 = vmatpush.bf16.msra.mxu0 %v555
        %635 = vmatpush.bf16.msra.mxu0 %v553
        %636 = vmatmul.bf16.gmra.mxu0 %v402
        %v637 = vpop.f32.mrf.mxu0
        %v638 = vadd.f32 %v611, %v637
        %v639 = vpop.f32.mrf.mxu0
        %v640 = vadd.f32 %v613, %v639
        %641 = vmatmul.bf16.gmra.mxu0 %v404
        %v642 = vpop.f32.mrf.mxu0
        %v643 = vadd.f32 %v616, %v642
        %v644 = vpop.f32.mrf.mxu0
        %v645 = vadd.f32 %v618, %v644
        %646 = vmatmul.bf16.gmra.mxu0 %v406
        %v647 = vpop.f32.mrf.mxu0
        %v648 = vadd.f32 %v621, %v647
        %v649 = vpop.f32.mrf.mxu0
        %v650 = vadd.f32 %v623, %v649
        %651 = vmatmul.bf16.gmra.mxu0 %v408
        %v652 = vpop.f32.mrf.mxu0
        %v653 = vpop.f32.mrf.mxu0
        %654 = vdwg.mxu0
        %655 = vmatpush.bf16.msra.mxu0 %v552
        %656 = vmatpush.bf16.msra.mxu0 %v550
        %657 = vmatpush.bf16.msra.mxu0 %v548
        %658 = vmatpush.bf16.msra.mxu0 %v546
        %659 = vmatpush.bf16.msra.mxu0 %v544
        %660 = vmatpush.bf16.msra.mxu0 %v542
        %661 = vmatpush.bf16.msra.mxu0 %v540
        %662 = vmatpush.bf16.msra.mxu0 %v538
        %663 = vmatmul.bf16.gmra.mxu0 %v401
        %v664 = vpop.f32.mrf.mxu0
        %v665 = vadd.f32 0.0, %v664
        %v666 = vpop.f32.mrf.mxu0
        %v667 = vadd.f32 0.0, %v666
        %668 = vmatmul.bf16.gmra.mxu0 %v403
        %v669 = vpop.f32.mrf.mxu0
        %v670 = vadd.f32 0.0, %v669
        %v671 = vpop.f32.mrf.mxu0
        %v672 = vadd.f32 0.0, %v671
        %673 = vmatmul.bf16.gmra.mxu0 %v405
        %v674 = vpop.f32.mrf.mxu0
        %v675 = vadd.f32 0.0, %v674
        %v676 = vpop.f32.mrf.mxu0
        %v677 = vadd.f32 0.0, %v676
        %678 = vmatmul.bf16.gmra.mxu0 %v407
        %v679 = vpop.f32.mrf.mxu0
        %v680 = vpop.f32.mrf.mxu0
        %681 = vdwg.mxu0
        %682 = vmatpush.bf16.msra.mxu0 %v568
        %683 = vmatpush.bf16.msra.mxu0 %v566
        %684 = vmatpush.bf16.msra.mxu0 %v564
        %685 = vmatpush.bf16.msra.mxu0 %v562
        %686 = vmatpush.bf16.msra.mxu0 %v560
        %687 = vmatpush.bf16.msra.mxu0 %v558
        %688 = vmatpush.bf16.msra.mxu0 %v556
        %689 = vmatpush.bf16.msra.mxu0 %v554
        %690 = vmatmul.bf16.gmra.mxu0 %v402
        %v691 = vpop.f32.mrf.mxu0
        %v692 = vadd.f32 %v665, %v691
        %v693 = vpop.f32.mrf.mxu0
        %v694 = vadd.f32 %v667, %v693
        %695 = vmatmul.bf16.gmra.mxu0 %v404
        %v696 = vpop.f32.mrf.mxu0
        %v697 = vadd.f32 %v670, %v696
        %v698 = vpop.f32.mrf.mxu0
        %v699 = vadd.f32 %v672, %v698
        %700 = vmatmul.bf16.gmra.mxu0 %v406
        %v701 = vpop.f32.mrf.mxu0
        %v702 = vadd.f32 %v675, %v701
        %v703 = vpop.f32.mrf.mxu0
        %v704 = vadd.f32 %v677, %v703
        %705 = vmatmul.bf16.gmra.mxu0 %v408
        %v706 = vpop.f32.mrf.mxu0
        %v707 = vpop.f32.mrf.mxu0
        %708 = vdwg.mxu0
        %s709 = scalar_lea.vmem [#allocation6], 256
        %v710 = vld [vmem:[%s709] sm:$0xff]
        %v711 = vld [vmem:[%s709 + $0x8] sm:$0xff]
        %v712 = vld [vmem:[%s709 + $0x10] sm:$0xff]
        %v713 = vld [vmem:[%s709 + $0x18] sm:$0xff]
        %v714 = vld [vmem:[%s709 + $0x20] sm:$0xff]
        %v715 = vld [vmem:[%s709 + $0x28] sm:$0xff]
        %v716 = vld [vmem:[%s709 + $0x30] sm:$0xff]
        %v717 = vld [vmem:[%s709 + $0x38] sm:$0xff]
        %v718 = vld [vmem:[%s709 + $0x40] sm:$0xff]
        %v719 = vld [vmem:[%s709 + $0x48] sm:$0xff]
        %v720 = vld [vmem:[%s709 + $0x50] sm:$0xff]
        %v721 = vld [vmem:[%s709 + $0x58] sm:$0xff]
        %v722 = vld [vmem:[%s709 + $0x60] sm:$0xff]
        %v723 = vld [vmem:[%s709 + $0x68] sm:$0xff]
        %v724 = vld [vmem:[%s709 + $0x70] sm:$0xff]
        %v725 = vld [vmem:[%s709 + $0x78] sm:$0xff]
        %v726 = vld [vmem:[%s709 + $0x80] sm:$0xff]
        %v727 = vld [vmem:[%s709 + $0x88] sm:$0xff]
        %v728 = vld [vmem:[%s709 + $0x90] sm:$0xff]
        %v729 = vld [vmem:[%s709 + $0x98] sm:$0xff]
        %v730 = vld [vmem:[%s709 + $0xa0] sm:$0xff]
        %v731 = vld [vmem:[%s709 + $0xa8] sm:$0xff]
        %v732 = vld [vmem:[%s709 + $0xb0] sm:$0xff]
        %v733 = vld [vmem:[%s709 + $0xb8] sm:$0xff]
        %v734 = vld [vmem:[%s709 + $0xc0] sm:$0xff]
        %v735 = vld [vmem:[%s709 + $0xc8] sm:$0xff]
        %v736 = vld [vmem:[%s709 + $0xd0] sm:$0xff]
        %v737 = vld [vmem:[%s709 + $0xd8] sm:$0xff]
        %v738 = vld [vmem:[%s709 + $0xe0] sm:$0xff]
        %v739 = vld [vmem:[%s709 + $0xe8] sm:$0xff]
        %v740 = vld [vmem:[%s709 + $0xf0] sm:$0xff]
        %v741 = vld [vmem:[%s709 + $0xf8] sm:$0xff]
        %v774 = vunpack.c.l.b16 %v710
        %v775 = vunpack.c.h.b16 %v710
        %v776 = vunpack.c.l.b16 %v711
        %v777 = vunpack.c.h.b16 %v711
        %v778 = vunpack.c.l.b16 %v712
        %v779 = vunpack.c.h.b16 %v712
        %v780 = vunpack.c.l.b16 %v713
        %v781 = vunpack.c.h.b16 %v713
        %v782 = vunpack.c.l.b16 %v714
        %v783 = vunpack.c.h.b16 %v714
        %v784 = vunpack.c.l.b16 %v715
        %v785 = vunpack.c.h.b16 %v715
        %v786 = vunpack.c.l.b16 %v716
        %v787 = vunpack.c.h.b16 %v716
        %v788 = vunpack.c.l.b16 %v717
        %v789 = vunpack.c.h.b16 %v717
        %v790 = vunpack.c.l.b16 %v718
        %v791 = vunpack.c.h.b16 %v718
        %v792 = vunpack.c.l.b16 %v719
        %v793 = vunpack.c.h.b16 %v719
        %v794 = vunpack.c.l.b16 %v720
        %v795 = vunpack.c.h.b16 %v720
        %v796 = vunpack.c.l.b16 %v721
        %v797 = vunpack.c.h.b16 %v721
        %v798 = vunpack.c.l.b16 %v722
        %v799 = vunpack.c.h.b16 %v722
        %v800 = vunpack.c.l.b16 %v723
        %v801 = vunpack.c.h.b16 %v723
        %v802 = vunpack.c.l.b16 %v724
        %v803 = vunpack.c.h.b16 %v724
        %v804 = vunpack.c.l.b16 %v725
        %v805 = vunpack.c.h.b16 %v725
        %v806 = vunpack.c.l.b16 %v726
        %v807 = vunpack.c.h.b16 %v726
        %v808 = vunpack.c.l.b16 %v727
        %v809 = vunpack.c.h.b16 %v727
        %v810 = vunpack.c.l.b16 %v728
        %v811 = vunpack.c.h.b16 %v728
        %v812 = vunpack.c.l.b16 %v729
        %v813 = vunpack.c.h.b16 %v729
        %v814 = vunpack.c.l.b16 %v730
        %v815 = vunpack.c.h.b16 %v730
        %v816 = vunpack.c.l.b16 %v731
        %v817 = vunpack.c.h.b16 %v731
        %v818 = vunpack.c.l.b16 %v732
        %v819 = vunpack.c.h.b16 %v732
        %v820 = vunpack.c.l.b16 %v733
        %v821 = vunpack.c.h.b16 %v733
        %v822 = vunpack.c.l.b16 %v734
        %v823 = vunpack.c.h.b16 %v734
        %v824 = vunpack.c.l.b16 %v735
        %v825 = vunpack.c.h.b16 %v735
        %v826 = vunpack.c.l.b16 %v736
        %v827 = vunpack.c.h.b16 %v736
        %v828 = vunpack.c.l.b16 %v737
        %v829 = vunpack.c.h.b16 %v737
        %v830 = vunpack.c.l.b16 %v738
        %v831 = vunpack.c.h.b16 %v738
        %v832 = vunpack.c.l.b16 %v739
        %v833 = vunpack.c.h.b16 %v739
        %v834 = vunpack.c.l.b16 %v740
        %v835 = vunpack.c.h.b16 %v740
        %v836 = vunpack.c.l.b16 %v741
        %v837 = vunpack.c.h.b16 %v741
        %v838 = vpack.c.b16 %v776, %v774
        %v839 = vpack.c.b16 %v777, %v775
        %v840 = vpack.c.b16 %v780, %v778
        %v841 = vpack.c.b16 %v781, %v779
        %v842 = vpack.c.b16 %v784, %v782
        %v843 = vpack.c.b16 %v785, %v783
        %v844 = vpack.c.b16 %v788, %v786
        %v845 = vpack.c.b16 %v789, %v787
        %v846 = vpack.c.b16 %v792, %v790
        %v847 = vpack.c.b16 %v793, %v791
        %v848 = vpack.c.b16 %v796, %v794
        %v849 = vpack.c.b16 %v797, %v795
        %v850 = vpack.c.b16 %v800, %v798
        %v851 = vpack.c.b16 %v801, %v799
        %v852 = vpack.c.b16 %v804, %v802
        %v853 = vpack.c.b16 %v805, %v803
        %v854 = vpack.c.b16 %v808, %v806
        %v855 = vpack.c.b16 %v809, %v807
        %v856 = vpack.c.b16 %v812, %v810
        %v857 = vpack.c.b16 %v813, %v811
        %v858 = vpack.c.b16 %v816, %v814
        %v859 = vpack.c.b16 %v817, %v815
        %v860 = vpack.c.b16 %v820, %v818
        %v861 = vpack.c.b16 %v821, %v819
        %v862 = vpack.c.b16 %v824, %v822
        %v863 = vpack.c.b16 %v825, %v823
        %v864 = vpack.c.b16 %v828, %v826
        %v865 = vpack.c.b16 %v829, %v827
        %v866 = vpack.c.b16 %v832, %v830
        %v867 = vpack.c.b16 %v833, %v831
        %v868 = vpack.c.b16 %v836, %v834
        %v869 = vpack.c.b16 %v837, %v835
        %902 = vmatpush.bf16.msra.mxu0 %v852
        %903 = vmatpush.bf16.msra.mxu0 %v850
        %904 = vmatpush.bf16.msra.mxu0 %v848
        %905 = vmatpush.bf16.msra.mxu0 %v846
        %906 = vmatpush.bf16.msra.mxu0 %v844
        %907 = vmatpush.bf16.msra.mxu0 %v842
        %908 = vmatpush.bf16.msra.mxu0 %v840
        %909 = vmatpush.bf16.msra.mxu0 %v838
        %910 = vmatmul.bf16.gmra.mxu0 %v401
        %v911 = vpop.f32.mrf.mxu0
        %v912 = vpop.f32.mrf.mxu0
        %v913 = vadd.f32 0.0, %v912
        %914 = vmatmul.bf16.gmra.mxu0 %v403
        %v915 = vpop.f32.mrf.mxu0
        %v916 = vadd.f32 0.0, %v915
        %v917 = vpop.f32.mrf.mxu0
        %918 = vmatmul.bf16.gmra.mxu0 %v405
        %v919 = vpop.f32.mrf.mxu0
        %v920 = vadd.f32 0.0, %v919
        %v921 = vpop.f32.mrf.mxu0
        %v922 = vadd.f32 0.0, %v921
        %923 = vmatmul.bf16.gmra.mxu0 %v407
        %v924 = vpop.f32.mrf.mxu0
        %v925 = vpop.f32.mrf.mxu0
        %926 = vdwg.mxu0
        %927 = vmatpush.bf16.msra.mxu0 %v868
        %928 = vmatpush.bf16.msra.mxu0 %v866
        %929 = vmatpush.bf16.msra.mxu0 %v864
        %930 = vmatpush.bf16.msra.mxu0 %v862
        %931 = vmatpush.bf16.msra.mxu0 %v860
        %932 = vmatpush.bf16.msra.mxu0 %v858
        %933 = vmatpush.bf16.msra.mxu0 %v856
        %934 = vmatpush.bf16.msra.mxu0 %v854
        %935 = vmatmul.bf16.gmra.mxu0 %v402
        %v936 = vpop.f32.mrf.mxu0
        %v937 = vpop.f32.mrf.mxu0
        %v938 = vadd.f32 %v913, %v937
        %939 = vmatmul.bf16.gmra.mxu0 %v404
        %v940 = vpop.f32.mrf.mxu0
        %v941 = vadd.f32 %v916, %v940
        %v942 = vpop.f32.mrf.mxu0
        %943 = vmatmul.bf16.gmra.mxu0 %v406
        %v944 = vpop.f32.mrf.mxu0
        %v945 = vadd.f32 %v920, %v944
        %v946 = vpop.f32.mrf.mxu0
        %v947 = vadd.f32 %v922, %v946
        %948 = vmatmul.bf16.gmra.mxu0 %v408
        %v949 = vpop.f32.mrf.mxu0
        %v950 = vpop.f32.mrf.mxu0
        %951 = vdwg.mxu0
        %952 = vmatpush.bf16.msra.mxu0 %v853
        %953 = vmatpush.bf16.msra.mxu0 %v851
        %954 = vmatpush.bf16.msra.mxu0 %v849
        %955 = vmatpush.bf16.msra.mxu0 %v847
        %956 = vmatpush.bf16.msra.mxu0 %v845
        %957 = vmatpush.bf16.msra.mxu0 %v843
        %958 = vmatpush.bf16.msra.mxu0 %v841
        %959 = vmatpush.bf16.msra.mxu0 %v839
        %960 = vmatmul.bf16.gmra.mxu0 %v401
        %v961 = vpop.f32.mrf.mxu0
        %v962 = vpop.f32.mrf.mxu0
        %v963 = vadd.f32 0.0, %v962
        %964 = vmatmul.bf16.gmra.mxu0 %v403
        %v965 = vpop.f32.mrf.mxu0
        %v966 = vadd.f32 0.0, %v965
        %v967 = vpop.f32.mrf.mxu0
        %968 = vmatmul.bf16.gmra.mxu0 %v405
        %v969 = vpop.f32.mrf.mxu0
        %v970 = vadd.f32 0.0, %v969
        %v971 = vpop.f32.mrf.mxu0
        %v972 = vadd.f32 0.0, %v971
        %973 = vmatmul.bf16.gmra.mxu0 %v407
        %v974 = vpop.f32.mrf.mxu0
        %v975 = vpop.f32.mrf.mxu0
        %976 = vdwg.mxu0
        %977 = vmatpush.bf16.msra.mxu0 %v869
        %978 = vmatpush.bf16.msra.mxu0 %v867
        %979 = vmatpush.bf16.msra.mxu0 %v865
        %980 = vmatpush.bf16.msra.mxu0 %v863
        %981 = vmatpush.bf16.msra.mxu0 %v861
        %982 = vmatpush.bf16.msra.mxu0 %v859
        %983 = vmatpush.bf16.msra.mxu0 %v857
        %984 = vmatpush.bf16.msra.mxu0 %v855
        %985 = vmatmul.bf16.gmra.mxu0 %v402
        %v986 = vpop.f32.mrf.mxu0
        %v987 = vpop.f32.mrf.mxu0
        %v988 = vadd.f32 %v963, %v987
        %989 = vmatmul.bf16.gmra.mxu0 %v404
        %v990 = vpop.f32.mrf.mxu0
        %v991 = vadd.f32 %v966, %v990
        %v992 = vpop.f32.mrf.mxu0
        %993 = vmatmul.bf16.gmra.mxu0 %v406
        %v994 = vpop.f32.mrf.mxu0
        %v995 = vadd.f32 %v970, %v994
        %v996 = vpop.f32.mrf.mxu0
        %v997 = vadd.f32 %v972, %v996
        %998 = vmatmul.bf16.gmra.mxu0 %v408
        %v999 = vpop.f32.mrf.mxu0
        %v1000 = vpop.f32.mrf.mxu0
        %1001 = vdwg.mxu0
        %s1002 = scalar_lea.vmem [#allocation6], 512
        %v1003 = vld [vmem:[%s1002] sm:$0xff]
        %v1004 = vld [vmem:[%s1002 + $0x8] sm:$0xff]
        %v1005 = vld [vmem:[%s1002 + $0x10] sm:$0xff]
        %v1006 = vld [vmem:[%s1002 + $0x18] sm:$0xff]
        %v1007 = vld [vmem:[%s1002 + $0x20] sm:$0xff]
        %v1008 = vld [vmem:[%s1002 + $0x28] sm:$0xff]
        %v1009 = vld [vmem:[%s1002 + $0x30] sm:$0xff]
        %v1010 = vld [vmem:[%s1002 + $0x38] sm:$0xff]
        %v1011 = vld [vmem:[%s1002 + $0x40] sm:$0xff]
        %v1012 = vld [vmem:[%s1002 + $0x48] sm:$0xff]
        %v1013 = vld [vmem:[%s1002 + $0x50] sm:$0xff]
        %v1014 = vld [vmem:[%s1002 + $0x58] sm:$0xff]
        %v1015 = vld [vmem:[%s1002 + $0x60] sm:$0xff]
        %v1016 = vld [vmem:[%s1002 + $0x68] sm:$0xff]
        %v1017 = vld [vmem:[%s1002 + $0x70] sm:$0xff]
        %v1018 = vld [vmem:[%s1002 + $0x78] sm:$0xff]
        %v1019 = vld [vmem:[%s1002 + $0x80] sm:$0xff]
        %v1020 = vld [vmem:[%s1002 + $0x88] sm:$0xff]
        %v1021 = vld [vmem:[%s1002 + $0x90] sm:$0xff]
        %v1022 = vld [vmem:[%s1002 + $0x98] sm:$0xff]
        %v1023 = vld [vmem:[%s1002 + $0xa0] sm:$0xff]
        %v1024 = vld [vmem:[%s1002 + $0xa8] sm:$0xff]
        %v1025 = vld [vmem:[%s1002 + $0xb0] sm:$0xff]
        %v1026 = vld [vmem:[%s1002 + $0xb8] sm:$0xff]
        %v1027 = vld [vmem:[%s1002 + $0xc0] sm:$0xff]
        %v1028 = vld [vmem:[%s1002 + $0xc8] sm:$0xff]
        %v1029 = vld [vmem:[%s1002 + $0xd0] sm:$0xff]
        %v1030 = vld [vmem:[%s1002 + $0xd8] sm:$0xff]
        %v1031 = vld [vmem:[%s1002 + $0xe0] sm:$0xff]
        %v1032 = vld [vmem:[%s1002 + $0xe8] sm:$0xff]
        %v1033 = vld [vmem:[%s1002 + $0xf0] sm:$0xff]
        %v1034 = vld [vmem:[%s1002 + $0xf8] sm:$0xff]
        %v1067 = vunpack.c.l.b16 %v1003
        %v1068 = vunpack.c.h.b16 %v1003
        %v1069 = vunpack.c.l.b16 %v1004
        %v1070 = vunpack.c.h.b16 %v1004
        %v1071 = vunpack.c.l.b16 %v1005
        %v1072 = vunpack.c.h.b16 %v1005
        %v1073 = vunpack.c.l.b16 %v1006
        %v1074 = vunpack.c.h.b16 %v1006
        %v1075 = vunpack.c.l.b16 %v1007
        %v1076 = vunpack.c.h.b16 %v1007
        %v1077 = vunpack.c.l.b16 %v1008
        %v1078 = vunpack.c.h.b16 %v1008
        %v1079 = vunpack.c.l.b16 %v1009
        %v1080 = vunpack.c.h.b16 %v1009
        %v1081 = vunpack.c.l.b16 %v1010
        %v1082 = vunpack.c.h.b16 %v1010
        %v1083 = vunpack.c.l.b16 %v1011
        %v1084 = vunpack.c.h.b16 %v1011
        %v1085 = vunpack.c.l.b16 %v1012
        %v1086 = vunpack.c.h.b16 %v1012
        %v1087 = vunpack.c.l.b16 %v1013
        %v1088 = vunpack.c.h.b16 %v1013
        %v1089 = vunpack.c.l.b16 %v1014
        %v1090 = vunpack.c.h.b16 %v1014
        %v1091 = vunpack.c.l.b16 %v1015
        %v1092 = vunpack.c.h.b16 %v1015
        %v1093 = vunpack.c.l.b16 %v1016
        %v1094 = vunpack.c.h.b16 %v1016
        %v1095 = vunpack.c.l.b16 %v1017
        %v1096 = vunpack.c.h.b16 %v1017
        %v1097 = vunpack.c.l.b16 %v1018
        %v1098 = vunpack.c.h.b16 %v1018
        %v1099 = vunpack.c.l.b16 %v1019
        %v1100 = vunpack.c.h.b16 %v1019
        %v1101 = vunpack.c.l.b16 %v1020
        %v1102 = vunpack.c.h.b16 %v1020
        %v1103 = vunpack.c.l.b16 %v1021
        %v1104 = vunpack.c.h.b16 %v1021
        %v1105 = vunpack.c.l.b16 %v1022
        %v1106 = vunpack.c.h.b16 %v1022
        %v1107 = vunpack.c.l.b16 %v1023
        %v1108 = vunpack.c.h.b16 %v1023
        %v1109 = vunpack.c.l.b16 %v1024
        %v1110 = vunpack.c.h.b16 %v1024
        %v1111 = vunpack.c.l.b16 %v1025
        %v1112 = vunpack.c.h.b16 %v1025
        %v1113 = vunpack.c.l.b16 %v1026
        %v1114 = vunpack.c.h.b16 %v1026
        %v1115 = vunpack.c.l.b16 %v1027
        %v1116 = vunpack.c.h.b16 %v1027
        %v1117 = vunpack.c.l.b16 %v1028
        %v1118 = vunpack.c.h.b16 %v1028
        %v1119 = vunpack.c.l.b16 %v1029
        %v1120 = vunpack.c.h.b16 %v1029
        %v1121 = vunpack.c.l.b16 %v1030
        %v1122 = vunpack.c.h.b16 %v1030
        %v1123 = vunpack.c.l.b16 %v1031
        %v1124 = vunpack.c.h.b16 %v1031
        %v1125 = vunpack.c.l.b16 %v1032
        %v1126 = vunpack.c.h.b16 %v1032
        %v1127 = vunpack.c.l.b16 %v1033
        %v1128 = vunpack.c.h.b16 %v1033
        %v1129 = vunpack.c.l.b16 %v1034
        %v1130 = vunpack.c.h.b16 %v1034
        %v1131 = vpack.c.b16 %v1069, %v1067
        %v1132 = vpack.c.b16 %v1070, %v1068
        %v1133 = vpack.c.b16 %v1073, %v1071
        %v1134 = vpack.c.b16 %v1074, %v1072
        %v1135 = vpack.c.b16 %v1077, %v1075
        %v1136 = vpack.c.b16 %v1078, %v1076
        %v1137 = vpack.c.b16 %v1081, %v1079
        %v1138 = vpack.c.b16 %v1082, %v1080
        %v1139 = vpack.c.b16 %v1085, %v1083
        %v1140 = vpack.c.b16 %v1086, %v1084
        %v1141 = vpack.c.b16 %v1089, %v1087
        %v1142 = vpack.c.b16 %v1090, %v1088
        %v1143 = vpack.c.b16 %v1093, %v1091
        %v1144 = vpack.c.b16 %v1094, %v1092
        %v1145 = vpack.c.b16 %v1097, %v1095
        %v1146 = vpack.c.b16 %v1098, %v1096
        %v1147 = vpack.c.b16 %v1101, %v1099
        %v1148 = vpack.c.b16 %v1102, %v1100
        %v1149 = vpack.c.b16 %v1105, %v1103
        %v1150 = vpack.c.b16 %v1106, %v1104
        %v1151 = vpack.c.b16 %v1109, %v1107
        %v1152 = vpack.c.b16 %v1110, %v1108
        %v1153 = vpack.c.b16 %v1113, %v1111
        %v1154 = vpack.c.b16 %v1114, %v1112
        %v1155 = vpack.c.b16 %v1117, %v1115
        %v1156 = vpack.c.b16 %v1118, %v1116
        %v1157 = vpack.c.b16 %v1121, %v1119
        %v1158 = vpack.c.b16 %v1122, %v1120
        %v1159 = vpack.c.b16 %v1125, %v1123
        %v1160 = vpack.c.b16 %v1126, %v1124
        %v1161 = vpack.c.b16 %v1129, %v1127
        %v1162 = vpack.c.b16 %v1130, %v1128
        %1195 = vmatpush.bf16.msra.mxu0 %v1145
        %1196 = vmatpush.bf16.msra.mxu0 %v1143
        %1197 = vmatpush.bf16.msra.mxu0 %v1141
        %1198 = vmatpush.bf16.msra.mxu0 %v1139
        %1199 = vmatpush.bf16.msra.mxu0 %v1137
        %1200 = vmatpush.bf16.msra.mxu0 %v1135
        %1201 = vmatpush.bf16.msra.mxu0 %v1133
        %1202 = vmatpush.bf16.msra.mxu0 %v1131
        %1203 = vmatmul.bf16.gmra.mxu0 %v401
        %v1204 = vpop.f32.mrf.mxu0
        %v1205 = vpop.f32.mrf.mxu0
        %v1206 = vadd.f32 0.0, %v1205
        %1207 = vmatmul.bf16.gmra.mxu0 %v403
        %v1208 = vpop.f32.mrf.mxu0
        %v1209 = vadd.f32 0.0, %v1208
        %v1210 = vpop.f32.mrf.mxu0
        %v1211 = vadd.f32 0.0, %v1210
        %1212 = vmatmul.bf16.gmra.mxu0 %v405
        %v1213 = vpop.f32.mrf.mxu0
        %v1214 = vadd.f32 0.0, %v1213
        %v1215 = vpop.f32.mrf.mxu0
        %v1216 = vadd.f32 0.0, %v1215
        %1217 = vmatmul.bf16.gmra.mxu0 %v407
        %v1218 = vpop.f32.mrf.mxu0
        %v1219 = vadd.f32 0.0, %v1218
        %v1220 = vpop.f32.mrf.mxu0
        %1221 = vdwg.mxu0
        %1222 = vmatpush.bf16.msra.mxu0 %v1161
        %1223 = vmatpush.bf16.msra.mxu0 %v1159
        %1224 = vmatpush.bf16.msra.mxu0 %v1157
        %1225 = vmatpush.bf16.msra.mxu0 %v1155
        %1226 = vmatpush.bf16.msra.mxu0 %v1153
        %1227 = vmatpush.bf16.msra.mxu0 %v1151
        %1228 = vmatpush.bf16.msra.mxu0 %v1149
        %1229 = vmatpush.bf16.msra.mxu0 %v1147
        %1230 = vmatmul.bf16.gmra.mxu0 %v402
        %v1231 = vpop.f32.mrf.mxu0
        %v1232 = vpop.f32.mrf.mxu0
        %v1233 = vadd.f32 %v1206, %v1232
        %1234 = vmatmul.bf16.gmra.mxu0 %v404
        %v1235 = vpop.f32.mrf.mxu0
        %v1236 = vadd.f32 %v1209, %v1235
        %v1237 = vpop.f32.mrf.mxu0
        %v1238 = vadd.f32 %v1211, %v1237
        %1239 = vmatmul.bf16.gmra.mxu0 %v406
        %v1240 = vpop.f32.mrf.mxu0
        %v1241 = vadd.f32 %v1214, %v1240
        %v1242 = vpop.f32.mrf.mxu0
        %v1243 = vadd.f32 %v1216, %v1242
        %1244 = vmatmul.bf16.gmra.mxu0 %v408
        %v1245 = vpop.f32.mrf.mxu0
        %v1246 = vadd.f32 %v1219, %v1245
        %v1247 = vpop.f32.mrf.mxu0
        %1248 = vdwg.mxu0
        %1249 = vmatpush.bf16.msra.mxu0 %v1146
        %1250 = vmatpush.bf16.msra.mxu0 %v1144
        %1251 = vmatpush.bf16.msra.mxu0 %v1142
        %1252 = vmatpush.bf16.msra.mxu0 %v1140
        %1253 = vmatpush.bf16.msra.mxu0 %v1138
        %1254 = vmatpush.bf16.msra.mxu0 %v1136
        %1255 = vmatpush.bf16.msra.mxu0 %v1134
        %1256 = vmatpush.bf16.msra.mxu0 %v1132
        %1257 = vmatmul.bf16.gmra.mxu0 %v401
        %v1258 = vpop.f32.mrf.mxu0
        %v1259 = vpop.f32.mrf.mxu0
        %v1260 = vadd.f32 0.0, %v1259
        %1261 = vmatmul.bf16.gmra.mxu0 %v403
        %v1262 = vpop.f32.mrf.mxu0
        %v1263 = vadd.f32 0.0, %v1262
        %v1264 = vpop.f32.mrf.mxu0
        %v1265 = vadd.f32 0.0, %v1264
        %1266 = vmatmul.bf16.gmra.mxu0 %v405
        %v1267 = vpop.f32.mrf.mxu0
        %v1268 = vadd.f32 0.0, %v1267
        %v1269 = vpop.f32.mrf.mxu0
        %v1270 = vadd.f32 0.0, %v1269
        %1271 = vmatmul.bf16.gmra.mxu0 %v407
        %v1272 = vpop.f32.mrf.mxu0
        %v1273 = vadd.f32 0.0, %v1272
        %v1274 = vpop.f32.mrf.mxu0
        %1275 = vdwg.mxu0
        %1276 = vmatpush.bf16.msra.mxu0 %v1162
        %1277 = vmatpush.bf16.msra.mxu0 %v1160
        %1278 = vmatpush.bf16.msra.mxu0 %v1158
        %1279 = vmatpush.bf16.msra.mxu0 %v1156
        %1280 = vmatpush.bf16.msra.mxu0 %v1154
        %1281 = vmatpush.bf16.msra.mxu0 %v1152
        %1282 = vmatpush.bf16.msra.mxu0 %v1150
        %1283 = vmatpush.bf16.msra.mxu0 %v1148
        %1284 = vmatmul.bf16.gmra.mxu0 %v402
        %v1285 = vpop.f32.mrf.mxu0
        %v1286 = vpop.f32.mrf.mxu0
        %v1287 = vadd.f32 %v1260, %v1286
        %1288 = vmatmul.bf16.gmra.mxu0 %v404
        %v1289 = vpop.f32.mrf.mxu0
        %v1290 = vadd.f32 %v1263, %v1289
        %v1291 = vpop.f32.mrf.mxu0
        %v1292 = vadd.f32 %v1265, %v1291
        %1293 = vmatmul.bf16.gmra.mxu0 %v406
        %v1294 = vpop.f32.mrf.mxu0
        %v1295 = vadd.f32 %v1268, %v1294
        %v1296 = vpop.f32.mrf.mxu0
        %v1297 = vadd.f32 %v1270, %v1296
        %1298 = vmatmul.bf16.gmra.mxu0 %v408
        %v1299 = vpop.f32.mrf.mxu0
        %v1300 = vadd.f32 %v1273, %v1299
        %v1301 = vpop.f32.mrf.mxu0
        %1302 = vdwg.mxu0
        %vm1307 = vcmask 1046528
        %v1308 = vrot.slane %v938, 1
        %v1309 = vrot.slane %v988, 1
        %v1310 = vrot.slane %v941, 1
        %v1311 = vsel %vm1307, %v1308, %v1310
        %v1312 = vrot.slane %v991, 1
        %v1313 = vsel %vm1307, %v1309, %v1312
        %v1320 = vadd.f32 %v638, %v1308
        %v1321 = vadd.f32 %v692, %v1309
        %v1322 = vadd.f32 %v640, %v1311
        %v1323 = vadd.f32 %v694, %v1313
        %v1324 = vadd.f32 %v643, %v1310
        %v1325 = vadd.f32 %v697, %v1312
        %vm1332 = vcmask 1045504
        %v1333 = vrot.slane %v1233, 2
        %v1334 = vrot.slane %v1287, 2
        %v1335 = vrot.slane %v1236, 2
        %v1336 = vsel %vm1332, %v1333, %v1335
        %v1337 = vrot.slane %v1290, 2
        %v1338 = vsel %vm1332, %v1334, %v1337
        %v1339 = vrot.slane %v1238, 2
        %v1340 = vsel %vm1332, %v1335, %v1339
        %v1341 = vrot.slane %v1292, 2
        %v1342 = vsel %vm1332, %v1337, %v1341
        %v1349 = vadd.f32 %v1320, %v1333
        %v1350 = vadd.f32 %v1321, %v1334
        %v1351 = vadd.f32 %v1322, %v1336
        %v1352 = vadd.f32 %v1323, %v1338
        %v1353 = vadd.f32 %v1324, %v1340
        %v1354 = vadd.f32 %v1325, %v1342
        %v1355 = vld [vmem:[%s3] sm:$0x3]
        %v1357 = vperm.slane %v1355, 0
        %v1358 = vperm.slane %v1355, 1
        %v1361 = vmul.f32 %v1349, %v1357
        %v1362 = vmul.f32 %v1350, %v1358
        %v1363 = vmul.f32 %v1351, %v1357
        %v1364 = vmul.f32 %v1352, %v1358
        %v1365 = vmul.f32 %v1353, %v1357
        %v1366 = vmul.f32 %v1354, %v1358
        %v1367 = vld [vmem:[#allocation9] sm:$0x3]
        %v1369 = vperm.slane %v1367, 0
        %v1370 = vperm.slane %v1367, 1
        %v1373 = vadd.f32 %v1361, %v1369
        %v1374 = vadd.f32 %v1362, %v1370
        %v1375 = vadd.f32 %v1363, %v1369
        %v1376 = vadd.f32 %v1364, %v1370
        %v1377 = vadd.f32 %v1365, %v1369
        %v1378 = vadd.f32 %v1366, %v1370
        %v1383 = vrot.slane %v945, 1
        %v1384 = vrot.slane %v995, 1
        %v1385 = vrot.slane %v947, 1
        %v1386 = vsel %vm1307, %v1383, %v1385
        %v1387 = vrot.slane %v997, 1
        %v1388 = vsel %vm1307, %v1384, %v1387
        %v1395 = vadd.f32 %v645, %v1383
        %v1396 = vadd.f32 %v699, %v1384
        %v1397 = vadd.f32 %v648, %v1386
        %v1398 = vadd.f32 %v702, %v1388
        %v1399 = vadd.f32 %v650, %v1385
        %v1400 = vadd.f32 %v704, %v1387
        %v1407 = vrot.slane %v1241, 2
        %v1408 = vrot.slane %v1295, 2
        %v1409 = vrot.slane %v1243, 2
        %v1410 = vsel %vm1332, %v1407, %v1409
        %v1411 = vrot.slane %v1297, 2
        %v1412 = vsel %vm1332, %v1408, %v1411
        %v1413 = vrot.slane %v1246, 2
        %v1414 = vsel %vm1332, %v1409, %v1413
        %v1415 = vrot.slane %v1300, 2
        %v1416 = vsel %vm1332, %v1411, %v1415
        %v1423 = vadd.f32 %v1395, %v1407
        %v1424 = vadd.f32 %v1396, %v1408
        %v1425 = vadd.f32 %v1397, %v1410
        %v1426 = vadd.f32 %v1398, %v1412
        %v1427 = vadd.f32 %v1399, %v1414
        %v1428 = vadd.f32 %v1400, %v1416
        %v1429 = vmul.f32 %v1423, %v1357
        %v1430 = vmul.f32 %v1424, %v1358
        %v1431 = vmul.f32 %v1425, %v1357
        %v1432 = vmul.f32 %v1426, %v1358
        %v1433 = vmul.f32 %v1427, %v1357
        %v1434 = vmul.f32 %v1428, %v1358
        %v1435 = vadd.f32 %v1429, %v1369
        %v1436 = vadd.f32 %v1430, %v1370
        %v1437 = vadd.f32 %v1431, %v1369
        %v1438 = vadd.f32 %v1432, %v1370
        %v1439 = vadd.f32 %v1433, %v1369
        %v1440 = vadd.f32 %v1434, %v1370
        %v1441 = vmax.f32 %v1373, 0.0
        %v1442 = vmax.f32 %v1374, 0.0
        %v1443 = vmax.f32 %v1375, 0.0
        %v1444 = vmax.f32 %v1376, 0.0
        %v1445 = vmax.f32 %v1377, 0.0
        %v1446 = vmax.f32 %v1378, 0.0
        %v1447 = vmax.f32 %v1435, 0.0
        %v1448 = vmax.f32 %v1436, 0.0
        %v1449 = vmax.f32 %v1437, 0.0
        %v1450 = vmax.f32 %v1438, 0.0
        %v1451 = vmax.f32 %v1439, 0.0
        %v1452 = vmax.f32 %v1440, 0.0
        %vm1459 = vcmask 1040384
        %v1460 = vrot.slane %v1441, 7
        %v1461 = vrot.slane %v1443, 7
        %v1462 = vsel %vm1459, %v1460, %v1461
        %v1463 = vrot.slane %v1442, 7
        %v1464 = vrot.slane %v1444, 7
        %v1465 = vsel %vm1459, %v1463, %v1464
        %v1466 = vrot.slane %v1445, 7
        %v1467 = vsel %vm1459, %v1461, %v1466
        %v1468 = vrot.slane %v1446, 7
        %v1469 = vsel %vm1459, %v1464, %v1468
        %1474 = vst [vmem:[#allocation2 + $0x10] sm:$0xff] %v1462
        %1475 = vst [vmem:[#allocation2 + $0x18] sm:$0xff] %v1465
        %1476 = vst [vmem:[#allocation2 + $0x20] sm:$0xff] %v1467
        %1477 = vst [vmem:[#allocation2 + $0x28] sm:$0xff] %v1469
        %v1484 = vrot.slane %v1447, 7
        %v1485 = vrot.slane %v1449, 7
        %v1486 = vsel %vm1459, %v1484, %v1485
        %v1487 = vrot.slane %v1448, 7
        %v1488 = vrot.slane %v1450, 7
        %v1489 = vsel %vm1459, %v1487, %v1488
        %v1490 = vrot.slane %v1451, 7
        %v1491 = vsel %vm1459, %v1485, %v1490
        %v1492 = vrot.slane %v1452, 7
        %v1493 = vsel %vm1459, %v1488, %v1492
        %1498 = vst [vmem:[#allocation2 + $0x40] sm:$0xff] %v1486
        %1499 = vst [vmem:[#allocation2 + $0x48] sm:$0xff] %v1489
        %1500 = vst [vmem:[#allocation2 + $0x50] sm:$0xff] %v1491
        %1501 = vst [vmem:[#allocation2 + $0x58] sm:$0xff] %v1493
        %v1502 = vld [vmem:[#allocation2] sm:$0xff]
        %v1503 = vld [vmem:[#allocation2 + $0x8] sm:$0xff]
        %v1504 = vld [vmem:[#allocation2 + $0x10] sm:$0xff]
        %v1505 = vld [vmem:[#allocation2 + $0x18] sm:$0xff]
        %v1506 = vld [vmem:[#allocation2 + $0x20] sm:$0xff]
        %v1507 = vld [vmem:[#allocation2 + $0x28] sm:$0xff]
        %v1508 = vld [vmem:[#allocation2 + $0x30] sm:$0xff]
        %v1509 = vld [vmem:[#allocation2 + $0x38] sm:$0xff]
        %v1510 = vld [vmem:[#allocation2 + $0x40] sm:$0xff]
        %v1511 = vld [vmem:[#allocation2 + $0x48] sm:$0xff]
        %v1512 = vld [vmem:[#allocation2 + $0x50] sm:$0xff]
        %v1513 = vld [vmem:[#allocation2 + $0x58] sm:$0xff]
        %v1514 = vld [vmem:[#allocation2 + $0x60] sm:$0xff]
        %v1515 = vld [vmem:[#allocation2 + $0x68] sm:$0xff]
        %v1516 = vpack.c.bf16 %v1504, %v1502
        %v1517 = vpack.c.bf16 %v1505, %v1503
        %v1518 = vpack.c.bf16 %v1508, %v1506
        %v1519 = vpack.c.bf16 %v1509, %v1507
        %v1520 = vpack.c.bf16 %v1512, %v1510
        %v1521 = vpack.c.bf16 %v1513, %v1511
        %v1522 = vpack.c.bf16 %v1514, %v1514
        %v1523 = vpack.c.bf16 %v1515, %v1515
        %v1524 = vld [vmem:[#allocation8] sm:$0xff]
        %v1525 = vld [vmem:[#allocation8 + $0x8] sm:$0xff]
        %v1526 = vld [vmem:[#allocation8 + $0x10] sm:$0xff]
        %v1527 = vld [vmem:[#allocation8 + $0x18] sm:$0xff]
        %v1528 = vld [vmem:[#allocation8 + $0x20] sm:$0xff]
        %v1529 = vld [vmem:[#allocation8 + $0x28] sm:$0xff]
        %v1530 = vld [vmem:[#allocation8 + $0x30] sm:$0xff]
        %v1531 = vld [vmem:[#allocation8 + $0x38] sm:$0xff]
        %v1532 = vld [vmem:[#allocation8 + $0x40] sm:$0xff]
        %v1533 = vld [vmem:[#allocation8 + $0x48] sm:$0xff]
        %v1534 = vld [vmem:[#allocation8 + $0x50] sm:$0xff]
        %v1535 = vld [vmem:[#allocation8 + $0x58] sm:$0xff]
        %v1536 = vld [vmem:[#allocation8 + $0x60] sm:$0xff]
        %v1537 = vld [vmem:[#allocation8 + $0x68] sm:$0xff]
        %v1538 = vld [vmem:[#allocation8 + $0x70] sm:$0xff]
        %v1539 = vld [vmem:[#allocation8 + $0x78] sm:$0xff]
        %v1540 = vld [vmem:[#allocation8 + $0x80] sm:$0xff]
        %v1541 = vld [vmem:[#allocation8 + $0x88] sm:$0xff]
        %v1542 = vld [vmem:[#allocation8 + $0x90] sm:$0xff]
        %v1543 = vld [vmem:[#allocation8 + $0x98] sm:$0xff]
        %v1544 = vld [vmem:[#allocation8 + $0xa0] sm:$0xff]
        %v1545 = vld [vmem:[#allocation8 + $0xa8] sm:$0xff]
        %v1546 = vld [vmem:[#allocation8 + $0xb0] sm:$0xff]
        %v1547 = vld [vmem:[#allocation8 + $0xb8] sm:$0xff]
        %v1548 = vld [vmem:[#allocation8 + $0xc0] sm:$0xff]
        %v1549 = vld [vmem:[#allocation8 + $0xc8] sm:$0xff]
        %v1550 = vld [vmem:[#allocation8 + $0xd0] sm:$0xff]
        %v1551 = vld [vmem:[#allocation8 + $0xd8] sm:$0xff]
        %v1552 = vld [vmem:[#allocation8 + $0xe0] sm:$0xff]
        %v1553 = vld [vmem:[#allocation8 + $0xe8] sm:$0xff]
        %v1554 = vld [vmem:[#allocation8 + $0xf0] sm:$0xff]
        %v1555 = vld [vmem:[#allocation8 + $0xf8] sm:$0xff]
        %v1588 = vunpack.c.l.b16 %v1524
        %v1589 = vunpack.c.h.b16 %v1524
        %v1590 = vunpack.c.l.b16 %v1525
        %v1591 = vunpack.c.h.b16 %v1525
        %v1592 = vunpack.c.l.b16 %v1526
        %v1593 = vunpack.c.h.b16 %v1526
        %v1594 = vunpack.c.l.b16 %v1527
        %v1595 = vunpack.c.h.b16 %v1527
        %v1596 = vunpack.c.l.b16 %v1528
        %v1597 = vunpack.c.h.b16 %v1528
        %v1598 = vunpack.c.l.b16 %v1529
        %v1599 = vunpack.c.h.b16 %v1529
        %v1600 = vunpack.c.l.b16 %v1530
        %v1601 = vunpack.c.h.b16 %v1530
        %v1602 = vunpack.c.l.b16 %v1531
        %v1603 = vunpack.c.h.b16 %v1531
        %v1604 = vunpack.c.l.b16 %v1532
        %v1605 = vunpack.c.h.b16 %v1532
        %v1606 = vunpack.c.l.b16 %v1533
        %v1607 = vunpack.c.h.b16 %v1533
        %v1608 = vunpack.c.l.b16 %v1534
        %v1609 = vunpack.c.h.b16 %v1534
        %v1610 = vunpack.c.l.b16 %v1535
        %v1611 = vunpack.c.h.b16 %v1535
        %v1612 = vunpack.c.l.b16 %v1536
        %v1613 = vunpack.c.h.b16 %v1536
        %v1614 = vunpack.c.l.b16 %v1537
        %v1615 = vunpack.c.h.b16 %v1537
        %v1616 = vunpack.c.l.b16 %v1538
        %v1617 = vunpack.c.h.b16 %v1538
        %v1618 = vunpack.c.l.b16 %v1539
        %v1619 = vunpack.c.h.b16 %v1539
        %v1620 = vunpack.c.l.b16 %v1540
        %v1621 = vunpack.c.h.b16 %v1540
        %v1622 = vunpack.c.l.b16 %v1541
        %v1623 = vunpack.c.h.b16 %v1541
        %v1624 = vunpack.c.l.b16 %v1542
        %v1625 = vunpack.c.h.b16 %v1542
        %v1626 = vunpack.c.l.b16 %v1543
        %v1627 = vunpack.c.h.b16 %v1543
        %v1628 = vunpack.c.l.b16 %v1544
        %v1629 = vunpack.c.h.b16 %v1544
        %v1630 = vunpack.c.l.b16 %v1545
        %v1631 = vunpack.c.h.b16 %v1545
        %v1632 = vunpack.c.l.b16 %v1546
        %v1633 = vunpack.c.h.b16 %v1546
        %v1634 = vunpack.c.l.b16 %v1547
        %v1635 = vunpack.c.h.b16 %v1547
        %v1636 = vunpack.c.l.b16 %v1548
        %v1637 = vunpack.c.h.b16 %v1548
        %v1638 = vunpack.c.l.b16 %v1549
        %v1639 = vunpack.c.h.b16 %v1549
        %v1640 = vunpack.c.l.b16 %v1550
        %v1641 = vunpack.c.h.b16 %v1550
        %v1642 = vunpack.c.l.b16 %v1551
        %v1643 = vunpack.c.h.b16 %v1551
        %v1644 = vunpack.c.l.b16 %v1552
        %v1645 = vunpack.c.h.b16 %v1552
        %v1646 = vunpack.c.l.b16 %v1553
        %v1647 = vunpack.c.h.b16 %v1553
        %v1648 = vunpack.c.l.b16 %v1554
        %v1649 = vunpack.c.h.b16 %v1554
        %v1650 = vunpack.c.l.b16 %v1555
        %v1651 = vunpack.c.h.b16 %v1555
        %v1652 = vpack.c.b16 %v1590, %v1588
        %v1653 = vpack.c.b16 %v1591, %v1589
        %v1654 = vpack.c.b16 %v1594, %v1592
        %v1655 = vpack.c.b16 %v1595, %v1593
        %v1656 = vpack.c.b16 %v1598, %v1596
        %v1657 = vpack.c.b16 %v1599, %v1597
        %v1658 = vpack.c.b16 %v1602, %v1600
        %v1659 = vpack.c.b16 %v1603, %v1601
        %v1660 = vpack.c.b16 %v1606, %v1604
        %v1661 = vpack.c.b16 %v1607, %v1605
        %v1662 = vpack.c.b16 %v1610, %v1608
        %v1663 = vpack.c.b16 %v1611, %v1609
        %v1664 = vpack.c.b16 %v1614, %v1612
        %v1665 = vpack.c.b16 %v1615, %v1613
        %v1666 = vpack.c.b16 %v1618, %v1616
        %v1667 = vpack.c.b16 %v1619, %v1617
        %v1668 = vpack.c.b16 %v1622, %v1620
        %v1669 = vpack.c.b16 %v1623, %v1621
        %v1670 = vpack.c.b16 %v1626, %v1624
        %v1671 = vpack.c.b16 %v1627, %v1625
        %v1672 = vpack.c.b16 %v1630, %v1628
        %v1673 = vpack.c.b16 %v1631, %v1629
        %v1674 = vpack.c.b16 %v1634, %v1632
        %v1675 = vpack.c.b16 %v1635, %v1633
        %v1676 = vpack.c.b16 %v1638, %v1636
        %v1677 = vpack.c.b16 %v1639, %v1637
        %v1678 = vpack.c.b16 %v1642, %v1640
        %v1679 = vpack.c.b16 %v1643, %v1641
        %v1680 = vpack.c.b16 %v1646, %v1644
        %v1681 = vpack.c.b16 %v1647, %v1645
        %v1682 = vpack.c.b16 %v1650, %v1648
        %v1683 = vpack.c.b16 %v1651, %v1649
        %1716 = vmatpush.bf16.msra.mxu0 %v1666
        %1717 = vmatpush.bf16.msra.mxu0 %v1664
        %1718 = vmatpush.bf16.msra.mxu0 %v1662
        %1719 = vmatpush.bf16.msra.mxu0 %v1660
        %1720 = vmatpush.bf16.msra.mxu0 %v1658
        %1721 = vmatpush.bf16.msra.mxu0 %v1656
        %1722 = vmatpush.bf16.msra.mxu0 %v1654
        %1723 = vmatpush.bf16.msra.mxu0 %v1652
        %1724 = vmatmul.bf16.gmra.mxu0 %v1516
        %v1725 = vpop.f32.mrf.mxu0
        %v1726 = vadd.f32 0.0, %v1725
        %v1727 = vpop.f32.mrf.mxu0
        %v1728 = vadd.f32 0.0, %v1727
        %1729 = vmatmul.bf16.gmra.mxu0 %v1518
        %v1730 = vpop.f32.mrf.mxu0
        %v1731 = vadd.f32 0.0, %v1730
        %v1732 = vpop.f32.mrf.mxu0
        %v1733 = vadd.f32 0.0, %v1732
        %1734 = vmatmul.bf16.gmra.mxu0 %v1520
        %v1735 = vpop.f32.mrf.mxu0
        %v1736 = vadd.f32 0.0, %v1735
        %v1737 = vpop.f32.mrf.mxu0
        %v1738 = vadd.f32 0.0, %v1737
        %1739 = vmatmul.bf16.gmra.mxu0 %v1522
        %v1740 = vpop.f32.mrf.mxu0
        %v1741 = vpop.f32.mrf.mxu0
        %1742 = vdwg.mxu0
        %1743 = vmatpush.bf16.msra.mxu0 %v1682
        %1744 = vmatpush.bf16.msra.mxu0 %v1680
        %1745 = vmatpush.bf16.msra.mxu0 %v1678
        %1746 = vmatpush.bf16.msra.mxu0 %v1676
        %1747 = vmatpush.bf16.msra.mxu0 %v1674
        %1748 = vmatpush.bf16.msra.mxu0 %v1672
        %1749 = vmatpush.bf16.msra.mxu0 %v1670
        %1750 = vmatpush.bf16.msra.mxu0 %v1668
        %1751 = vmatmul.bf16.gmra.mxu0 %v1517
        %v1752 = vpop.f32.mrf.mxu0
        %v1753 = vadd.f32 %v1726, %v1752
        %v1754 = vpop.f32.mrf.mxu0
        %v1755 = vadd.f32 %v1728, %v1754
        %1756 = vmatmul.bf16.gmra.mxu0 %v1519
        %v1757 = vpop.f32.mrf.mxu0
        %v1758 = vadd.f32 %v1731, %v1757
        %v1759 = vpop.f32.mrf.mxu0
        %v1760 = vadd.f32 %v1733, %v1759
        %1761 = vmatmul.bf16.gmra.mxu0 %v1521
        %v1762 = vpop.f32.mrf.mxu0
        %v1763 = vadd.f32 %v1736, %v1762
        %v1764 = vpop.f32.mrf.mxu0
        %v1765 = vadd.f32 %v1738, %v1764
        %1766 = vmatmul.bf16.gmra.mxu0 %v1523
        %v1767 = vpop.f32.mrf.mxu0
        %v1768 = vpop.f32.mrf.mxu0
        %1769 = vdwg.mxu0
        %1770 = vmatpush.bf16.msra.mxu0 %v1667
        %1771 = vmatpush.bf16.msra.mxu0 %v1665
        %1772 = vmatpush.bf16.msra.mxu0 %v1663
        %1773 = vmatpush.bf16.msra.mxu0 %v1661
        %1774 = vmatpush.bf16.msra.mxu0 %v1659
        %1775 = vmatpush.bf16.msra.mxu0 %v1657
        %1776 = vmatpush.bf16.msra.mxu0 %v1655
        %1777 = vmatpush.bf16.msra.mxu0 %v1653
        %1778 = vmatmul.bf16.gmra.mxu0 %v1516
        %v1779 = vpop.f32.mrf.mxu0
        %v1780 = vadd.f32 0.0, %v1779
        %v1781 = vpop.f32.mrf.mxu0
        %v1782 = vadd.f32 0.0, %v1781
        %1783 = vmatmul.bf16.gmra.mxu0 %v1518
        %v1784 = vpop.f32.mrf.mxu0
        %v1785 = vadd.f32 0.0, %v1784
        %v1786 = vpop.f32.mrf.mxu0
        %v1787 = vadd.f32 0.0, %v1786
        %1788 = vmatmul.bf16.gmra.mxu0 %v1520
        %v1789 = vpop.f32.mrf.mxu0
        %v1790 = vadd.f32 0.0, %v1789
        %v1791 = vpop.f32.mrf.mxu0
        %v1792 = vadd.f32 0.0, %v1791
        %1793 = vmatmul.bf16.gmra.mxu0 %v1522
        %v1794 = vpop.f32.mrf.mxu0
        %v1795 = vpop.f32.mrf.mxu0
        %1796 = vdwg.mxu0
        %1797 = vmatpush.bf16.msra.mxu0 %v1683
        %1798 = vmatpush.bf16.msra.mxu0 %v1681
        %1799 = vmatpush.bf16.msra.mxu0 %v1679
        %1800 = vmatpush.bf16.msra.mxu0 %v1677
        %1801 = vmatpush.bf16.msra.mxu0 %v1675
        %1802 = vmatpush.bf16.msra.mxu0 %v1673
        %1803 = vmatpush.bf16.msra.mxu0 %v1671
        %1804 = vmatpush.bf16.msra.mxu0 %v1669
        %1805 = vmatmul.bf16.gmra.mxu0 %v1517
        %v1806 = vpop.f32.mrf.mxu0
        %v1807 = vadd.f32 %v1780, %v1806
        %v1808 = vpop.f32.mrf.mxu0
        %v1809 = vadd.f32 %v1782, %v1808
        %1810 = vmatmul.bf16.gmra.mxu0 %v1519
        %v1811 = vpop.f32.mrf.mxu0
        %v1812 = vadd.f32 %v1785, %v1811
        %v1813 = vpop.f32.mrf.mxu0
        %v1814 = vadd.f32 %v1787, %v1813
        %1815 = vmatmul.bf16.gmra.mxu0 %v1521
        %v1816 = vpop.f32.mrf.mxu0
        %v1817 = vadd.f32 %v1790, %v1816
        %v1818 = vpop.f32.mrf.mxu0
        %v1819 = vadd.f32 %v1792, %v1818
        %1820 = vmatmul.bf16.gmra.mxu0 %v1523
        %v1821 = vpop.f32.mrf.mxu0
        %v1822 = vpop.f32.mrf.mxu0
        %1823 = vdwg.mxu0
        %s1824 = scalar_lea.vmem [#allocation8], 256
        %v1825 = vld [vmem:[%s1824] sm:$0xff]
        %v1826 = vld [vmem:[%s1824 + $0x8] sm:$0xff]
        %v1827 = vld [vmem:[%s1824 + $0x10] sm:$0xff]
        %v1828 = vld [vmem:[%s1824 + $0x18] sm:$0xff]
        %v1829 = vld [vmem:[%s1824 + $0x20] sm:$0xff]
        %v1830 = vld [vmem:[%s1824 + $0x28] sm:$0xff]
        %v1831 = vld [vmem:[%s1824 + $0x30] sm:$0xff]
        %v1832 = vld [vmem:[%s1824 + $0x38] sm:$0xff]
        %v1833 = vld [vmem:[%s1824 + $0x40] sm:$0xff]
        %v1834 = vld [vmem:[%s1824 + $0x48] sm:$0xff]
        %v1835 = vld [vmem:[%s1824 + $0x50] sm:$0xff]
        %v1836 = vld [vmem:[%s1824 + $0x58] sm:$0xff]
        %v1837 = vld [vmem:[%s1824 + $0x60] sm:$0xff]
        %v1838 = vld [vmem:[%s1824 + $0x68] sm:$0xff]
        %v1839 = vld [vmem:[%s1824 + $0x70] sm:$0xff]
        %v1840 = vld [vmem:[%s1824 + $0x78] sm:$0xff]
        %v1841 = vld [vmem:[%s1824 + $0x80] sm:$0xff]
        %v1842 = vld [vmem:[%s1824 + $0x88] sm:$0xff]
        %v1843 = vld [vmem:[%s1824 + $0x90] sm:$0xff]
        %v1844 = vld [vmem:[%s1824 + $0x98] sm:$0xff]
        %v1845 = vld [vmem:[%s1824 + $0xa0] sm:$0xff]
        %v1846 = vld [vmem:[%s1824 + $0xa8] sm:$0xff]
        %v1847 = vld [vmem:[%s1824 + $0xb0] sm:$0xff]
        %v1848 = vld [vmem:[%s1824 + $0xb8] sm:$0xff]
        %v1849 = vld [vmem:[%s1824 + $0xc0] sm:$0xff]
        %v1850 = vld [vmem:[%s1824 + $0xc8] sm:$0xff]
        %v1851 = vld [vmem:[%s1824 + $0xd0] sm:$0xff]
        %v1852 = vld [vmem:[%s1824 + $0xd8] sm:$0xff]
        %v1853 = vld [vmem:[%s1824 + $0xe0] sm:$0xff]
        %v1854 = vld [vmem:[%s1824 + $0xe8] sm:$0xff]
        %v1855 = vld [vmem:[%s1824 + $0xf0] sm:$0xff]
        %v1856 = vld [vmem:[%s1824 + $0xf8] sm:$0xff]
        %v1889 = vunpack.c.l.b16 %v1825
        %v1890 = vunpack.c.h.b16 %v1825
        %v1891 = vunpack.c.l.b16 %v1826
        %v1892 = vunpack.c.h.b16 %v1826
        %v1893 = vunpack.c.l.b16 %v1827
        %v1894 = vunpack.c.h.b16 %v1827
        %v1895 = vunpack.c.l.b16 %v1828
        %v1896 = vunpack.c.h.b16 %v1828
        %v1897 = vunpack.c.l.b16 %v1829
        %v1898 = vunpack.c.h.b16 %v1829
        %v1899 = vunpack.c.l.b16 %v1830
        %v1900 = vunpack.c.h.b16 %v1830
        %v1901 = vunpack.c.l.b16 %v1831
        %v1902 = vunpack.c.h.b16 %v1831
        %v1903 = vunpack.c.l.b16 %v1832
        %v1904 = vunpack.c.h.b16 %v1832
        %v1905 = vunpack.c.l.b16 %v1833
        %v1906 = vunpack.c.h.b16 %v1833
        %v1907 = vunpack.c.l.b16 %v1834
        %v1908 = vunpack.c.h.b16 %v1834
        %v1909 = vunpack.c.l.b16 %v1835
        %v1910 = vunpack.c.h.b16 %v1835
        %v1911 = vunpack.c.l.b16 %v1836
        %v1912 = vunpack.c.h.b16 %v1836
        %v1913 = vunpack.c.l.b16 %v1837
        %v1914 = vunpack.c.h.b16 %v1837
        %v1915 = vunpack.c.l.b16 %v1838
        %v1916 = vunpack.c.h.b16 %v1838
        %v1917 = vunpack.c.l.b16 %v1839
        %v1918 = vunpack.c.h.b16 %v1839
        %v1919 = vunpack.c.l.b16 %v1840
        %v1920 = vunpack.c.h.b16 %v1840
        %v1921 = vunpack.c.l.b16 %v1841
        %v1922 = vunpack.c.h.b16 %v1841
        %v1923 = vunpack.c.l.b16 %v1842
        %v1924 = vunpack.c.h.b16 %v1842
        %v1925 = vunpack.c.l.b16 %v1843
        %v1926 = vunpack.c.h.b16 %v1843
        %v1927 = vunpack.c.l.b16 %v1844
        %v1928 = vunpack.c.h.b16 %v1844
        %v1929 = vunpack.c.l.b16 %v1845
        %v1930 = vunpack.c.h.b16 %v1845
        %v1931 = vunpack.c.l.b16 %v1846
        %v1932 = vunpack.c.h.b16 %v1846
        %v1933 = vunpack.c.l.b16 %v1847
        %v1934 = vunpack.c.h.b16 %v1847
        %v1935 = vunpack.c.l.b16 %v1848
        %v1936 = vunpack.c.h.b16 %v1848
        %v1937 = vunpack.c.l.b16 %v1849
        %v1938 = vunpack.c.h.b16 %v1849
        %v1939 = vunpack.c.l.b16 %v1850
        %v1940 = vunpack.c.h.b16 %v1850
        %v1941 = vunpack.c.l.b16 %v1851
        %v1942 = vunpack.c.h.b16 %v1851
        %v1943 = vunpack.c.l.b16 %v1852
        %v1944 = vunpack.c.h.b16 %v1852
        %v1945 = vunpack.c.l.b16 %v1853
        %v1946 = vunpack.c.h.b16 %v1853
        %v1947 = vunpack.c.l.b16 %v1854
        %v1948 = vunpack.c.h.b16 %v1854
        %v1949 = vunpack.c.l.b16 %v1855
        %v1950 = vunpack.c.h.b16 %v1855
        %v1951 = vunpack.c.l.b16 %v1856
        %v1952 = vunpack.c.h.b16 %v1856
        %v1953 = vpack.c.b16 %v1891, %v1889
        %v1954 = vpack.c.b16 %v1892, %v1890
        %v1955 = vpack.c.b16 %v1895, %v1893
        %v1956 = vpack.c.b16 %v1896, %v1894
        %v1957 = vpack.c.b16 %v1899, %v1897
        %v1958 = vpack.c.b16 %v1900, %v1898
        %v1959 = vpack.c.b16 %v1903, %v1901
        %v1960 = vpack.c.b16 %v1904, %v1902
        %v1961 = vpack.c.b16 %v1907, %v1905
        %v1962 = vpack.c.b16 %v1908, %v1906
        %v1963 = vpack.c.b16 %v1911, %v1909
        %v1964 = vpack.c.b16 %v1912, %v1910
        %v1965 = vpack.c.b16 %v1915, %v1913
        %v1966 = vpack.c.b16 %v1916, %v1914
        %v1967 = vpack.c.b16 %v1919, %v1917
        %v1968 = vpack.c.b16 %v1920, %v1918
        %v1969 = vpack.c.b16 %v1923, %v1921
        %v1970 = vpack.c.b16 %v1924, %v1922
        %v1971 = vpack.c.b16 %v1927, %v1925
        %v1972 = vpack.c.b16 %v1928, %v1926
        %v1973 = vpack.c.b16 %v1931, %v1929
        %v1974 = vpack.c.b16 %v1932, %v1930
        %v1975 = vpack.c.b16 %v1935, %v1933
        %v1976 = vpack.c.b16 %v1936, %v1934
        %v1977 = vpack.c.b16 %v1939, %v1937
        %v1978 = vpack.c.b16 %v1940, %v1938
        %v1979 = vpack.c.b16 %v1943, %v1941
        %v1980 = vpack.c.b16 %v1944, %v1942
        %v1981 = vpack.c.b16 %v1947, %v1945
        %v1982 = vpack.c.b16 %v1948, %v1946
        %v1983 = vpack.c.b16 %v1951, %v1949
        %v1984 = vpack.c.b16 %v1952, %v1950
        %2017 = vmatpush.bf16.msra.mxu0 %v1967
        %2018 = vmatpush.bf16.msra.mxu0 %v1965
        %2019 = vmatpush.bf16.msra.mxu0 %v1963
        %2020 = vmatpush.bf16.msra.mxu0 %v1961
        %2021 = vmatpush.bf16.msra.mxu0 %v1959
        %2022 = vmatpush.bf16.msra.mxu0 %v1957
        %2023 = vmatpush.bf16.msra.mxu0 %v1955
        %2024 = vmatpush.bf16.msra.mxu0 %v1953
        %2025 = vmatmul.bf16.gmra.mxu0 %v1516
        %v2026 = vpop.f32.mrf.mxu0
        %v2027 = vpop.f32.mrf.mxu0
        %v2028 = vadd.f32 0.0, %v2027
        %2029 = vmatmul.bf16.gmra.mxu0 %v1518
        %v2030 = vpop.f32.mrf.mxu0
        %v2031 = vadd.f32 0.0, %v2030
        %v2032 = vpop.f32.mrf.mxu0
        %2033 = vmatmul.bf16.gmra.mxu0 %v1520
        %v2034 = vpop.f32.mrf.mxu0
        %v2035 = vadd.f32 0.0, %v2034
        %v2036 = vpop.f32.mrf.mxu0
        %v2037 = vadd.f32 0.0, %v2036
        %2038 = vmatmul.bf16.gmra.mxu0 %v1522
        %v2039 = vpop.f32.mrf.mxu0
        %v2040 = vpop.f32.mrf.mxu0
        %2041 = vdwg.mxu0
        %2042 = vmatpush.bf16.msra.mxu0 %v1983
        %2043 = vmatpush.bf16.msra.mxu0 %v1981
        %2044 = vmatpush.bf16.msra.mxu0 %v1979
        %2045 = vmatpush.bf16.msra.mxu0 %v1977
        %2046 = vmatpush.bf16.msra.mxu0 %v1975
        %2047 = vmatpush.bf16.msra.mxu0 %v1973
        %2048 = vmatpush.bf16.msra.mxu0 %v1971
        %2049 = vmatpush.bf16.msra.mxu0 %v1969
        %2050 = vmatmul.bf16.gmra.mxu0 %v1517
        %v2051 = vpop.f32.mrf.mxu0
        %v2052 = vpop.f32.mrf.mxu0
        %v2053 = vadd.f32 %v2028, %v2052
        %2054 = vmatmul.bf16.gmra.mxu0 %v1519
        %v2055 = vpop.f32.mrf.mxu0
        %v2056 = vadd.f32 %v2031, %v2055
        %v2057 = vpop.f32.mrf.mxu0
        %2058 = vmatmul.bf16.gmra.mxu0 %v1521
        %v2059 = vpop.f32.mrf.mxu0
        %v2060 = vadd.f32 %v2035, %v2059
        %v2061 = vpop.f32.mrf.mxu0
        %v2062 = vadd.f32 %v2037, %v2061
        %2063 = vmatmul.bf16.gmra.mxu0 %v1523
        %v2064 = vpop.f32.mrf.mxu0
        %v2065 = vpop.f32.mrf.mxu0
        %2066 = vdwg.mxu0
        %2067 = vmatpush.bf16.msra.mxu0 %v1968
        %2068 = vmatpush.bf16.msra.mxu0 %v1966
        %2069 = vmatpush.bf16.msra.mxu0 %v1964
        %2070 = vmatpush.bf16.msra.mxu0 %v1962
        %2071 = vmatpush.bf16.msra.mxu0 %v1960
        %2072 = vmatpush.bf16.msra.mxu0 %v1958
        %2073 = vmatpush.bf16.msra.mxu0 %v1956
        %2074 = vmatpush.bf16.msra.mxu0 %v1954
        %2075 = vmatmul.bf16.gmra.mxu0 %v1516
        %v2076 = vpop.f32.mrf.mxu0
        %v2077 = vpop.f32.mrf.mxu0
        %v2078 = vadd.f32 0.0, %v2077
        %2079 = vmatmul.bf16.gmra.mxu0 %v1518
        %v2080 = vpop.f32.mrf.mxu0
        %v2081 = vadd.f32 0.0, %v2080
        %v2082 = vpop.f32.mrf.mxu0
        %2083 = vmatmul.bf16.gmra.mxu0 %v1520
        %v2084 = vpop.f32.mrf.mxu0
        %v2085 = vadd.f32 0.0, %v2084
        %v2086 = vpop.f32.mrf.mxu0
        %v2087 = vadd.f32 0.0, %v2086
        %2088 = vmatmul.bf16.gmra.mxu0 %v1522
        %v2089 = vpop.f32.mrf.mxu0
        %v2090 = vpop.f32.mrf.mxu0
        %2091 = vdwg.mxu0
        %2092 = vmatpush.bf16.msra.mxu0 %v1984
        %2093 = vmatpush.bf16.msra.mxu0 %v1982
        %2094 = vmatpush.bf16.msra.mxu0 %v1980
        %2095 = vmatpush.bf16.msra.mxu0 %v1978
        %2096 = vmatpush.bf16.msra.mxu0 %v1976
        %2097 = vmatpush.bf16.msra.mxu0 %v1974
        %2098 = vmatpush.bf16.msra.mxu0 %v1972
        %2099 = vmatpush.bf16.msra.mxu0 %v1970
        %2100 = vmatmul.bf16.gmra.mxu0 %v1517
        %v2101 = vpop.f32.mrf.mxu0
        %v2102 = vpop.f32.mrf.mxu0
        %v2103 = vadd.f32 %v2078, %v2102
        %2104 = vmatmul.bf16.gmra.mxu0 %v1519
        %v2105 = vpop.f32.mrf.mxu0
        %v2106 = vadd.f32 %v2081, %v2105
        %v2107 = vpop.f32.mrf.mxu0
        %2108 = vmatmul.bf16.gmra.mxu0 %v1521
        %v2109 = vpop.f32.mrf.mxu0
        %v2110 = vadd.f32 %v2085, %v2109
        %v2111 = vpop.f32.mrf.mxu0
        %v2112 = vadd.f32 %v2087, %v2111
        %2113 = vmatmul.bf16.gmra.mxu0 %v1523
        %v2114 = vpop.f32.mrf.mxu0
        %v2115 = vpop.f32.mrf.mxu0
        %2116 = vdwg.mxu0
        %s2117 = scalar_lea.vmem [#allocation8], 512
        %v2118 = vld [vmem:[%s2117] sm:$0xff]
        %v2119 = vld [vmem:[%s2117 + $0x8] sm:$0xff]
        %v2120 = vld [vmem:[%s2117 + $0x10] sm:$0xff]
        %v2121 = vld [vmem:[%s2117 + $0x18] sm:$0xff]
        %v2122 = vld [vmem:[%s2117 + $0x20] sm:$0xff]
        %v2123 = vld [vmem:[%s2117 + $0x28] sm:$0xff]
        %v2124 = vld [vmem:[%s2117 + $0x30] sm:$0xff]
        %v2125 = vld [vmem:[%s2117 + $0x38] sm:$0xff]
        %v2126 = vld [vmem:[%s2117 + $0x40] sm:$0xff]
        %v2127 = vld [vmem:[%s2117 + $0x48] sm:$0xff]
        %v2128 = vld [vmem:[%s2117 + $0x50] sm:$0xff]
        %v2129 = vld [vmem:[%s2117 + $0x58] sm:$0xff]
        %v2130 = vld [vmem:[%s2117 + $0x60] sm:$0xff]
        %v2131 = vld [vmem:[%s2117 + $0x68] sm:$0xff]
        %v2132 = vld [vmem:[%s2117 + $0x70] sm:$0xff]
        %v2133 = vld [vmem:[%s2117 + $0x78] sm:$0xff]
        %v2134 = vld [vmem:[%s2117 + $0x80] sm:$0xff]
        %v2135 = vld [vmem:[%s2117 + $0x88] sm:$0xff]
        %v2136 = vld [vmem:[%s2117 + $0x90] sm:$0xff]
        %v2137 = vld [vmem:[%s2117 + $0x98] sm:$0xff]
        %v2138 = vld [vmem:[%s2117 + $0xa0] sm:$0xff]
        %v2139 = vld [vmem:[%s2117 + $0xa8] sm:$0xff]
        %v2140 = vld [vmem:[%s2117 + $0xb0] sm:$0xff]
        %v2141 = vld [vmem:[%s2117 + $0xb8] sm:$0xff]
        %v2142 = vld [vmem:[%s2117 + $0xc0] sm:$0xff]
        %v2143 = vld [vmem:[%s2117 + $0xc8] sm:$0xff]
        %v2144 = vld [vmem:[%s2117 + $0xd0] sm:$0xff]
        %v2145 = vld [vmem:[%s2117 + $0xd8] sm:$0xff]
        %v2146 = vld [vmem:[%s2117 + $0xe0] sm:$0xff]
        %v2147 = vld [vmem:[%s2117 + $0xe8] sm:$0xff]
        %v2148 = vld [vmem:[%s2117 + $0xf0] sm:$0xff]
        %v2149 = vld [vmem:[%s2117 + $0xf8] sm:$0xff]
        %v2182 = vunpack.c.l.b16 %v2118
        %v2183 = vunpack.c.h.b16 %v2118
        %v2184 = vunpack.c.l.b16 %v2119
        %v2185 = vunpack.c.h.b16 %v2119
        %v2186 = vunpack.c.l.b16 %v2120
        %v2187 = vunpack.c.h.b16 %v2120
        %v2188 = vunpack.c.l.b16 %v2121
        %v2189 = vunpack.c.h.b16 %v2121
        %v2190 = vunpack.c.l.b16 %v2122
        %v2191 = vunpack.c.h.b16 %v2122
        %v2192 = vunpack.c.l.b16 %v2123
        %v2193 = vunpack.c.h.b16 %v2123
        %v2194 = vunpack.c.l.b16 %v2124
        %v2195 = vunpack.c.h.b16 %v2124
        %v2196 = vunpack.c.l.b16 %v2125
        %v2197 = vunpack.c.h.b16 %v2125
        %v2198 = vunpack.c.l.b16 %v2126
        %v2199 = vunpack.c.h.b16 %v2126
        %v2200 = vunpack.c.l.b16 %v2127
        %v2201 = vunpack.c.h.b16 %v2127
        %v2202 = vunpack.c.l.b16 %v2128
        %v2203 = vunpack.c.h.b16 %v2128
        %v2204 = vunpack.c.l.b16 %v2129
        %v2205 = vunpack.c.h.b16 %v2129
        %v2206 = vunpack.c.l.b16 %v2130
        %v2207 = vunpack.c.h.b16 %v2130
        %v2208 = vunpack.c.l.b16 %v2131
        %v2209 = vunpack.c.h.b16 %v2131
        %v2210 = vunpack.c.l.b16 %v2132
        %v2211 = vunpack.c.h.b16 %v2132
        %v2212 = vunpack.c.l.b16 %v2133
        %v2213 = vunpack.c.h.b16 %v2133
        %v2214 = vunpack.c.l.b16 %v2134
        %v2215 = vunpack.c.h.b16 %v2134
        %v2216 = vunpack.c.l.b16 %v2135
        %v2217 = vunpack.c.h.b16 %v2135
        %v2218 = vunpack.c.l.b16 %v2136
        %v2219 = vunpack.c.h.b16 %v2136
        %v2220 = vunpack.c.l.b16 %v2137
        %v2221 = vunpack.c.h.b16 %v2137
        %v2222 = vunpack.c.l.b16 %v2138
        %v2223 = vunpack.c.h.b16 %v2138
        %v2224 = vunpack.c.l.b16 %v2139
        %v2225 = vunpack.c.h.b16 %v2139
        %v2226 = vunpack.c.l.b16 %v2140
        %v2227 = vunpack.c.h.b16 %v2140
        %v2228 = vunpack.c.l.b16 %v2141
        %v2229 = vunpack.c.h.b16 %v2141
        %v2230 = vunpack.c.l.b16 %v2142
        %v2231 = vunpack.c.h.b16 %v2142
        %v2232 = vunpack.c.l.b16 %v2143
        %v2233 = vunpack.c.h.b16 %v2143
        %v2234 = vunpack.c.l.b16 %v2144
        %v2235 = vunpack.c.h.b16 %v2144
        %v2236 = vunpack.c.l.b16 %v2145
        %v2237 = vunpack.c.h.b16 %v2145
        %v2238 = vunpack.c.l.b16 %v2146
        %v2239 = vunpack.c.h.b16 %v2146
        %v2240 = vunpack.c.l.b16 %v2147
        %v2241 = vunpack.c.h.b16 %v2147
        %v2242 = vunpack.c.l.b16 %v2148
        %v2243 = vunpack.c.h.b16 %v2148
        %v2244 = vunpack.c.l.b16 %v2149
        %v2245 = vunpack.c.h.b16 %v2149
        %v2246 = vpack.c.b16 %v2184, %v2182
        %v2247 = vpack.c.b16 %v2185, %v2183
        %v2248 = vpack.c.b16 %v2188, %v2186
        %v2249 = vpack.c.b16 %v2189, %v2187
        %v2250 = vpack.c.b16 %v2192, %v2190
        %v2251 = vpack.c.b16 %v2193, %v2191
        %v2252 = vpack.c.b16 %v2196, %v2194
        %v2253 = vpack.c.b16 %v2197, %v2195
        %v2254 = vpack.c.b16 %v2200, %v2198
        %v2255 = vpack.c.b16 %v2201, %v2199
        %v2256 = vpack.c.b16 %v2204, %v2202
        %v2257 = vpack.c.b16 %v2205, %v2203
        %v2258 = vpack.c.b16 %v2208, %v2206
        %v2259 = vpack.c.b16 %v2209, %v2207
        %v2260 = vpack.c.b16 %v2212, %v2210
        %v2261 = vpack.c.b16 %v2213, %v2211
        %v2262 = vpack.c.b16 %v2216, %v2214
        %v2263 = vpack.c.b16 %v2217, %v2215
        %v2264 = vpack.c.b16 %v2220, %v2218
        %v2265 = vpack.c.b16 %v2221, %v2219
        %v2266 = vpack.c.b16 %v2224, %v2222
        %v2267 = vpack.c.b16 %v2225, %v2223
        %v2268 = vpack.c.b16 %v2228, %v2226
        %v2269 = vpack.c.b16 %v2229, %v2227
        %v2270 = vpack.c.b16 %v2232, %v2230
        %v2271 = vpack.c.b16 %v2233, %v2231
        %v2272 = vpack.c.b16 %v2236, %v2234
        %v2273 = vpack.c.b16 %v2237, %v2235
        %v2274 = vpack.c.b16 %v2240, %v2238
        %v2275 = vpack.c.b16 %v2241, %v2239
        %v2276 = vpack.c.b16 %v2244, %v2242
        %v2277 = vpack.c.b16 %v2245, %v2243
        %2310 = vmatpush.bf16.msra.mxu0 %v2260
        %2311 = vmatpush.bf16.msra.mxu0 %v2258
        %2312 = vmatpush.bf16.msra.mxu0 %v2256
        %2313 = vmatpush.bf16.msra.mxu0 %v2254
        %2314 = vmatpush.bf16.msra.mxu0 %v2252
        %2315 = vmatpush.bf16.msra.mxu0 %v2250
        %2316 = vmatpush.bf16.msra.mxu0 %v2248
        %2317 = vmatpush.bf16.msra.mxu0 %v2246
        %2318 = vmatmul.bf16.gmra.mxu0 %v1516
        %v2319 = vpop.f32.mrf.mxu0
        %v2320 = vpop.f32.mrf.mxu0
        %v2321 = vadd.f32 0.0, %v2320
        %2322 = vmatmul.bf16.gmra.mxu0 %v1518
        %v2323 = vpop.f32.mrf.mxu0
        %v2324 = vadd.f32 0.0, %v2323
        %v2325 = vpop.f32.mrf.mxu0
        %v2326 = vadd.f32 0.0, %v2325
        %2327 = vmatmul.bf16.gmra.mxu0 %v1520
        %v2328 = vpop.f32.mrf.mxu0
        %v2329 = vadd.f32 0.0, %v2328
        %v2330 = vpop.f32.mrf.mxu0
        %v2331 = vadd.f32 0.0, %v2330
        %2332 = vmatmul.bf16.gmra.mxu0 %v1522
        %v2333 = vpop.f32.mrf.mxu0
        %v2334 = vadd.f32 0.0, %v2333
        %v2335 = vpop.f32.mrf.mxu0
        %2336 = vdwg.mxu0
        %2337 = vmatpush.bf16.msra.mxu0 %v2276
        %2338 = vmatpush.bf16.msra.mxu0 %v2274
        %2339 = vmatpush.bf16.msra.mxu0 %v2272
        %2340 = vmatpush.bf16.msra.mxu0 %v2270
        %2341 = vmatpush.bf16.msra.mxu0 %v2268
        %2342 = vmatpush.bf16.msra.mxu0 %v2266
        %2343 = vmatpush.bf16.msra.mxu0 %v2264
        %2344 = vmatpush.bf16.msra.mxu0 %v2262
        %2345 = vmatmul.bf16.gmra.mxu0 %v1517
        %v2346 = vpop.f32.mrf.mxu0
        %v2347 = vpop.f32.mrf.mxu0
        %v2348 = vadd.f32 %v2321, %v2347
        %2349 = vmatmul.bf16.gmra.mxu0 %v1519
        %v2350 = vpop.f32.mrf.mxu0
        %v2351 = vadd.f32 %v2324, %v2350
        %v2352 = vpop.f32.mrf.mxu0
        %v2353 = vadd.f32 %v2326, %v2352
        %2354 = vmatmul.bf16.gmra.mxu0 %v1521
        %v2355 = vpop.f32.mrf.mxu0
        %v2356 = vadd.f32 %v2329, %v2355
        %v2357 = vpop.f32.mrf.mxu0
        %v2358 = vadd.f32 %v2331, %v2357
        %2359 = vmatmul.bf16.gmra.mxu0 %v1523
        %v2360 = vpop.f32.mrf.mxu0
        %v2361 = vadd.f32 %v2334, %v2360
        %v2362 = vpop.f32.mrf.mxu0
        %2363 = vdwg.mxu0
        %2364 = vmatpush.bf16.msra.mxu0 %v2261
        %2365 = vmatpush.bf16.msra.mxu0 %v2259
        %2366 = vmatpush.bf16.msra.mxu0 %v2257
        %2367 = vmatpush.bf16.msra.mxu0 %v2255
        %2368 = vmatpush.bf16.msra.mxu0 %v2253
        %2369 = vmatpush.bf16.msra.mxu0 %v2251
        %2370 = vmatpush.bf16.msra.mxu0 %v2249
        %2371 = vmatpush.bf16.msra.mxu0 %v2247
        %2372 = vmatmul.bf16.gmra.mxu0 %v1516
        %v2373 = vpop.f32.mrf.mxu0
        %v2374 = vpop.f32.mrf.mxu0
        %v2375 = vadd.f32 0.0, %v2374
        %2376 = vmatmul.bf16.gmra.mxu0 %v1518
        %v2377 = vpop.f32.mrf.mxu0
        %v2378 = vadd.f32 0.0, %v2377
        %v2379 = vpop.f32.mrf.mxu0
        %v2380 = vadd.f32 0.0, %v2379
        %2381 = vmatmul.bf16.gmra.mxu0 %v1520
        %v2382 = vpop.f32.mrf.mxu0
        %v2383 = vadd.f32 0.0, %v2382
        %v2384 = vpop.f32.mrf.mxu0
        %v2385 = vadd.f32 0.0, %v2384
        %2386 = vmatmul.bf16.gmra.mxu0 %v1522
        %v2387 = vpop.f32.mrf.mxu0
        %v2388 = vadd.f32 0.0, %v2387
        %v2389 = vpop.f32.mrf.mxu0
        %2390 = vdwg.mxu0
        %2391 = vmatpush.bf16.msra.mxu0 %v2277
        %2392 = vmatpush.bf16.msra.mxu0 %v2275
        %2393 = vmatpush.bf16.msra.mxu0 %v2273
        %2394 = vmatpush.bf16.msra.mxu0 %v2271
        %2395 = vmatpush.bf16.msra.mxu0 %v2269
        %2396 = vmatpush.bf16.msra.mxu0 %v2267
        %2397 = vmatpush.bf16.msra.mxu0 %v2265
        %2398 = vmatpush.bf16.msra.mxu0 %v2263
        %2399 = vmatmul.bf16.gmra.mxu0 %v1517
        %v2400 = vpop.f32.mrf.mxu0
        %v2401 = vpop.f32.mrf.mxu0
        %v2402 = vadd.f32 %v2375, %v2401
        %2403 = vmatmul.bf16.gmra.mxu0 %v1519
        %v2404 = vpop.f32.mrf.mxu0
        %v2405 = vadd.f32 %v2378, %v2404
        %v2406 = vpop.f32.mrf.mxu0
        %v2407 = vadd.f32 %v2380, %v2406
        %2408 = vmatmul.bf16.gmra.mxu0 %v1521
        %v2409 = vpop.f32.mrf.mxu0
        %v2410 = vadd.f32 %v2383, %v2409
        %v2411 = vpop.f32.mrf.mxu0
        %v2412 = vadd.f32 %v2385, %v2411
        %2413 = vmatmul.bf16.gmra.mxu0 %v1523
        %v2414 = vpop.f32.mrf.mxu0
        %v2415 = vadd.f32 %v2388, %v2414
        %v2416 = vpop.f32.mrf.mxu0
        %2417 = vdwg.mxu0
        %v2422 = vrot.slane %v2053, 1
        %v2423 = vrot.slane %v2103, 1
        %v2424 = vrot.slane %v2056, 1
        %v2425 = vsel %vm1307, %v2422, %v2424
        %v2426 = vrot.slane %v2106, 1
        %v2427 = vsel %vm1307, %v2423, %v2426
        %v2434 = vadd.f32 %v1753, %v2422
        %v2435 = vadd.f32 %v1807, %v2423
        %v2436 = vadd.f32 %v1755, %v2425
        %v2437 = vadd.f32 %v1809, %v2427
        %v2438 = vadd.f32 %v1758, %v2424
        %v2439 = vadd.f32 %v1812, %v2426
        %v2446 = vrot.slane %v2348, 2
        %v2447 = vrot.slane %v2402, 2
        %v2448 = vrot.slane %v2351, 2
        %v2449 = vsel %vm1332, %v2446, %v2448
        %v2450 = vrot.slane %v2405, 2
        %v2451 = vsel %vm1332, %v2447, %v2450
        %v2452 = vrot.slane %v2353, 2
        %v2453 = vsel %vm1332, %v2448, %v2452
        %v2454 = vrot.slane %v2407, 2
        %v2455 = vsel %vm1332, %v2450, %v2454
        %v2462 = vadd.f32 %v2434, %v2446
        %v2463 = vadd.f32 %v2435, %v2447
        %v2464 = vadd.f32 %v2436, %v2449
        %v2465 = vadd.f32 %v2437, %v2451
        %v2466 = vadd.f32 %v2438, %v2453
        %v2467 = vadd.f32 %v2439, %v2455
        %v2468 = vld [vmem:[%s5] sm:$0x3]
        %v2470 = vperm.slane %v2468, 0
        %v2471 = vperm.slane %v2468, 1
        %v2474 = vmul.f32 %v2462, %v2470
        %v2475 = vmul.f32 %v2463, %v2471
        %v2476 = vmul.f32 %v2464, %v2470
        %v2477 = vmul.f32 %v2465, %v2471
        %v2478 = vmul.f32 %v2466, %v2470
        %v2479 = vmul.f32 %v2467, %v2471
        %v2480 = vld [vmem:[#allocation11] sm:$0x3]
        %v2482 = vperm.slane %v2480, 0
        %v2483 = vperm.slane %v2480, 1
        %v2486 = vadd.f32 %v2474, %v2482
        %v2487 = vadd.f32 %v2475, %v2483
        %v2488 = vadd.f32 %v2476, %v2482
        %v2489 = vadd.f32 %v2477, %v2483
        %v2490 = vadd.f32 %v2478, %v2482
        %v2491 = vadd.f32 %v2479, %v2483
        %v2496 = vrot.slane %v2060, 1
        %v2497 = vrot.slane %v2110, 1
        %v2498 = vrot.slane %v2062, 1
        %v2499 = vsel %vm1307, %v2496, %v2498
        %v2500 = vrot.slane %v2112, 1
        %v2501 = vsel %vm1307, %v2497, %v2500
        %v2508 = vadd.f32 %v1760, %v2496
        %v2509 = vadd.f32 %v1814, %v2497
        %v2510 = vadd.f32 %v1763, %v2499
        %v2511 = vadd.f32 %v1817, %v2501
        %v2512 = vadd.f32 %v1765, %v2498
        %v2513 = vadd.f32 %v1819, %v2500
        %v2520 = vrot.slane %v2356, 2
        %v2521 = vrot.slane %v2410, 2
        %v2522 = vrot.slane %v2358, 2
        %v2523 = vsel %vm1332, %v2520, %v2522
        %v2524 = vrot.slane %v2412, 2
        %v2525 = vsel %vm1332, %v2521, %v2524
        %v2526 = vrot.slane %v2361, 2
        %v2527 = vsel %vm1332, %v2522, %v2526
        %v2528 = vrot.slane %v2415, 2
        %v2529 = vsel %vm1332, %v2524, %v2528
        %v2536 = vadd.f32 %v2508, %v2520
        %v2537 = vadd.f32 %v2509, %v2521
        %v2538 = vadd.f32 %v2510, %v2523
        %v2539 = vadd.f32 %v2511, %v2525
        %v2540 = vadd.f32 %v2512, %v2527
        %v2541 = vadd.f32 %v2513, %v2529
        %v2542 = vmul.f32 %v2536, %v2470
        %v2543 = vmul.f32 %v2537, %v2471
        %v2544 = vmul.f32 %v2538, %v2470
        %v2545 = vmul.f32 %v2539, %v2471
        %v2546 = vmul.f32 %v2540, %v2470
        %v2547 = vmul.f32 %v2541, %v2471
        %v2548 = vadd.f32 %v2542, %v2482
        %v2549 = vadd.f32 %v2543, %v2483
        %v2550 = vadd.f32 %v2544, %v2482
        %v2551 = vadd.f32 %v2545, %v2483
        %v2552 = vadd.f32 %v2546, %v2482
        %v2553 = vadd.f32 %v2547, %v2483
        %v2554 = vld [vmem:[%s310] sm:$0xff]
        %v2555 = vld [vmem:[%s310 + $0x8] sm:$0xff]
        %v2556 = vld [vmem:[%s310 + $0x10] sm:$0xff]
        %v2557 = vld [vmem:[%s310 + $0x18] sm:$0xff]
        %v2562 = vrot.slane %v2554, 1
        %v2563 = vrot.slane %v2555, 1
        %v2564 = vrot.slane %v2556, 1
        %v2565 = vsel %vm1307, %v2562, %v2564
        %v2566 = vrot.slane %v2557, 1
        %v2567 = vsel %vm1307, %v2563, %v2566
        %v2574 = vadd.f32 %v2486, %v2562
        %v2575 = vadd.f32 %v2487, %v2563
        %v2576 = vadd.f32 %v2488, %v2565
        %v2577 = vadd.f32 %v2489, %v2567
        %v2578 = vadd.f32 %v2490, %v2564
        %v2579 = vadd.f32 %v2491, %v2566
        %v2580 = vmax.f32 %v2574, 0.0
        %v2581 = vmax.f32 %v2575, 0.0
        %v2582 = vmax.f32 %v2576, 0.0
        %v2583 = vmax.f32 %v2577, 0.0
        %v2584 = vmax.f32 %v2578, 0.0
        %v2585 = vmax.f32 %v2579, 0.0
        %v2592 = vrot.slane %v2580, 7
        %v2593 = vrot.slane %v2582, 7
        %v2594 = vsel %vm1459, %v2592, %v2593
        %v2595 = vrot.slane %v2581, 7
        %v2596 = vrot.slane %v2583, 7
        %v2597 = vsel %vm1459, %v2595, %v2596
        %v2598 = vrot.slane %v2584, 7
        %v2599 = vsel %vm1459, %v2593, %v2598
        %v2600 = vrot.slane %v2585, 7
        %v2601 = vsel %vm1459, %v2596, %v2600
        %2606 = vst [vmem:[%s361] sm:$0xff] %v2594
        %2607 = vst [vmem:[%s361 + $0x8] sm:$0xff] %v2597
        %2608 = vst [vmem:[%s361 + $0x10] sm:$0xff] %v2599
        %2609 = vst [vmem:[%s361 + $0x18] sm:$0xff] %v2601
        %v2610 = vld [vmem:[%s378] sm:$0xff]
        %v2611 = vld [vmem:[%s378 + $0x8] sm:$0xff]
        %v2612 = vld [vmem:[%s378 + $0x10] sm:$0xff]
        %v2613 = vld [vmem:[%s378 + $0x18] sm:$0xff]
        %v2618 = vrot.slane %v2610, 1
        %v2619 = vrot.slane %v2611, 1
        %v2620 = vrot.slane %v2612, 1
        %v2621 = vsel %vm1307, %v2618, %v2620
        %v2622 = vrot.slane %v2613, 1
        %v2623 = vsel %vm1307, %v2619, %v2622
        %v2630 = vadd.f32 %v2548, %v2618
        %v2631 = vadd.f32 %v2549, %v2619
        %v2632 = vadd.f32 %v2550, %v2621
        %v2633 = vadd.f32 %v2551, %v2623
        %v2634 = vadd.f32 %v2552, %v2620
        %v2635 = vadd.f32 %v2553, %v2622
        %v2636 = vmax.f32 %v2630, 0.0
        %v2637 = vmax.f32 %v2631, 0.0
        %v2638 = vmax.f32 %v2632, 0.0
        %v2639 = vmax.f32 %v2633, 0.0
        %v2640 = vmax.f32 %v2634, 0.0
        %v2641 = vmax.f32 %v2635, 0.0
        %v2648 = vrot.slane %v2636, 7
        %v2649 = vrot.slane %v2638, 7
        %v2650 = vsel %vm1459, %v2648, %v2649
        %v2651 = vrot.slane %v2637, 7
        %v2652 = vrot.slane %v2639, 7
        %v2653 = vsel %vm1459, %v2651, %v2652
        %v2654 = vrot.slane %v2640, 7
        %v2655 = vsel %vm1459, %v2649, %v2654
        %v2656 = vrot.slane %v2641, 7
        %v2657 = vsel %vm1459, %v2652, %v2656
        %s2662 = scalar_lea.vmem %s361, 32 [#allocation12]
        %2663 = vst [vmem:[%s2662] sm:$0xff] %v2650
        %2664 = vst [vmem:[%s2662 + $0x8] sm:$0xff] %v2653
        %2665 = vst [vmem:[%s2662 + $0x10] sm:$0xff] %v2655
        %2666 = vst [vmem:[%s2662 + $0x18] sm:$0xff] %v2657
        %s2667 = sand.u32 %s186, 1
        %s2668 = scalar_lea.sflag [#allocation5], %s2667
        %s2669 = sand.u32 %s186, 1
        %s2670 = smul.addr %s2669, 64
        %s2671 = scalar_lea.vmem [#allocation12], %s2670
        // Predicated region
        $region69: #{tpu_custom_call.1} parent=47 // pred_check
          %p2672 = pneg %p196
        $region70: #{tpu_custom_call.1} parent=47 // pred_check_branch
          %2674 = sbr.rel (%p2672) target = $region72
        $region71: #{tpu_custom_call.1} parent=47 // pred_region
          %s2675 = smul.u32 2, %s26
          %2677 = vsyncadd %s2668, 0
          %s2678 = smul.addr %s2675, 4
          %s2679 = smul.addr %s2678, 8
          %s2680 = scalar_lea.hbm %s7, %s2679
          %s2681 = sshll.u32 %s2671, 4
          %s2682 = int_to_ptr.vmem [resolvable:$true] %s2681
          %s2683 = sshll.u32 %s2680, 4
          %s2684 = int_to_ptr.hbm [resolvable:$true] %s2683
          %2689 = dma.vmem_to_hbm [thread:$0]  %s2682, 1024, %s2684, %s2668, 256, 256, 16
        $region72: #{tpu_custom_call.1} parent=47 // pred_fallthru
          _
      $region48: #{tpu_custom_call.1} parent=5 // pred_fallthru
        _
      %p2690 = scmp.le.s32.totalorder 2, %s21
      // Predicated region
      $region73: #{tpu_custom_call.1} parent=5 // pred_check
        %p2691 = pneg %p2690
      $region74: #{tpu_custom_call.1} parent=5 // pred_check_branch
        %2693 = sbr.rel (%p2691) target = $region76
      $region75: #{tpu_custom_call.1} parent=5 // pred_region
        %s2694 = ssub.s32 %s21, 2
        // Predicated region
        $region77: #{tpu_custom_call.1} parent=75 // pred_check
          %p2695 = pneg %p202
        $region78: #{tpu_custom_call.1} parent=75 // pred_check_branch
          %2697 = sbr.rel (%p2695) target = $region80
        $region79: #{tpu_custom_call.1} parent=75 // pred_region
          %s2698 = sand.u32 %s187, 1
          %s2699 = scalar_lea.sflag [#allocation5], %s2698
          %s2700 = sand.u32 %s187, 1
          %s2701 = smul.addr %s2700, 64
          %s2702 = scalar_lea.vmem [#allocation12], %s2701
          %2704 = dma.done %s2699, 1024
        $region80: #{tpu_custom_call.1} parent=75 // pred_fallthru
          _
      $region76: #{tpu_custom_call.1} parent=5 // pred_fallthru
        _
    $region6: #{tpu_custom_call.1} parent=1 // loop_footer
      %s25 = sadd.s32 1, %s21
    $region7: #{tpu_custom_call.1} parent=1 // loop_footer_branch
      %20 = sbr.rel target = $region3
    $region8: #{tpu_custom_call.1} parent=1 // loop_exit
      _
    %2705 = vsyncpa [#allocation4], 1
    %s2706 = scalar_lea.sflag [#allocation4], 1
    %2707 = vsyncpa %s2706, 1
    %2708 = vsyncpa [#allocation7], 1
    %2709 = vsyncpa [#allocation10], 1
    %2710 = vsyncpa [#allocation5], 1
    %s2711 = scalar_lea.sflag [#allocation5], 1
    %2712 = vsyncpa %s2711, 1

</llo_original>
